<compile_context>
chip_gen: v7x
topology: tpu7x:2x2x1
jax: 0.10.0
libtpu: 0.0.40
codegen_flags: <defaults>
</compile_context>

<pallas_src>
import jax
import jax.numpy as jnp
from jax.experimental import pallas as pl
from jax.experimental.pallas import tpu as pltpu

EPS = 1e-5
KH = KW = 3


def _fused_conv_bn_conv_kernel(x_ref, wa_ref, ba_ref, wc_ref, o_ref, o2_ref):
    """One batch image per grid step.

    x_ref : (1, C, H, W)      VMEM input tile
    wa_ref: (CO*C*9,) f32     SMEM — conv_a weights with BN scale folded in
    ba_ref: (CO,)     f32     SMEM — folded BN bias
    wc_ref: (CO*C*9,) f32     SMEM — conv_c weights
    o_ref : (1, CO, Ho, Wo)   VMEM output tile
    o2_ref: (C, Ho+2, Wo+2)   VMEM scratch — intermediate with zero border
    """
    _, C, H, W = x_ref.shape
    _, CO, Ho, Wo = o_ref.shape

    # ---- conv_a + folded BN -> zero-padded VMEM scratch (never hits HBM) ----
    o2_ref[...] = jnp.zeros_like(o2_ref)           # zero border (re-zeroed per step:
                                                   # safe under megacore sharding)
    x = x_ref[0]                                   # (C, H, W)
    # 9 shifted slabs per input channel, reused across all output channels.
    x_taps = [[[x[ci, dy:dy + Ho, dx:dx + Wo] for dx in range(KW)]
               for dy in range(KH)] for ci in range(C)]
    for co in range(CO):
        acc = jnp.zeros((Ho, Wo), jnp.float32) + ba_ref[co]
        for ci in range(C):
            for dy in range(KH):
                for dx in range(KW):
                    w = wa_ref[(co * C + ci) * (KH * KW) + dy * KW + dx]
                    acc = acc + w * x_taps[ci][dy][dx]
        o2_ref[co, 1:1 + Ho, 1:1 + Wo] = acc       # interior; border stays zero

    # ---- conv_c (padding=1 is already materialized in the scratch border) ----
    o2 = o2_ref[...]                               # (C, Ho+2, Wo+2)
    o2_taps = [[[o2[ci, dy:dy + Ho, dx:dx + Wo] for dx in range(KW)]
                for dy in range(KH)] for ci in range(C)]
    for co in range(CO):
        acc = jnp.zeros((Ho, Wo), jnp.float32)
        for ci in range(C):
            for dy in range(KH):
                for dx in range(KW):
                    w = wc_ref[(co * C + ci) * (KH * KW) + dy * KW + dx]
                    acc = acc + w * o2_taps[ci][dy][dx]
        o_ref[0, co, :, :] = acc


def model_forward(x, wa, wc, gamma, beta, run_mean, run_var):
    """Conv2d(3,3,3,bias=False) -> BatchNorm2d(3)[eval] -> Conv2d(3,3,3,pad=1,bias=False)."""
    N, C, H, W = x.shape
    CO = wa.shape[0]
    Ho, Wo = H - KH + 1, W - KW + 1

    x = x.astype(jnp.float32)
    # Fold BatchNorm (running stats) into conv_a: wa' = wa * scale, bias = beta - mean*scale.
    scale = gamma.astype(jnp.float32) * jax.lax.rsqrt(run_var.astype(jnp.float32) + EPS)
    wa_fold = (wa.astype(jnp.float32) * scale[:, None, None, None]).reshape(-1)  # (CO*C*9,)
    bias = (beta.astype(jnp.float32) - run_mean.astype(jnp.float32) * scale)      # (CO,)
    wc_flat = wc.astype(jnp.float32).reshape(-1)                                  # (CO*C*9,)

    return pl.pallas_call(
        _fused_conv_bn_conv_kernel,
        out_shape=jax.ShapeDtypeStruct((N, CO, Ho, Wo), jnp.float32),
        grid=(N,),
        in_specs=[
            pl.BlockSpec((1, C, H, W), lambda n: (n, 0, 0, 0)),
            pl.BlockSpec(memory_space=pltpu.MemorySpace.SMEM),   # wa (folded), scalars
            pl.BlockSpec(memory_space=pltpu.MemorySpace.SMEM),   # bias
            pl.BlockSpec(memory_space=pltpu.MemorySpace.SMEM),   # wc
        ],
        out_specs=pl.BlockSpec((1, CO, Ho, Wo), lambda n: (n, 0, 0, 0)),
        scratch_shapes=[pltpu.VMEM((C, Ho + 2, Wo + 2), jnp.float32)],
        compiler_params=pltpu.CompilerParams(
            dimension_semantics=("parallel",),        # shard batch across TCs (v7x)
            vmem_limit_bytes=32 * 1024 * 1024,        # safe on v5e/v6e/v7x; tiles are tiny
        ),
    )(x, wa_fold, bias, wc_flat)


def reference(x, wa, wc, gamma, beta, run_mean, run_var):
    dn = ('NCHW', 'OIHW', 'NCHW')
    o1 = jax.lax.conv_general_dilated(x, wa, (1, 1), 'VALID', dimension_numbers=dn)
    scale = gamma / jnp.sqrt(run_var + EPS)
    shift = beta - run_mean * scale
    o2 = o1 * scale[None, :, None, None] + shift[None, :, None, None]
    o3 = jax.lax.conv_general_dilated(o2, wc, (1, 1), [(1, 1), (1, 1)],
                                      dimension_numbers=dn)
    return o3


if __name__ == "__main__":
    key = jax.random.PRNGKey(0)
    kx, kwa, kwc, kg, kb, km, kv = jax.random.split(key, 7)

    # small shapes consistent with the module (channels fixed at 3 by the convs)
    N, C, H, W = 2, 3, 16, 16
    x = jax.random.normal(kx, (N, C, H, W), dtype=jnp.float32)

    wa = 0.2 * jax.random.normal(kwa, (3, 3, 3, 3), dtype=jnp.float32)
    wc = 0.2 * jax.random.normal(kwc, (3, 3, 3, 3), dtype=jnp.float32)
    gamma = jax.random.uniform(kg, (3,), minval=0.5, maxval=1.5, dtype=jnp.float32)
    beta = 0.1 * jax.random.normal(kb, (3,), dtype=jnp.float32)
    run_mean = 0.1 * jax.random.normal(km, (3,), dtype=jnp.float32)
    run_var = jax.random.uniform(kv, (3,), minval=0.5, maxval=1.5, dtype=jnp.float32)

    fwd = jax.jit(model_forward)
    out = fwd(x, wa, wc, gamma, beta, run_mean, run_var)
    out = jax.block_until_ready(out)

    ref = reference(x, wa, wc, gamma, beta, run_mean, run_var)
    assert out.shape == (N, 3, H - 2, W - 2), out.shape
    err = float(jnp.max(jnp.abs(out - ref)))
    assert jnp.allclose(out, ref, rtol=1e-4, atol=1e-4), err

    print("KERNEL_OK")
</pallas_src>

<mosaic_0001>
module attributes {stable_mosaic.version = 11 : i64} {
  func.func @_fused_conv_bn_conv_kernel(%arg0: i32, %arg1: memref<1x3x16x16xf32, #tpu.memory_space<vmem>>, %arg2: memref<81xf32, #tpu.memory_space<smem>>, %arg3: memref<3xf32, #tpu.memory_space<smem>>, %arg4: memref<81xf32, #tpu.memory_space<smem>>, %arg5: memref<1x3x14x14xf32, #tpu.memory_space<vmem>>, %arg6: memref<3x16x16xf32, #tpu.memory_space<vmem>>) attributes {dimension_semantics = [#tpu.dimension_semantics<parallel>], iteration_bounds = array<i64: 2>, scalar_prefetch = 0 : i64, scratch_operands = 1 : i64, tpu.core_type = #tpu.core_type<tc>, window_params = [{transform_indices = @transform_0, window_bounds = array<i64: 1, 3, 16, 16>}, {transform_indices = @transform_1, window_bounds = array<i64: 81>}, {transform_indices = @transform_2, window_bounds = array<i64: 3>}, {transform_indices = @transform_3, window_bounds = array<i64: 81>}, {transform_indices = @transform_4, window_bounds = array<i64: 1, 3, 14, 14>}]} {
    %cst = arith.constant 0.000000e+00 : f32
    %0 = vector.broadcast %cst : f32 to vector<3x16x16xf32>
    %c0 = arith.constant 0 : index
    %c0_0 = arith.constant 0 : index
    %c0_1 = arith.constant 0 : index
    %1 = vector.load %arg6[%c0, %c0_0, %c0_1] : memref<3x16x16xf32, #tpu.memory_space<vmem>>, vector<3x16x16xf32>
    tpu.vector_store %arg6[%c0, %c0_0, %c0_1], %0 {strides = array<i32>} : memref<3x16x16xf32, #tpu.memory_space<vmem>>, vector<3x16x16xf32>,
    %c0_2 = arith.constant 0 : index
    %c0_3 = arith.constant 0 : index
    %c0_4 = arith.constant 0 : index
    %c0_5 = arith.constant 0 : index
    %2 = vector.load %arg1[%c0_2, %c0_3, %c0_4, %c0_5] : memref<1x3x16x16xf32, #tpu.memory_space<vmem>>, vector<1x3x16x16xf32>
    %3 = vector.shape_cast %2 : vector<1x3x16x16xf32> to vector<3x16x16xf32>
    %4 = vector.extract_strided_slice %3 {offsets = [0, 0, 0], sizes = [1, 14, 14], strides = [1, 1, 1]} : vector<3x16x16xf32> to vector<1x14x14xf32>
    %5 = vector.shape_cast %4 : vector<1x14x14xf32> to vector<14x14xf32>
    %6 = vector.extract_strided_slice %3 {offsets = [0, 0, 1], sizes = [1, 14, 14], strides = [1, 1, 1]} : vector<3x16x16xf32> to vector<1x14x14xf32>
    %7 = vector.shape_cast %6 : vector<1x14x14xf32> to vector<14x14xf32>
    %8 = vector.extract_strided_slice %3 {offsets = [0, 0, 2], sizes = [1, 14, 14], strides = [1, 1, 1]} : vector<3x16x16xf32> to vector<1x14x14xf32>
    %9 = vector.shape_cast %8 : vector<1x14x14xf32> to vector<14x14xf32>
    %10 = vector.extract_strided_slice %3 {offsets = [0, 1, 0], sizes = [1, 14, 14], strides = [1, 1, 1]} : vector<3x16x16xf32> to vector<1x14x14xf32>
    %11 = vector.shape_cast %10 : vector<1x14x14xf32> to vector<14x14xf32>
    %12 = vector.extract_strided_slice %3 {offsets = [0, 1, 1], sizes = [1, 14, 14], strides = [1, 1, 1]} : vector<3x16x16xf32> to vector<1x14x14xf32>
    %13 = vector.shape_cast %12 : vector<1x14x14xf32> to vector<14x14xf32>
    %14 = vector.extract_strided_slice %3 {offsets = [0, 1, 2], sizes = [1, 14, 14], strides = [1, 1, 1]} : vector<3x16x16xf32> to vector<1x14x14xf32>
    %15 = vector.shape_cast %14 : vector<1x14x14xf32> to vector<14x14xf32>
    %16 = vector.extract_strided_slice %3 {offsets = [0, 2, 0], sizes = [1, 14, 14], strides = [1, 1, 1]} : vector<3x16x16xf32> to vector<1x14x14xf32>
    %17 = vector.shape_cast %16 : vector<1x14x14xf32> to vector<14x14xf32>
    %18 = vector.extract_strided_slice %3 {offsets = [0, 2, 1], sizes = [1, 14, 14], strides = [1, 1, 1]} : vector<3x16x16xf32> to vector<1x14x14xf32>
    %19 = vector.shape_cast %18 : vector<1x14x14xf32> to vector<14x14xf32>
    %20 = vector.extract_strided_slice %3 {offsets = [0, 2, 2], sizes = [1, 14, 14], strides = [1, 1, 1]} : vector<3x16x16xf32> to vector<1x14x14xf32>
    %21 = vector.shape_cast %20 : vector<1x14x14xf32> to vector<14x14xf32>
    %22 = vector.extract_strided_slice %3 {offsets = [1, 0, 0], sizes = [1, 14, 14], strides = [1, 1, 1]} : vector<3x16x16xf32> to vector<1x14x14xf32>
    %23 = vector.shape_cast %22 : vector<1x14x14xf32> to vector<14x14xf32>
    %24 = vector.extract_strided_slice %3 {offsets = [1, 0, 1], sizes = [1, 14, 14], strides = [1, 1, 1]} : vector<3x16x16xf32> to vector<1x14x14xf32>
    %25 = vector.shape_cast %24 : vector<1x14x14xf32> to vector<14x14xf32>
    %26 = vector.extract_strided_slice %3 {offsets = [1, 0, 2], sizes = [1, 14, 14], strides = [1, 1, 1]} : vector<3x16x16xf32> to vector<1x14x14xf32>
    %27 = vector.shape_cast %26 : vector<1x14x14xf32> to vector<14x14xf32>
    %28 = vector.extract_strided_slice %3 {offsets = [1, 1, 0], sizes = [1, 14, 14], strides = [1, 1, 1]} : vector<3x16x16xf32> to vector<1x14x14xf32>
    %29 = vector.shape_cast %28 : vector<1x14x14xf32> to vector<14x14xf32>
    %30 = vector.extract_strided_slice %3 {offsets = [1, 1, 1], sizes = [1, 14, 14], strides = [1, 1, 1]} : vector<3x16x16xf32> to vector<1x14x14xf32>
    %31 = vector.shape_cast %30 : vector<1x14x14xf32> to vector<14x14xf32>
    %32 = vector.extract_strided_slice %3 {offsets = [1, 1, 2], sizes = [1, 14, 14], strides = [1, 1, 1]} : vector<3x16x16xf32> to vector<1x14x14xf32>
    %33 = vector.shape_cast %32 : vector<1x14x14xf32> to vector<14x14xf32>
    %34 = vector.extract_strided_slice %3 {offsets = [1, 2, 0], sizes = [1, 14, 14], strides = [1, 1, 1]} : vector<3x16x16xf32> to vector<1x14x14xf32>
    %35 = vector.shape_cast %34 : vector<1x14x14xf32> to vector<14x14xf32>
    %36 = vector.extract_strided_slice %3 {offsets = [1, 2, 1], sizes = [1, 14, 14], strides = [1, 1, 1]} : vector<3x16x16xf32> to vector<1x14x14xf32>
    %37 = vector.shape_cast %36 : vector<1x14x14xf32> to vector<14x14xf32>
    %38 = vector.extract_strided_slice %3 {offsets = [1, 2, 2], sizes = [1, 14, 14], strides = [1, 1, 1]} : vector<3x16x16xf32> to vector<1x14x14xf32>
    %39 = vector.shape_cast %38 : vector<1x14x14xf32> to vector<14x14xf32>
    %40 = vector.extract_strided_slice %3 {offsets = [2, 0, 0], sizes = [1, 14, 14], strides = [1, 1, 1]} : vector<3x16x16xf32> to vector<1x14x14xf32>
    %41 = vector.shape_cast %40 : vector<1x14x14xf32> to vector<14x14xf32>
    %42 = vector.extract_strided_slice %3 {offsets = [2, 0, 1], sizes = [1, 14, 14], strides = [1, 1, 1]} : vector<3x16x16xf32> to vector<1x14x14xf32>
    %43 = vector.shape_cast %42 : vector<1x14x14xf32> to vector<14x14xf32>
    %44 = vector.extract_strided_slice %3 {offsets = [2, 0, 2], sizes = [1, 14, 14], strides = [1, 1, 1]} : vector<3x16x16xf32> to vector<1x14x14xf32>
    %45 = vector.shape_cast %44 : vector<1x14x14xf32> to vector<14x14xf32>
    %46 = vector.extract_strided_slice %3 {offsets = [2, 1, 0], sizes = [1, 14, 14], strides = [1, 1, 1]} : vector<3x16x16xf32> to vector<1x14x14xf32>
    %47 = vector.shape_cast %46 : vector<1x14x14xf32> to vector<14x14xf32>
    %48 = vector.extract_strided_slice %3 {offsets = [2, 1, 1], sizes = [1, 14, 14], strides = [1, 1, 1]} : vector<3x16x16xf32> to vector<1x14x14xf32>
    %49 = vector.shape_cast %48 : vector<1x14x14xf32> to vector<14x14xf32>
    %50 = vector.extract_strided_slice %3 {offsets = [2, 1, 2], sizes = [1, 14, 14], strides = [1, 1, 1]} : vector<3x16x16xf32> to vector<1x14x14xf32>
    %51 = vector.shape_cast %50 : vector<1x14x14xf32> to vector<14x14xf32>
    %52 = vector.extract_strided_slice %3 {offsets = [2, 2, 0], sizes = [1, 14, 14], strides = [1, 1, 1]} : vector<3x16x16xf32> to vector<1x14x14xf32>
    %53 = vector.shape_cast %52 : vector<1x14x14xf32> to vector<14x14xf32>
    %54 = vector.extract_strided_slice %3 {offsets = [2, 2, 1], sizes = [1, 14, 14], strides = [1, 1, 1]} : vector<3x16x16xf32> to vector<1x14x14xf32>
    %55 = vector.shape_cast %54 : vector<1x14x14xf32> to vector<14x14xf32>
    %56 = vector.extract_strided_slice %3 {offsets = [2, 2, 2], sizes = [1, 14, 14], strides = [1, 1, 1]} : vector<3x16x16xf32> to vector<1x14x14xf32>
    %57 = vector.shape_cast %56 : vector<1x14x14xf32> to vector<14x14xf32>
    %cst_6 = arith.constant 0.000000e+00 : f32
    %58 = vector.broadcast %cst_6 : f32 to vector<14x14xf32>
    %c0_7 = arith.constant 0 : index
    %59 = memref.load %arg3[%c0_7] : memref<3xf32, #tpu.memory_space<smem>>
    %60 = vector.broadcast %59 : f32 to vector<14x14xf32>
    %61 = arith.addf %58, %60 : vector<14x14xf32>
    %c0_8 = arith.constant 0 : index
    %62 = memref.load %arg2[%c0_8] : memref<81xf32, #tpu.memory_space<smem>>
    %63 = vector.broadcast %62 : f32 to vector<14x14xf32>
    %64 = arith.mulf %63, %5 : vector<14x14xf32>
    %65 = arith.addf %61, %64 : vector<14x14xf32>
    %c1 = arith.constant 1 : index
    %66 = memref.load %arg2[%c1] : memref<81xf32, #tpu.memory_space<smem>>
    %67 = vector.broadcast %66 : f32 to vector<14x14xf32>
    %68 = arith.mulf %67, %7 : vector<14x14xf32>
    %69 = arith.addf %65, %68 : vector<14x14xf32>
    %c2 = arith.constant 2 : index
    %70 = memref.load %arg2[%c2] : memref<81xf32, #tpu.memory_space<smem>>
    %71 = vector.broadcast %70 : f32 to vector<14x14xf32>
    %72 = arith.mulf %71, %9 : vector<14x14xf32>
    %73 = arith.addf %69, %72 : vector<14x14xf32>
    %c3 = arith.constant 3 : index
    %74 = memref.load %arg2[%c3] : memref<81xf32, #tpu.memory_space<smem>>
    %75 = vector.broadcast %74 : f32 to vector<14x14xf32>
    %76 = arith.mulf %75, %11 : vector<14x14xf32>
    %77 = arith.addf %73, %76 : vector<14x14xf32>
    %c4 = arith.constant 4 : index
    %78 = memref.load %arg2[%c4] : memref<81xf32, #tpu.memory_space<smem>>
    %79 = vector.broadcast %78 : f32 to vector<14x14xf32>
    %80 = arith.mulf %79, %13 : vector<14x14xf32>
    %81 = arith.addf %77, %80 : vector<14x14xf32>
    %c5 = arith.constant 5 : index
    %82 = memref.load %arg2[%c5] : memref<81xf32, #tpu.memory_space<smem>>
    %83 = vector.broadcast %82 : f32 to vector<14x14xf32>
    %84 = arith.mulf %83, %15 : vector<14x14xf32>
    %85 = arith.addf %81, %84 : vector<14x14xf32>
    %c6 = arith.constant 6 : index
    %86 = memref.load %arg2[%c6] : memref<81xf32, #tpu.memory_space<smem>>
    %87 = vector.broadcast %86 : f32 to vector<14x14xf32>
    %88 = arith.mulf %87, %17 : vector<14x14xf32>
    %89 = arith.addf %85, %88 : vector<14x14xf32>
    %c7 = arith.constant 7 : index
    %90 = memref.load %arg2[%c7] : memref<81xf32, #tpu.memory_space<smem>>
    %91 = vector.broadcast %90 : f32 to vector<14x14xf32>
    %92 = arith.mulf %91, %19 : vector<14x14xf32>
    %93 = arith.addf %89, %92 : vector<14x14xf32>
    %c8 = arith.constant 8 : index
    %94 = memref.load %arg2[%c8] : memref<81xf32, #tpu.memory_space<smem>>
    %95 = vector.broadcast %94 : f32 to vector<14x14xf32>
    %96 = arith.mulf %95, %21 : vector<14x14xf32>
    %97 = arith.addf %93, %96 : vector<14x14xf32>
    %c9 = arith.constant 9 : index
    %98 = memref.load %arg2[%c9] : memref<81xf32, #tpu.memory_space<smem>>
    %99 = vector.broadcast %98 : f32 to vector<14x14xf32>
    %100 = arith.mulf %99, %23 : vector<14x14xf32>
    %101 = arith.addf %97, %100 : vector<14x14xf32>
    %c10 = arith.constant 10 : index
    %102 = memref.load %arg2[%c10] : memref<81xf32, #tpu.memory_space<smem>>
    %103 = vector.broadcast %102 : f32 to vector<14x14xf32>
    %104 = arith.mulf %103, %25 : vector<14x14xf32>
    %105 = arith.addf %101, %104 : vector<14x14xf32>
    %c11 = arith.constant 11 : index
    %106 = memref.load %arg2[%c11] : memref<81xf32, #tpu.memory_space<smem>>
    %107 = vector.broadcast %106 : f32 to vector<14x14xf32>
    %108 = arith.mulf %107, %27 : vector<14x14xf32>
    %109 = arith.addf %105, %108 : vector<14x14xf32>
    %c12 = arith.constant 12 : index
    %110 = memref.load %arg2[%c12] : memref<81xf32, #tpu.memory_space<smem>>
    %111 = vector.broadcast %110 : f32 to vector<14x14xf32>
    %112 = arith.mulf %111, %29 : vector<14x14xf32>
    %113 = arith.addf %109, %112 : vector<14x14xf32>
    %c13 = arith.constant 13 : index
    %114 = memref.load %arg2[%c13] : memref<81xf32, #tpu.memory_space<smem>>
    %115 = vector.broadcast %114 : f32 to vector<14x14xf32>
    %116 = arith.mulf %115, %31 : vector<14x14xf32>
    %117 = arith.addf %113, %116 : vector<14x14xf32>
    %c14 = arith.constant 14 : index
    %118 = memref.load %arg2[%c14] : memref<81xf32, #tpu.memory_space<smem>>
    %119 = vector.broadcast %118 : f32 to vector<14x14xf32>
    %120 = arith.mulf %119, %33 : vector<14x14xf32>
    %121 = arith.addf %117, %120 : vector<14x14xf32>
    %c15 = arith.constant 15 : index
    %122 = memref.load %arg2[%c15] : memref<81xf32, #tpu.memory_space<smem>>
    %123 = vector.broadcast %122 : f32 to vector<14x14xf32>
    %124 = arith.mulf %123, %35 : vector<14x14xf32>
    %125 = arith.addf %121, %124 : vector<14x14xf32>
    %c16 = arith.constant 16 : index
    %126 = memref.load %arg2[%c16] : memref<81xf32, #tpu.memory_space<smem>>
    %127 = vector.broadcast %126 : f32 to vector<14x14xf32>
    %128 = arith.mulf %127, %37 : vector<14x14xf32>
    %129 = arith.addf %125, %128 : vector<14x14xf32>
    %c17 = arith.constant 17 : index
    %130 = memref.load %arg2[%c17] : memref<81xf32, #tpu.memory_space<smem>>
    %131 = vector.broadcast %130 : f32 to vector<14x14xf32>
    %132 = arith.mulf %131, %39 : vector<14x14xf32>
    %133 = arith.addf %129, %132 : vector<14x14xf32>
    %c18 = arith.constant 18 : index
    %134 = memref.load %arg2[%c18] : memref<81xf32, #tpu.memory_space<smem>>
    %135 = vector.broadcast %134 : f32 to vector<14x14xf32>
    %136 = arith.mulf %135, %41 : vector<14x14xf32>
    %137 = arith.addf %133, %136 : vector<14x14xf32>
    %c19 = arith.constant 19 : index
    %138 = memref.load %arg2[%c19] : memref<81xf32, #tpu.memory_space<smem>>
    %139 = vector.broadcast %138 : f32 to vector<14x14xf32>
    %140 = arith.mulf %139, %43 : vector<14x14xf32>
    %141 = arith.addf %137, %140 : vector<14x14xf32>
    %c20 = arith.constant 20 : index
    %142 = memref.load %arg2[%c20] : memref<81xf32, #tpu.memory_space<smem>>
    %143 = vector.broadcast %142 : f32 to vector<14x14xf32>
    %144 = arith.mulf %143, %45 : vector<14x14xf32>
    %145 = arith.addf %141, %144 : vector<14x14xf32>
    %c21 = arith.constant 21 : index
    %146 = memref.load %arg2[%c21] : memref<81xf32, #tpu.memory_space<smem>>
    %147 = vector.broadcast %146 : f32 to vector<14x14xf32>
    %148 = arith.mulf %147, %47 : vector<14x14xf32>
    %149 = arith.addf %145, %148 : vector<14x14xf32>
    %c22 = arith.constant 22 : index
    %150 = memref.load %arg2[%c22] : memref<81xf32, #tpu.memory_space<smem>>
    %151 = vector.broadcast %150 : f32 to vector<14x14xf32>
    %152 = arith.mulf %151, %49 : vector<14x14xf32>
    %153 = arith.addf %149, %152 : vector<14x14xf32>
    %c23 = arith.constant 23 : index
    %154 = memref.load %arg2[%c23] : memref<81xf32, #tpu.memory_space<smem>>
    %155 = vector.broadcast %154 : f32 to vector<14x14xf32>
    %156 = arith.mulf %155, %51 : vector<14x14xf32>
    %157 = arith.addf %153, %156 : vector<14x14xf32>
    %c24 = arith.constant 24 : index
    %158 = memref.load %arg2[%c24] : memref<81xf32, #tpu.memory_space<smem>>
    %159 = vector.broadcast %158 : f32 to vector<14x14xf32>
    %160 = arith.mulf %159, %53 : vector<14x14xf32>
    %161 = arith.addf %157, %160 : vector<14x14xf32>
    %c25 = arith.constant 25 : index
    %162 = memref.load %arg2[%c25] : memref<81xf32, #tpu.memory_space<smem>>
    %163 = vector.broadcast %162 : f32 to vector<14x14xf32>
    %164 = arith.mulf %163, %55 : vector<14x14xf32>
    %165 = arith.addf %161, %164 : vector<14x14xf32>
    %c26 = arith.constant 26 : index
    %166 = memref.load %arg2[%c26] : memref<81xf32, #tpu.memory_space<smem>>
    %167 = vector.broadcast %166 : f32 to vector<14x14xf32>
    %168 = arith.mulf %167, %57 : vector<14x14xf32>
    %169 = arith.addf %165, %168 : vector<14x14xf32>
    %c0_9 = arith.constant 0 : index
    %c1_10 = arith.constant 1 : index
    %c1_11 = arith.constant 1 : index
    %170 = vector.load %arg6[%c0_9, %c1_10, %c1_11] : memref<3x16x16xf32, #tpu.memory_space<vmem>>, vector<1x14x14xf32>
    %171 = vector.shape_cast %170 : vector<1x14x14xf32> to vector<14x14xf32>
    %172 = vector.shape_cast %169 : vector<14x14xf32> to vector<1x14x14xf32>
    tpu.vector_store %arg6[%c0_9, %c1_10, %c1_11], %172 {strides = array<i32>} : memref<3x16x16xf32, #tpu.memory_space<vmem>>, vector<1x14x14xf32>,
    %cst_12 = arith.constant 0.000000e+00 : f32
    %173 = vector.broadcast %cst_12 : f32 to vector<14x14xf32>
    %c1_13 = arith.constant 1 : index
    %174 = memref.load %arg3[%c1_13] : memref<3xf32, #tpu.memory_space<smem>>
    %175 = vector.broadcast %174 : f32 to vector<14x14xf32>
    %176 = arith.addf %173, %175 : vector<14x14xf32>
    %c27 = arith.constant 27 : index
    %177 = memref.load %arg2[%c27] : memref<81xf32, #tpu.memory_space<smem>>
    %178 = vector.broadcast %177 : f32 to vector<14x14xf32>
    %179 = arith.mulf %178, %5 : vector<14x14xf32>
    %180 = arith.addf %176, %179 : vector<14x14xf32>
    %c28 = arith.constant 28 : index
    %181 = memref.load %arg2[%c28] : memref<81xf32, #tpu.memory_space<smem>>
    %182 = vector.broadcast %181 : f32 to vector<14x14xf32>
    %183 = arith.mulf %182, %7 : vector<14x14xf32>
    %184 = arith.addf %180, %183 : vector<14x14xf32>
    %c29 = arith.constant 29 : index
    %185 = memref.load %arg2[%c29] : memref<81xf32, #tpu.memory_space<smem>>
    %186 = vector.broadcast %185 : f32 to vector<14x14xf32>
    %187 = arith.mulf %186, %9 : vector<14x14xf32>
    %188 = arith.addf %184, %187 : vector<14x14xf32>
    %c30 = arith.constant 30 : index
    %189 = memref.load %arg2[%c30] : memref<81xf32, #tpu.memory_space<smem>>
    %190 = vector.broadcast %189 : f32 to vector<14x14xf32>
    %191 = arith.mulf %190, %11 : vector<14x14xf32>
    %192 = arith.addf %188, %191 : vector<14x14xf32>
    %c31 = arith.constant 31 : index
    %193 = memref.load %arg2[%c31] : memref<81xf32, #tpu.memory_space<smem>>
    %194 = vector.broadcast %193 : f32 to vector<14x14xf32>
    %195 = arith.mulf %194, %13 : vector<14x14xf32>
    %196 = arith.addf %192, %195 : vector<14x14xf32>
    %c32 = arith.constant 32 : index
    %197 = memref.load %arg2[%c32] : memref<81xf32, #tpu.memory_space<smem>>
    %198 = vector.broadcast %197 : f32 to vector<14x14xf32>
    %199 = arith.mulf %198, %15 : vector<14x14xf32>
    %200 = arith.addf %196, %199 : vector<14x14xf32>
    %c33 = arith.constant 33 : index
    %201 = memref.load %arg2[%c33] : memref<81xf32, #tpu.memory_space<smem>>
    %202 = vector.broadcast %201 : f32 to vector<14x14xf32>
    %203 = arith.mulf %202, %17 : vector<14x14xf32>
    %204 = arith.addf %200, %203 : vector<14x14xf32>
    %c34 = arith.constant 34 : index
    %205 = memref.load %arg2[%c34] : memref<81xf32, #tpu.memory_space<smem>>
    %206 = vector.broadcast %205 : f32 to vector<14x14xf32>
    %207 = arith.mulf %206, %19 : vector<14x14xf32>
    %208 = arith.addf %204, %207 : vector<14x14xf32>
    %c35 = arith.constant 35 : index
    %209 = memref.load %arg2[%c35] : memref<81xf32, #tpu.memory_space<smem>>
    %210 = vector.broadcast %209 : f32 to vector<14x14xf32>
    %211 = arith.mulf %210, %21 : vector<14x14xf32>
    %212 = arith.addf %208, %211 : vector<14x14xf32>
    %c36 = arith.constant 36 : index
    %213 = memref.load %arg2[%c36] : memref<81xf32, #tpu.memory_space<smem>>
    %214 = vector.broadcast %213 : f32 to vector<14x14xf32>
    %215 = arith.mulf %214, %23 : vector<14x14xf32>
    %216 = arith.addf %212, %215 : vector<14x14xf32>
    %c37 = arith.constant 37 : index
    %217 = memref.load %arg2[%c37] : memref<81xf32, #tpu.memory_space<smem>>
    %218 = vector.broadcast %217 : f32 to vector<14x14xf32>
    %219 = arith.mulf %218, %25 : vector<14x14xf32>
    %220 = arith.addf %216, %219 : vector<14x14xf32>
    %c38 = arith.constant 38 : index
    %221 = memref.load %arg2[%c38] : memref<81xf32, #tpu.memory_space<smem>>
    %222 = vector.broadcast %221 : f32 to vector<14x14xf32>
    %223 = arith.mulf %222, %27 : vector<14x14xf32>
    %224 = arith.addf %220, %223 : vector<14x14xf32>
    %c39 = arith.constant 39 : index
    %225 = memref.load %arg2[%c39] : memref<81xf32, #tpu.memory_space<smem>>
    %226 = vector.broadcast %225 : f32 to vector<14x14xf32>
    %227 = arith.mulf %226, %29 : vector<14x14xf32>
    %228 = arith.addf %224, %227 : vector<14x14xf32>
    %c40 = arith.constant 40 : index
    %229 = memref.load %arg2[%c40] : memref<81xf32, #tpu.memory_space<smem>>
    %230 = vector.broadcast %229 : f32 to vector<14x14xf32>
    %231 = arith.mulf %230, %31 : vector<14x14xf32>
    %232 = arith.addf %228, %231 : vector<14x14xf32>
    %c41 = arith.constant 41 : index
    %233 = memref.load %arg2[%c41] : memref<81xf32, #tpu.memory_space<smem>>
    %234 = vector.broadcast %233 : f32 to vector<14x14xf32>
    %235 = arith.mulf %234, %33 : vector<14x14xf32>
    %236 = arith.addf %232, %235 : vector<14x14xf32>
    %c42 = arith.constant 42 : index
    %237 = memref.load %arg2[%c42] : memref<81xf32, #tpu.memory_space<smem>>
    %238 = vector.broadcast %237 : f32 to vector<14x14xf32>
    %239 = arith.mulf %238, %35 : vector<14x14xf32>
    %240 = arith.addf %236, %239 : vector<14x14xf32>
    %c43 = arith.constant 43 : index
    %241 = memref.load %arg2[%c43] : memref<81xf32, #tpu.memory_space<smem>>
    %242 = vector.broadcast %241 : f32 to vector<14x14xf32>
    %243 = arith.mulf %242, %37 : vector<14x14xf32>
    %244 = arith.addf %240, %243 : vector<14x14xf32>
    %c44 = arith.constant 44 : index
    %245 = memref.load %arg2[%c44] : memref<81xf32, #tpu.memory_space<smem>>
    %246 = vector.broadcast %245 : f32 to vector<14x14xf32>
    %247 = arith.mulf %246, %39 : vector<14x14xf32>
    %248 = arith.addf %244, %247 : vector<14x14xf32>
    %c45 = arith.constant 45 : index
    %249 = memref.load %arg2[%c45] : memref<81xf32, #tpu.memory_space<smem>>
    %250 = vector.broadcast %249 : f32 to vector<14x14xf32>
    %251 = arith.mulf %250, %41 : vector<14x14xf32>
    %252 = arith.addf %248, %251 : vector<14x14xf32>
    %c46 = arith.constant 46 : index
    %253 = memref.load %arg2[%c46] : memref<81xf32, #tpu.memory_space<smem>>
    %254 = vector.broadcast %253 : f32 to vector<14x14xf32>
    %255 = arith.mulf %254, %43 : vector<14x14xf32>
    %256 = arith.addf %252, %255 : vector<14x14xf32>
    %c47 = arith.constant 47 : index
    %257 = memref.load %arg2[%c47] : memref<81xf32, #tpu.memory_space<smem>>
    %258 = vector.broadcast %257 : f32 to vector<14x14xf32>
    %259 = arith.mulf %258, %45 : vector<14x14xf32>
    %260 = arith.addf %256, %259 : vector<14x14xf32>
    %c48 = arith.constant 48 : index
    %261 = memref.load %arg2[%c48] : memref<81xf32, #tpu.memory_space<smem>>
    %262 = vector.broadcast %261 : f32 to vector<14x14xf32>
    %263 = arith.mulf %262, %47 : vector<14x14xf32>
    %264 = arith.addf %260, %263 : vector<14x14xf32>
    %c49 = arith.constant 49 : index
    %265 = memref.load %arg2[%c49] : memref<81xf32, #tpu.memory_space<smem>>
    %266 = vector.broadcast %265 : f32 to vector<14x14xf32>
    %267 = arith.mulf %266, %49 : vector<14x14xf32>
    %268 = arith.addf %264, %267 : vector<14x14xf32>
    %c50 = arith.constant 50 : index
    %269 = memref.load %arg2[%c50] : memref<81xf32, #tpu.memory_space<smem>>
    %270 = vector.broadcast %269 : f32 to vector<14x14xf32>
    %271 = arith.mulf %270, %51 : vector<14x14xf32>
    %272 = arith.addf %268, %271 : vector<14x14xf32>
    %c51 = arith.constant 51 : index
    %273 = memref.load %arg2[%c51] : memref<81xf32, #tpu.memory_space<smem>>
    %274 = vector.broadcast %273 : f32 to vector<14x14xf32>
    %275 = arith.mulf %274, %53 : vector<14x14xf32>
    %276 = arith.addf %272, %275 : vector<14x14xf32>
    %c52 = arith.constant 52 : index
    %277 = memref.load %arg2[%c52] : memref<81xf32, #tpu.memory_space<smem>>
    %278 = vector.broadcast %277 : f32 to vector<14x14xf32>
    %279 = arith.mulf %278, %55 : vector<14x14xf32>
    %280 = arith.addf %276, %279 : vector<14x14xf32>
    %c53 = arith.constant 53 : index
    %281 = memref.load %arg2[%c53] : memref<81xf32, #tpu.memory_space<smem>>
    %282 = vector.broadcast %281 : f32 to vector<14x14xf32>
    %283 = arith.mulf %282, %57 : vector<14x14xf32>
    %284 = arith.addf %280, %283 : vector<14x14xf32>
    %c1_14 = arith.constant 1 : index
    %c1_15 = arith.constant 1 : index
    %c1_16 = arith.constant 1 : index
    %285 = vector.load %arg6[%c1_14, %c1_15, %c1_16] : memref<3x16x16xf32, #tpu.memory_space<vmem>>, vector<1x14x14xf32>
    %286 = vector.shape_cast %285 : vector<1x14x14xf32> to vector<14x14xf32>
    %287 = vector.shape_cast %284 : vector<14x14xf32> to vector<1x14x14xf32>
    tpu.vector_store %arg6[%c1_14, %c1_15, %c1_16], %287 {strides = array<i32>} : memref<3x16x16xf32, #tpu.memory_space<vmem>>, vector<1x14x14xf32>,
    %cst_17 = arith.constant 0.000000e+00 : f32
    %288 = vector.broadcast %cst_17 : f32 to vector<14x14xf32>
    %c2_18 = arith.constant 2 : index
    %289 = memref.load %arg3[%c2_18] : memref<3xf32, #tpu.memory_space<smem>>
    %290 = vector.broadcast %289 : f32 to vector<14x14xf32>
    %291 = arith.addf %288, %290 : vector<14x14xf32>
    %c54 = arith.constant 54 : index
    %292 = memref.load %arg2[%c54] : memref<81xf32, #tpu.memory_space<smem>>
    %293 = vector.broadcast %292 : f32 to vector<14x14xf32>
    %294 = arith.mulf %293, %5 : vector<14x14xf32>
    %295 = arith.addf %291, %294 : vector<14x14xf32>
    %c55 = arith.constant 55 : index
    %296 = memref.load %arg2[%c55] : memref<81xf32, #tpu.memory_space<smem>>
    %297 = vector.broadcast %296 : f32 to vector<14x14xf32>
    %298 = arith.mulf %297, %7 : vector<14x14xf32>
    %299 = arith.addf %295, %298 : vector<14x14xf32>
    %c56 = arith.constant 56 : index
    %300 = memref.load %arg2[%c56] : memref<81xf32, #tpu.memory_space<smem>>
    %301 = vector.broadcast %300 : f32 to vector<14x14xf32>
    %302 = arith.mulf %301, %9 : vector<14x14xf32>
    %303 = arith.addf %299, %302 : vector<14x14xf32>
    %c57 = arith.constant 57 : index
    %304 = memref.load %arg2[%c57] : memref<81xf32, #tpu.memory_space<smem>>
    %305 = vector.broadcast %304 : f32 to vector<14x14xf32>
    %306 = arith.mulf %305, %11 : vector<14x14xf32>
    %307 = arith.addf %303, %306 : vector<14x14xf32>
    %c58 = arith.constant 58 : index
    %308 = memref.load %arg2[%c58] : memref<81xf32, #tpu.memory_space<smem>>
    %309 = vector.broadcast %308 : f32 to vector<14x14xf32>
    %310 = arith.mulf %309, %13 : vector<14x14xf32>
    %311 = arith.addf %307, %310 : vector<14x14xf32>
    %c59 = arith.constant 59 : index
    %312 = memref.load %arg2[%c59] : memref<81xf32, #tpu.memory_space<smem>>
    %313 = vector.broadcast %312 : f32 to vector<14x14xf32>
    %314 = arith.mulf %313, %15 : vector<14x14xf32>
    %315 = arith.addf %311, %314 : vector<14x14xf32>
    %c60 = arith.constant 60 : index
    %316 = memref.load %arg2[%c60] : memref<81xf32, #tpu.memory_space<smem>>
    %317 = vector.broadcast %316 : f32 to vector<14x14xf32>
    %318 = arith.mulf %317, %17 : vector<14x14xf32>
    %319 = arith.addf %315, %318 : vector<14x14xf32>
    %c61 = arith.constant 61 : index
    %320 = memref.load %arg2[%c61] : memref<81xf32, #tpu.memory_space<smem>>
    %321 = vector.broadcast %320 : f32 to vector<14x14xf32>
    %322 = arith.mulf %321, %19 : vector<14x14xf32>
    %323 = arith.addf %319, %322 : vector<14x14xf32>
    %c62 = arith.constant 62 : index
    %324 = memref.load %arg2[%c62] : memref<81xf32, #tpu.memory_space<smem>>
    %325 = vector.broadcast %324 : f32 to vector<14x14xf32>
    %326 = arith.mulf %325, %21 : vector<14x14xf32>
    %327 = arith.addf %323, %326 : vector<14x14xf32>
    %c63 = arith.constant 63 : index
    %328 = memref.load %arg2[%c63] : memref<81xf32, #tpu.memory_space<smem>>
    %329 = vector.broadcast %328 : f32 to vector<14x14xf32>
    %330 = arith.mulf %329, %23 : vector<14x14xf32>
    %331 = arith.addf %327, %330 : vector<14x14xf32>
    %c64 = arith.constant 64 : index
    %332 = memref.load %arg2[%c64] : memref<81xf32, #tpu.memory_space<smem>>
    %333 = vector.broadcast %332 : f32 to vector<14x14xf32>
    %334 = arith.mulf %333, %25 : vector<14x14xf32>
    %335 = arith.addf %331, %334 : vector<14x14xf32>
    %c65 = arith.constant 65 : index
    %336 = memref.load %arg2[%c65] : memref<81xf32, #tpu.memory_space<smem>>
    %337 = vector.broadcast %336 : f32 to vector<14x14xf32>
    %338 = arith.mulf %337, %27 : vector<14x14xf32>
    %339 = arith.addf %335, %338 : vector<14x14xf32>
    %c66 = arith.constant 66 : index
    %340 = memref.load %arg2[%c66] : memref<81xf32, #tpu.memory_space<smem>>
    %341 = vector.broadcast %340 : f32 to vector<14x14xf32>
    %342 = arith.mulf %341, %29 : vector<14x14xf32>
    %343 = arith.addf %339, %342 : vector<14x14xf32>
    %c67 = arith.constant 67 : index
    %344 = memref.load %arg2[%c67] : memref<81xf32, #tpu.memory_space<smem>>
    %345 = vector.broadcast %344 : f32 to vector<14x14xf32>
    %346 = arith.mulf %345, %31 : vector<14x14xf32>
    %347 = arith.addf %343, %346 : vector<14x14xf32>
    %c68 = arith.constant 68 : index
    %348 = memref.load %arg2[%c68] : memref<81xf32, #tpu.memory_space<smem>>
    %349 = vector.broadcast %348 : f32 to vector<14x14xf32>
    %350 = arith.mulf %349, %33 : vector<14x14xf32>
    %351 = arith.addf %347, %350 : vector<14x14xf32>
    %c69 = arith.constant 69 : index
    %352 = memref.load %arg2[%c69] : memref<81xf32, #tpu.memory_space<smem>>
    %353 = vector.broadcast %352 : f32 to vector<14x14xf32>
    %354 = arith.mulf %353, %35 : vector<14x14xf32>
    %355 = arith.addf %351, %354 : vector<14x14xf32>
    %c70 = arith.constant 70 : index
    %356 = memref.load %arg2[%c70] : memref<81xf32, #tpu.memory_space<smem>>
    %357 = vector.broadcast %356 : f32 to vector<14x14xf32>
    %358 = arith.mulf %357, %37 : vector<14x14xf32>
    %359 = arith.addf %355, %358 : vector<14x14xf32>
    %c71 = arith.constant 71 : index
    %360 = memref.load %arg2[%c71] : memref<81xf32, #tpu.memory_space<smem>>
    %361 = vector.broadcast %360 : f32 to vector<14x14xf32>
    %362 = arith.mulf %361, %39 : vector<14x14xf32>
    %363 = arith.addf %359, %362 : vector<14x14xf32>
    %c72 = arith.constant 72 : index
    %364 = memref.load %arg2[%c72] : memref<81xf32, #tpu.memory_space<smem>>
    %365 = vector.broadcast %364 : f32 to vector<14x14xf32>
    %366 = arith.mulf %365, %41 : vector<14x14xf32>
    %367 = arith.addf %363, %366 : vector<14x14xf32>
    %c73 = arith.constant 73 : index
    %368 = memref.load %arg2[%c73] : memref<81xf32, #tpu.memory_space<smem>>
    %369 = vector.broadcast %368 : f32 to vector<14x14xf32>
    %370 = arith.mulf %369, %43 : vector<14x14xf32>
    %371 = arith.addf %367, %370 : vector<14x14xf32>
    %c74 = arith.constant 74 : index
    %372 = memref.load %arg2[%c74] : memref<81xf32, #tpu.memory_space<smem>>
    %373 = vector.broadcast %372 : f32 to vector<14x14xf32>
    %374 = arith.mulf %373, %45 : vector<14x14xf32>
    %375 = arith.addf %371, %374 : vector<14x14xf32>
    %c75 = arith.constant 75 : index
    %376 = memref.load %arg2[%c75] : memref<81xf32, #tpu.memory_space<smem>>
    %377 = vector.broadcast %376 : f32 to vector<14x14xf32>
    %378 = arith.mulf %377, %47 : vector<14x14xf32>
    %379 = arith.addf %375, %378 : vector<14x14xf32>
    %c76 = arith.constant 76 : index
    %380 = memref.load %arg2[%c76] : memref<81xf32, #tpu.memory_space<smem>>
    %381 = vector.broadcast %380 : f32 to vector<14x14xf32>
    %382 = arith.mulf %381, %49 : vector<14x14xf32>
    %383 = arith.addf %379, %382 : vector<14x14xf32>
    %c77 = arith.constant 77 : index
    %384 = memref.load %arg2[%c77] : memref<81xf32, #tpu.memory_space<smem>>
    %385 = vector.broadcast %384 : f32 to vector<14x14xf32>
    %386 = arith.mulf %385, %51 : vector<14x14xf32>
    %387 = arith.addf %383, %386 : vector<14x14xf32>
    %c78 = arith.constant 78 : index
    %388 = memref.load %arg2[%c78] : memref<81xf32, #tpu.memory_space<smem>>
    %389 = vector.broadcast %388 : f32 to vector<14x14xf32>
    %390 = arith.mulf %389, %53 : vector<14x14xf32>
    %391 = arith.addf %387, %390 : vector<14x14xf32>
    %c79 = arith.constant 79 : index
    %392 = memref.load %arg2[%c79] : memref<81xf32, #tpu.memory_space<smem>>
    %393 = vector.broadcast %392 : f32 to vector<14x14xf32>
    %394 = arith.mulf %393, %55 : vector<14x14xf32>
    %395 = arith.addf %391, %394 : vector<14x14xf32>
    %c80 = arith.constant 80 : index
    %396 = memref.load %arg2[%c80] : memref<81xf32, #tpu.memory_space<smem>>
    %397 = vector.broadcast %396 : f32 to vector<14x14xf32>
    %398 = arith.mulf %397, %57 : vector<14x14xf32>
    %399 = arith.addf %395, %398 : vector<14x14xf32>
    %c2_19 = arith.constant 2 : index
    %c1_20 = arith.constant 1 : index
    %c1_21 = arith.constant 1 : index
    %400 = vector.load %arg6[%c2_19, %c1_20, %c1_21] : memref<3x16x16xf32, #tpu.memory_space<vmem>>, vector<1x14x14xf32>
    %401 = vector.shape_cast %400 : vector<1x14x14xf32> to vector<14x14xf32>
    %402 = vector.shape_cast %399 : vector<14x14xf32> to vector<1x14x14xf32>
    tpu.vector_store %arg6[%c2_19, %c1_20, %c1_21], %402 {strides = array<i32>} : memref<3x16x16xf32, #tpu.memory_space<vmem>>, vector<1x14x14xf32>,
    %c0_22 = arith.constant 0 : index
    %c0_23 = arith.constant 0 : index
    %c0_24 = arith.constant 0 : index
    %403 = vector.load %arg6[%c0_22, %c0_23, %c0_24] : memref<3x16x16xf32, #tpu.memory_space<vmem>>, vector<3x16x16xf32>
    %404 = vector.extract_strided_slice %403 {offsets = [0, 0, 0], sizes = [1, 14, 14], strides = [1, 1, 1]} : vector<3x16x16xf32> to vector<1x14x14xf32>
    %405 = vector.shape_cast %404 : vector<1x14x14xf32> to vector<14x14xf32>
    %406 = vector.extract_strided_slice %403 {offsets = [0, 0, 1], sizes = [1, 14, 14], strides = [1, 1, 1]} : vector<3x16x16xf32> to vector<1x14x14xf32>
    %407 = vector.shape_cast %406 : vector<1x14x14xf32> to vector<14x14xf32>
    %408 = vector.extract_strided_slice %403 {offsets = [0, 0, 2], sizes = [1, 14, 14], strides = [1, 1, 1]} : vector<3x16x16xf32> to vector<1x14x14xf32>
    %409 = vector.shape_cast %408 : vector<1x14x14xf32> to vector<14x14xf32>
    %410 = vector.extract_strided_slice %403 {offsets = [0, 1, 0], sizes = [1, 14, 14], strides = [1, 1, 1]} : vector<3x16x16xf32> to vector<1x14x14xf32>
    %411 = vector.shape_cast %410 : vector<1x14x14xf32> to vector<14x14xf32>
    %412 = vector.extract_strided_slice %403 {offsets = [0, 1, 1], sizes = [1, 14, 14], strides = [1, 1, 1]} : vector<3x16x16xf32> to vector<1x14x14xf32>
    %413 = vector.shape_cast %412 : vector<1x14x14xf32> to vector<14x14xf32>
    %414 = vector.extract_strided_slice %403 {offsets = [0, 1, 2], sizes = [1, 14, 14], strides = [1, 1, 1]} : vector<3x16x16xf32> to vector<1x14x14xf32>
    %415 = vector.shape_cast %414 : vector<1x14x14xf32> to vector<14x14xf32>
    %416 = vector.extract_strided_slice %403 {offsets = [0, 2, 0], sizes = [1, 14, 14], strides = [1, 1, 1]} : vector<3x16x16xf32> to vector<1x14x14xf32>
    %417 = vector.shape_cast %416 : vector<1x14x14xf32> to vector<14x14xf32>
    %418 = vector.extract_strided_slice %403 {offsets = [0, 2, 1], sizes = [1, 14, 14], strides = [1, 1, 1]} : vector<3x16x16xf32> to vector<1x14x14xf32>
    %419 = vector.shape_cast %418 : vector<1x14x14xf32> to vector<14x14xf32>
    %420 = vector.extract_strided_slice %403 {offsets = [0, 2, 2], sizes = [1, 14, 14], strides = [1, 1, 1]} : vector<3x16x16xf32> to vector<1x14x14xf32>
    %421 = vector.shape_cast %420 : vector<1x14x14xf32> to vector<14x14xf32>
    %422 = vector.extract_strided_slice %403 {offsets = [1, 0, 0], sizes = [1, 14, 14], strides = [1, 1, 1]} : vector<3x16x16xf32> to vector<1x14x14xf32>
    %423 = vector.shape_cast %422 : vector<1x14x14xf32> to vector<14x14xf32>
    %424 = vector.extract_strided_slice %403 {offsets = [1, 0, 1], sizes = [1, 14, 14], strides = [1, 1, 1]} : vector<3x16x16xf32> to vector<1x14x14xf32>
    %425 = vector.shape_cast %424 : vector<1x14x14xf32> to vector<14x14xf32>
    %426 = vector.extract_strided_slice %403 {offsets = [1, 0, 2], sizes = [1, 14, 14], strides = [1, 1, 1]} : vector<3x16x16xf32> to vector<1x14x14xf32>
    %427 = vector.shape_cast %426 : vector<1x14x14xf32> to vector<14x14xf32>
    %428 = vector.extract_strided_slice %403 {offsets = [1, 1, 0], sizes = [1, 14, 14], strides = [1, 1, 1]} : vector<3x16x16xf32> to vector<1x14x14xf32>
    %429 = vector.shape_cast %428 : vector<1x14x14xf32> to vector<14x14xf32>
    %430 = vector.extract_strided_slice %403 {offsets = [1, 1, 1], sizes = [1, 14, 14], strides = [1, 1, 1]} : vector<3x16x16xf32> to vector<1x14x14xf32>
    %431 = vector.shape_cast %430 : vector<1x14x14xf32> to vector<14x14xf32>
    %432 = vector.extract_strided_slice %403 {offsets = [1, 1, 2], sizes = [1, 14, 14], strides = [1, 1, 1]} : vector<3x16x16xf32> to vector<1x14x14xf32>
    %433 = vector.shape_cast %432 : vector<1x14x14xf32> to vector<14x14xf32>
    %434 = vector.extract_strided_slice %403 {offsets = [1, 2, 0], sizes = [1, 14, 14], strides = [1, 1, 1]} : vector<3x16x16xf32> to vector<1x14x14xf32>
    %435 = vector.shape_cast %434 : vector<1x14x14xf32> to vector<14x14xf32>
    %436 = vector.extract_strided_slice %403 {offsets = [1, 2, 1], sizes = [1, 14, 14], strides = [1, 1, 1]} : vector<3x16x16xf32> to vector<1x14x14xf32>
    %437 = vector.shape_cast %436 : vector<1x14x14xf32> to vector<14x14xf32>
    %438 = vector.extract_strided_slice %403 {offsets = [1, 2, 2], sizes = [1, 14, 14], strides = [1, 1, 1]} : vector<3x16x16xf32> to vector<1x14x14xf32>
    %439 = vector.shape_cast %438 : vector<1x14x14xf32> to vector<14x14xf32>
    %440 = vector.extract_strided_slice %403 {offsets = [2, 0, 0], sizes = [1, 14, 14], strides = [1, 1, 1]} : vector<3x16x16xf32> to vector<1x14x14xf32>
    %441 = vector.shape_cast %440 : vector<1x14x14xf32> to vector<14x14xf32>
    %442 = vector.extract_strided_slice %403 {offsets = [2, 0, 1], sizes = [1, 14, 14], strides = [1, 1, 1]} : vector<3x16x16xf32> to vector<1x14x14xf32>
    %443 = vector.shape_cast %442 : vector<1x14x14xf32> to vector<14x14xf32>
    %444 = vector.extract_strided_slice %403 {offsets = [2, 0, 2], sizes = [1, 14, 14], strides = [1, 1, 1]} : vector<3x16x16xf32> to vector<1x14x14xf32>
    %445 = vector.shape_cast %444 : vector<1x14x14xf32> to vector<14x14xf32>
    %446 = vector.extract_strided_slice %403 {offsets = [2, 1, 0], sizes = [1, 14, 14], strides = [1, 1, 1]} : vector<3x16x16xf32> to vector<1x14x14xf32>
    %447 = vector.shape_cast %446 : vector<1x14x14xf32> to vector<14x14xf32>
    %448 = vector.extract_strided_slice %403 {offsets = [2, 1, 1], sizes = [1, 14, 14], strides = [1, 1, 1]} : vector<3x16x16xf32> to vector<1x14x14xf32>
    %449 = vector.shape_cast %448 : vector<1x14x14xf32> to vector<14x14xf32>
    %450 = vector.extract_strided_slice %403 {offsets = [2, 1, 2], sizes = [1, 14, 14], strides = [1, 1, 1]} : vector<3x16x16xf32> to vector<1x14x14xf32>
    %451 = vector.shape_cast %450 : vector<1x14x14xf32> to vector<14x14xf32>
    %452 = vector.extract_strided_slice %403 {offsets = [2, 2, 0], sizes = [1, 14, 14], strides = [1, 1, 1]} : vector<3x16x16xf32> to vector<1x14x14xf32>
    %453 = vector.shape_cast %452 : vector<1x14x14xf32> to vector<14x14xf32>
    %454 = vector.extract_strided_slice %403 {offsets = [2, 2, 1], sizes = [1, 14, 14], strides = [1, 1, 1]} : vector<3x16x16xf32> to vector<1x14x14xf32>
    %455 = vector.shape_cast %454 : vector<1x14x14xf32> to vector<14x14xf32>
    %456 = vector.extract_strided_slice %403 {offsets = [2, 2, 2], sizes = [1, 14, 14], strides = [1, 1, 1]} : vector<3x16x16xf32> to vector<1x14x14xf32>
    %457 = vector.shape_cast %456 : vector<1x14x14xf32> to vector<14x14xf32>
    %cst_25 = arith.constant 0.000000e+00 : f32
    %458 = vector.broadcast %cst_25 : f32 to vector<14x14xf32>
    %c0_26 = arith.constant 0 : index
    %459 = memref.load %arg4[%c0_26] : memref<81xf32, #tpu.memory_space<smem>>
    %460 = vector.broadcast %459 : f32 to vector<14x14xf32>
    %461 = arith.mulf %460, %405 : vector<14x14xf32>
    %462 = arith.addf %458, %461 : vector<14x14xf32>
    %c1_27 = arith.constant 1 : index
    %463 = memref.load %arg4[%c1_27] : memref<81xf32, #tpu.memory_space<smem>>
    %464 = vector.broadcast %463 : f32 to vector<14x14xf32>
    %465 = arith.mulf %464, %407 : vector<14x14xf32>
    %466 = arith.addf %462, %465 : vector<14x14xf32>
    %c2_28 = arith.constant 2 : index
    %467 = memref.load %arg4[%c2_28] : memref<81xf32, #tpu.memory_space<smem>>
    %468 = vector.broadcast %467 : f32 to vector<14x14xf32>
    %469 = arith.mulf %468, %409 : vector<14x14xf32>
    %470 = arith.addf %466, %469 : vector<14x14xf32>
    %c3_29 = arith.constant 3 : index
    %471 = memref.load %arg4[%c3_29] : memref<81xf32, #tpu.memory_space<smem>>
    %472 = vector.broadcast %471 : f32 to vector<14x14xf32>
    %473 = arith.mulf %472, %411 : vector<14x14xf32>
    %474 = arith.addf %470, %473 : vector<14x14xf32>
    %c4_30 = arith.constant 4 : index
    %475 = memref.load %arg4[%c4_30] : memref<81xf32, #tpu.memory_space<smem>>
    %476 = vector.broadcast %475 : f32 to vector<14x14xf32>
    %477 = arith.mulf %476, %413 : vector<14x14xf32>
    %478 = arith.addf %474, %477 : vector<14x14xf32>
    %c5_31 = arith.constant 5 : index
    %479 = memref.load %arg4[%c5_31] : memref<81xf32, #tpu.memory_space<smem>>
    %480 = vector.broadcast %479 : f32 to vector<14x14xf32>
    %481 = arith.mulf %480, %415 : vector<14x14xf32>
    %482 = arith.addf %478, %481 : vector<14x14xf32>
    %c6_32 = arith.constant 6 : index
    %483 = memref.load %arg4[%c6_32] : memref<81xf32, #tpu.memory_space<smem>>
    %484 = vector.broadcast %483 : f32 to vector<14x14xf32>
    %485 = arith.mulf %484, %417 : vector<14x14xf32>
    %486 = arith.addf %482, %485 : vector<14x14xf32>
    %c7_33 = arith.constant 7 : index
    %487 = memref.load %arg4[%c7_33] : memref<81xf32, #tpu.memory_space<smem>>
    %488 = vector.broadcast %487 : f32 to vector<14x14xf32>
    %489 = arith.mulf %488, %419 : vector<14x14xf32>
    %490 = arith.addf %486, %489 : vector<14x14xf32>
    %c8_34 = arith.constant 8 : index
    %491 = memref.load %arg4[%c8_34] : memref<81xf32, #tpu.memory_space<smem>>
    %492 = vector.broadcast %491 : f32 to vector<14x14xf32>
    %493 = arith.mulf %492, %421 : vector<14x14xf32>
    %494 = arith.addf %490, %493 : vector<14x14xf32>
    %c9_35 = arith.constant 9 : index
    %495 = memref.load %arg4[%c9_35] : memref<81xf32, #tpu.memory_space<smem>>
    %496 = vector.broadcast %495 : f32 to vector<14x14xf32>
    %497 = arith.mulf %496, %423 : vector<14x14xf32>
    %498 = arith.addf %494, %497 : vector<14x14xf32>
    %c10_36 = arith.constant 10 : index
    %499 = memref.load %arg4[%c10_36] : memref<81xf32, #tpu.memory_space<smem>>
    %500 = vector.broadcast %499 : f32 to vector<14x14xf32>
    %501 = arith.mulf %500, %425 : vector<14x14xf32>
    %502 = arith.addf %498, %501 : vector<14x14xf32>
    %c11_37 = arith.constant 11 : index
    %503 = memref.load %arg4[%c11_37] : memref<81xf32, #tpu.memory_space<smem>>
    %504 = vector.broadcast %503 : f32 to vector<14x14xf32>
    %505 = arith.mulf %504, %427 : vector<14x14xf32>
    %506 = arith.addf %502, %505 : vector<14x14xf32>
    %c12_38 = arith.constant 12 : index
    %507 = memref.load %arg4[%c12_38] : memref<81xf32, #tpu.memory_space<smem>>
    %508 = vector.broadcast %507 : f32 to vector<14x14xf32>
    %509 = arith.mulf %508, %429 : vector<14x14xf32>
    %510 = arith.addf %506, %509 : vector<14x14xf32>
    %c13_39 = arith.constant 13 : index
    %511 = memref.load %arg4[%c13_39] : memref<81xf32, #tpu.memory_space<smem>>
    %512 = vector.broadcast %511 : f32 to vector<14x14xf32>
    %513 = arith.mulf %512, %431 : vector<14x14xf32>
    %514 = arith.addf %510, %513 : vector<14x14xf32>
    %c14_40 = arith.constant 14 : index
    %515 = memref.load %arg4[%c14_40] : memref<81xf32, #tpu.memory_space<smem>>
    %516 = vector.broadcast %515 : f32 to vector<14x14xf32>
    %517 = arith.mulf %516, %433 : vector<14x14xf32>
    %518 = arith.addf %514, %517 : vector<14x14xf32>
    %c15_41 = arith.constant 15 : index
    %519 = memref.load %arg4[%c15_41] : memref<81xf32, #tpu.memory_space<smem>>
    %520 = vector.broadcast %519 : f32 to vector<14x14xf32>
    %521 = arith.mulf %520, %435 : vector<14x14xf32>
    %522 = arith.addf %518, %521 : vector<14x14xf32>
    %c16_42 = arith.constant 16 : index
    %523 = memref.load %arg4[%c16_42] : memref<81xf32, #tpu.memory_space<smem>>
    %524 = vector.broadcast %523 : f32 to vector<14x14xf32>
    %525 = arith.mulf %524, %437 : vector<14x14xf32>
    %526 = arith.addf %522, %525 : vector<14x14xf32>
    %c17_43 = arith.constant 17 : index
    %527 = memref.load %arg4[%c17_43] : memref<81xf32, #tpu.memory_space<smem>>
    %528 = vector.broadcast %527 : f32 to vector<14x14xf32>
    %529 = arith.mulf %528, %439 : vector<14x14xf32>
    %530 = arith.addf %526, %529 : vector<14x14xf32>
    %c18_44 = arith.constant 18 : index
    %531 = memref.load %arg4[%c18_44] : memref<81xf32, #tpu.memory_space<smem>>
    %532 = vector.broadcast %531 : f32 to vector<14x14xf32>
    %533 = arith.mulf %532, %441 : vector<14x14xf32>
    %534 = arith.addf %530, %533 : vector<14x14xf32>
    %c19_45 = arith.constant 19 : index
    %535 = memref.load %arg4[%c19_45] : memref<81xf32, #tpu.memory_space<smem>>
    %536 = vector.broadcast %535 : f32 to vector<14x14xf32>
    %537 = arith.mulf %536, %443 : vector<14x14xf32>
    %538 = arith.addf %534, %537 : vector<14x14xf32>
    %c20_46 = arith.constant 20 : index
    %539 = memref.load %arg4[%c20_46] : memref<81xf32, #tpu.memory_space<smem>>
    %540 = vector.broadcast %539 : f32 to vector<14x14xf32>
    %541 = arith.mulf %540, %445 : vector<14x14xf32>
    %542 = arith.addf %538, %541 : vector<14x14xf32>
    %c21_47 = arith.constant 21 : index
    %543 = memref.load %arg4[%c21_47] : memref<81xf32, #tpu.memory_space<smem>>
    %544 = vector.broadcast %543 : f32 to vector<14x14xf32>
    %545 = arith.mulf %544, %447 : vector<14x14xf32>
    %546 = arith.addf %542, %545 : vector<14x14xf32>
    %c22_48 = arith.constant 22 : index
    %547 = memref.load %arg4[%c22_48] : memref<81xf32, #tpu.memory_space<smem>>
    %548 = vector.broadcast %547 : f32 to vector<14x14xf32>
    %549 = arith.mulf %548, %449 : vector<14x14xf32>
    %550 = arith.addf %546, %549 : vector<14x14xf32>
    %c23_49 = arith.constant 23 : index
    %551 = memref.load %arg4[%c23_49] : memref<81xf32, #tpu.memory_space<smem>>
    %552 = vector.broadcast %551 : f32 to vector<14x14xf32>
    %553 = arith.mulf %552, %451 : vector<14x14xf32>
    %554 = arith.addf %550, %553 : vector<14x14xf32>
    %c24_50 = arith.constant 24 : index
    %555 = memref.load %arg4[%c24_50] : memref<81xf32, #tpu.memory_space<smem>>
    %556 = vector.broadcast %555 : f32 to vector<14x14xf32>
    %557 = arith.mulf %556, %453 : vector<14x14xf32>
    %558 = arith.addf %554, %557 : vector<14x14xf32>
    %c25_51 = arith.constant 25 : index
    %559 = memref.load %arg4[%c25_51] : memref<81xf32, #tpu.memory_space<smem>>
    %560 = vector.broadcast %559 : f32 to vector<14x14xf32>
    %561 = arith.mulf %560, %455 : vector<14x14xf32>
    %562 = arith.addf %558, %561 : vector<14x14xf32>
    %c26_52 = arith.constant 26 : index
    %563 = memref.load %arg4[%c26_52] : memref<81xf32, #tpu.memory_space<smem>>
    %564 = vector.broadcast %563 : f32 to vector<14x14xf32>
    %565 = arith.mulf %564, %457 : vector<14x14xf32>
    %566 = arith.addf %562, %565 : vector<14x14xf32>
    %c0_53 = arith.constant 0 : index
    %c0_54 = arith.constant 0 : index
    %c0_55 = arith.constant 0 : index
    %c0_56 = arith.constant 0 : index
    %567 = vector.load %arg5[%c0_53, %c0_54, %c0_55, %c0_56] : memref<1x3x14x14xf32, #tpu.memory_space<vmem>>, vector<1x1x14x14xf32>
    %568 = vector.shape_cast %567 : vector<1x1x14x14xf32> to vector<14x14xf32>
    %569 = vector.shape_cast %566 : vector<14x14xf32> to vector<1x1x14x14xf32>
    tpu.vector_store %arg5[%c0_53, %c0_54, %c0_55, %c0_56], %569 {strides = array<i32>} : memref<1x3x14x14xf32, #tpu.memory_space<vmem>>, vector<1x1x14x14xf32>,
    %cst_57 = arith.constant 0.000000e+00 : f32
    %570 = vector.broadcast %cst_57 : f32 to vector<14x14xf32>
    %c27_58 = arith.constant 27 : index
    %571 = memref.load %arg4[%c27_58] : memref<81xf32, #tpu.memory_space<smem>>
    %572 = vector.broadcast %571 : f32 to vector<14x14xf32>
    %573 = arith.mulf %572, %405 : vector<14x14xf32>
    %574 = arith.addf %570, %573 : vector<14x14xf32>
    %c28_59 = arith.constant 28 : index
    %575 = memref.load %arg4[%c28_59] : memref<81xf32, #tpu.memory_space<smem>>
    %576 = vector.broadcast %575 : f32 to vector<14x14xf32>
    %577 = arith.mulf %576, %407 : vector<14x14xf32>
    %578 = arith.addf %574, %577 : vector<14x14xf32>
    %c29_60 = arith.constant 29 : index
    %579 = memref.load %arg4[%c29_60] : memref<81xf32, #tpu.memory_space<smem>>
    %580 = vector.broadcast %579 : f32 to vector<14x14xf32>
    %581 = arith.mulf %580, %409 : vector<14x14xf32>
    %582 = arith.addf %578, %581 : vector<14x14xf32>
    %c30_61 = arith.constant 30 : index
    %583 = memref.load %arg4[%c30_61] : memref<81xf32, #tpu.memory_space<smem>>
    %584 = vector.broadcast %583 : f32 to vector<14x14xf32>
    %585 = arith.mulf %584, %411 : vector<14x14xf32>
    %586 = arith.addf %582, %585 : vector<14x14xf32>
    %c31_62 = arith.constant 31 : index
    %587 = memref.load %arg4[%c31_62] : memref<81xf32, #tpu.memory_space<smem>>
    %588 = vector.broadcast %587 : f32 to vector<14x14xf32>
    %589 = arith.mulf %588, %413 : vector<14x14xf32>
    %590 = arith.addf %586, %589 : vector<14x14xf32>
    %c32_63 = arith.constant 32 : index
    %591 = memref.load %arg4[%c32_63] : memref<81xf32, #tpu.memory_space<smem>>
    %592 = vector.broadcast %591 : f32 to vector<14x14xf32>
    %593 = arith.mulf %592, %415 : vector<14x14xf32>
    %594 = arith.addf %590, %593 : vector<14x14xf32>
    %c33_64 = arith.constant 33 : index
    %595 = memref.load %arg4[%c33_64] : memref<81xf32, #tpu.memory_space<smem>>
    %596 = vector.broadcast %595 : f32 to vector<14x14xf32>
    %597 = arith.mulf %596, %417 : vector<14x14xf32>
    %598 = arith.addf %594, %597 : vector<14x14xf32>
    %c34_65 = arith.constant 34 : index
    %599 = memref.load %arg4[%c34_65] : memref<81xf32, #tpu.memory_space<smem>>
    %600 = vector.broadcast %599 : f32 to vector<14x14xf32>
    %601 = arith.mulf %600, %419 : vector<14x14xf32>
    %602 = arith.addf %598, %601 : vector<14x14xf32>
    %c35_66 = arith.constant 35 : index
    %603 = memref.load %arg4[%c35_66] : memref<81xf32, #tpu.memory_space<smem>>
    %604 = vector.broadcast %603 : f32 to vector<14x14xf32>
    %605 = arith.mulf %604, %421 : vector<14x14xf32>
    %606 = arith.addf %602, %605 : vector<14x14xf32>
    %c36_67 = arith.constant 36 : index
    %607 = memref.load %arg4[%c36_67] : memref<81xf32, #tpu.memory_space<smem>>
    %608 = vector.broadcast %607 : f32 to vector<14x14xf32>
    %609 = arith.mulf %608, %423 : vector<14x14xf32>
    %610 = arith.addf %606, %609 : vector<14x14xf32>
    %c37_68 = arith.constant 37 : index
    %611 = memref.load %arg4[%c37_68] : memref<81xf32, #tpu.memory_space<smem>>
    %612 = vector.broadcast %611 : f32 to vector<14x14xf32>
    %613 = arith.mulf %612, %425 : vector<14x14xf32>
    %614 = arith.addf %610, %613 : vector<14x14xf32>
    %c38_69 = arith.constant 38 : index
    %615 = memref.load %arg4[%c38_69] : memref<81xf32, #tpu.memory_space<smem>>
    %616 = vector.broadcast %615 : f32 to vector<14x14xf32>
    %617 = arith.mulf %616, %427 : vector<14x14xf32>
    %618 = arith.addf %614, %617 : vector<14x14xf32>
    %c39_70 = arith.constant 39 : index
    %619 = memref.load %arg4[%c39_70] : memref<81xf32, #tpu.memory_space<smem>>
    %620 = vector.broadcast %619 : f32 to vector<14x14xf32>
    %621 = arith.mulf %620, %429 : vector<14x14xf32>
    %622 = arith.addf %618, %621 : vector<14x14xf32>
    %c40_71 = arith.constant 40 : index
    %623 = memref.load %arg4[%c40_71] : memref<81xf32, #tpu.memory_space<smem>>
    %624 = vector.broadcast %623 : f32 to vector<14x14xf32>
    %625 = arith.mulf %624, %431 : vector<14x14xf32>
    %626 = arith.addf %622, %625 : vector<14x14xf32>
    %c41_72 = arith.constant 41 : index
    %627 = memref.load %arg4[%c41_72] : memref<81xf32, #tpu.memory_space<smem>>
    %628 = vector.broadcast %627 : f32 to vector<14x14xf32>
    %629 = arith.mulf %628, %433 : vector<14x14xf32>
    %630 = arith.addf %626, %629 : vector<14x14xf32>
    %c42_73 = arith.constant 42 : index
    %631 = memref.load %arg4[%c42_73] : memref<81xf32, #tpu.memory_space<smem>>
    %632 = vector.broadcast %631 : f32 to vector<14x14xf32>
    %633 = arith.mulf %632, %435 : vector<14x14xf32>
    %634 = arith.addf %630, %633 : vector<14x14xf32>
    %c43_74 = arith.constant 43 : index
    %635 = memref.load %arg4[%c43_74] : memref<81xf32, #tpu.memory_space<smem>>
    %636 = vector.broadcast %635 : f32 to vector<14x14xf32>
    %637 = arith.mulf %636, %437 : vector<14x14xf32>
    %638 = arith.addf %634, %637 : vector<14x14xf32>
    %c44_75 = arith.constant 44 : index
    %639 = memref.load %arg4[%c44_75] : memref<81xf32, #tpu.memory_space<smem>>
    %640 = vector.broadcast %639 : f32 to vector<14x14xf32>
    %641 = arith.mulf %640, %439 : vector<14x14xf32>
    %642 = arith.addf %638, %641 : vector<14x14xf32>
    %c45_76 = arith.constant 45 : index
    %643 = memref.load %arg4[%c45_76] : memref<81xf32, #tpu.memory_space<smem>>
    %644 = vector.broadcast %643 : f32 to vector<14x14xf32>
    %645 = arith.mulf %644, %441 : vector<14x14xf32>
    %646 = arith.addf %642, %645 : vector<14x14xf32>
    %c46_77 = arith.constant 46 : index
    %647 = memref.load %arg4[%c46_77] : memref<81xf32, #tpu.memory_space<smem>>
    %648 = vector.broadcast %647 : f32 to vector<14x14xf32>
    %649 = arith.mulf %648, %443 : vector<14x14xf32>
    %650 = arith.addf %646, %649 : vector<14x14xf32>
    %c47_78 = arith.constant 47 : index
    %651 = memref.load %arg4[%c47_78] : memref<81xf32, #tpu.memory_space<smem>>
    %652 = vector.broadcast %651 : f32 to vector<14x14xf32>
    %653 = arith.mulf %652, %445 : vector<14x14xf32>
    %654 = arith.addf %650, %653 : vector<14x14xf32>
    %c48_79 = arith.constant 48 : index
    %655 = memref.load %arg4[%c48_79] : memref<81xf32, #tpu.memory_space<smem>>
    %656 = vector.broadcast %655 : f32 to vector<14x14xf32>
    %657 = arith.mulf %656, %447 : vector<14x14xf32>
    %658 = arith.addf %654, %657 : vector<14x14xf32>
    %c49_80 = arith.constant 49 : index
    %659 = memref.load %arg4[%c49_80] : memref<81xf32, #tpu.memory_space<smem>>
    %660 = vector.broadcast %659 : f32 to vector<14x14xf32>
    %661 = arith.mulf %660, %449 : vector<14x14xf32>
    %662 = arith.addf %658, %661 : vector<14x14xf32>
    %c50_81 = arith.constant 50 : index
    %663 = memref.load %arg4[%c50_81] : memref<81xf32, #tpu.memory_space<smem>>
    %664 = vector.broadcast %663 : f32 to vector<14x14xf32>
    %665 = arith.mulf %664, %451 : vector<14x14xf32>
    %666 = arith.addf %662, %665 : vector<14x14xf32>
    %c51_82 = arith.constant 51 : index
    %667 = memref.load %arg4[%c51_82] : memref<81xf32, #tpu.memory_space<smem>>
    %668 = vector.broadcast %667 : f32 to vector<14x14xf32>
    %669 = arith.mulf %668, %453 : vector<14x14xf32>
    %670 = arith.addf %666, %669 : vector<14x14xf32>
    %c52_83 = arith.constant 52 : index
    %671 = memref.load %arg4[%c52_83] : memref<81xf32, #tpu.memory_space<smem>>
    %672 = vector.broadcast %671 : f32 to vector<14x14xf32>
    %673 = arith.mulf %672, %455 : vector<14x14xf32>
    %674 = arith.addf %670, %673 : vector<14x14xf32>
    %c53_84 = arith.constant 53 : index
    %675 = memref.load %arg4[%c53_84] : memref<81xf32, #tpu.memory_space<smem>>
    %676 = vector.broadcast %675 : f32 to vector<14x14xf32>
    %677 = arith.mulf %676, %457 : vector<14x14xf32>
    %678 = arith.addf %674, %677 : vector<14x14xf32>
    %c0_85 = arith.constant 0 : index
    %c1_86 = arith.constant 1 : index
    %c0_87 = arith.constant 0 : index
    %c0_88 = arith.constant 0 : index
    %679 = vector.load %arg5[%c0_85, %c1_86, %c0_87, %c0_88] : memref<1x3x14x14xf32, #tpu.memory_space<vmem>>, vector<1x1x14x14xf32>
    %680 = vector.shape_cast %679 : vector<1x1x14x14xf32> to vector<14x14xf32>
    %681 = vector.shape_cast %678 : vector<14x14xf32> to vector<1x1x14x14xf32>
    tpu.vector_store %arg5[%c0_85, %c1_86, %c0_87, %c0_88], %681 {strides = array<i32>} : memref<1x3x14x14xf32, #tpu.memory_space<vmem>>, vector<1x1x14x14xf32>,
    %cst_89 = arith.constant 0.000000e+00 : f32
    %682 = vector.broadcast %cst_89 : f32 to vector<14x14xf32>
    %c54_90 = arith.constant 54 : index
    %683 = memref.load %arg4[%c54_90] : memref<81xf32, #tpu.memory_space<smem>>
    %684 = vector.broadcast %683 : f32 to vector<14x14xf32>
    %685 = arith.mulf %684, %405 : vector<14x14xf32>
    %686 = arith.addf %682, %685 : vector<14x14xf32>
    %c55_91 = arith.constant 55 : index
    %687 = memref.load %arg4[%c55_91] : memref<81xf32, #tpu.memory_space<smem>>
    %688 = vector.broadcast %687 : f32 to vector<14x14xf32>
    %689 = arith.mulf %688, %407 : vector<14x14xf32>
    %690 = arith.addf %686, %689 : vector<14x14xf32>
    %c56_92 = arith.constant 56 : index
    %691 = memref.load %arg4[%c56_92] : memref<81xf32, #tpu.memory_space<smem>>
    %692 = vector.broadcast %691 : f32 to vector<14x14xf32>
    %693 = arith.mulf %692, %409 : vector<14x14xf32>
    %694 = arith.addf %690, %693 : vector<14x14xf32>
    %c57_93 = arith.constant 57 : index
    %695 = memref.load %arg4[%c57_93] : memref<81xf32, #tpu.memory_space<smem>>
    %696 = vector.broadcast %695 : f32 to vector<14x14xf32>
    %697 = arith.mulf %696, %411 : vector<14x14xf32>
    %698 = arith.addf %694, %697 : vector<14x14xf32>
    %c58_94 = arith.constant 58 : index
    %699 = memref.load %arg4[%c58_94] : memref<81xf32, #tpu.memory_space<smem>>
    %700 = vector.broadcast %699 : f32 to vector<14x14xf32>
    %701 = arith.mulf %700, %413 : vector<14x14xf32>
    %702 = arith.addf %698, %701 : vector<14x14xf32>
    %c59_95 = arith.constant 59 : index
    %703 = memref.load %arg4[%c59_95] : memref<81xf32, #tpu.memory_space<smem>>
    %704 = vector.broadcast %703 : f32 to vector<14x14xf32>
    %705 = arith.mulf %704, %415 : vector<14x14xf32>
    %706 = arith.addf %702, %705 : vector<14x14xf32>
    %c60_96 = arith.constant 60 : index
    %707 = memref.load %arg4[%c60_96] : memref<81xf32, #tpu.memory_space<smem>>
    %708 = vector.broadcast %707 : f32 to vector<14x14xf32>
    %709 = arith.mulf %708, %417 : vector<14x14xf32>
    %710 = arith.addf %706, %709 : vector<14x14xf32>
    %c61_97 = arith.constant 61 : index
    %711 = memref.load %arg4[%c61_97] : memref<81xf32, #tpu.memory_space<smem>>
    %712 = vector.broadcast %711 : f32 to vector<14x14xf32>
    %713 = arith.mulf %712, %419 : vector<14x14xf32>
    %714 = arith.addf %710, %713 : vector<14x14xf32>
    %c62_98 = arith.constant 62 : index
    %715 = memref.load %arg4[%c62_98] : memref<81xf32, #tpu.memory_space<smem>>
    %716 = vector.broadcast %715 : f32 to vector<14x14xf32>
    %717 = arith.mulf %716, %421 : vector<14x14xf32>
    %718 = arith.addf %714, %717 : vector<14x14xf32>
    %c63_99 = arith.constant 63 : index
    %719 = memref.load %arg4[%c63_99] : memref<81xf32, #tpu.memory_space<smem>>
    %720 = vector.broadcast %719 : f32 to vector<14x14xf32>
    %721 = arith.mulf %720, %423 : vector<14x14xf32>
    %722 = arith.addf %718, %721 : vector<14x14xf32>
    %c64_100 = arith.constant 64 : index
    %723 = memref.load %arg4[%c64_100] : memref<81xf32, #tpu.memory_space<smem>>
    %724 = vector.broadcast %723 : f32 to vector<14x14xf32>
    %725 = arith.mulf %724, %425 : vector<14x14xf32>
    %726 = arith.addf %722, %725 : vector<14x14xf32>
    %c65_101 = arith.constant 65 : index
    %727 = memref.load %arg4[%c65_101] : memref<81xf32, #tpu.memory_space<smem>>
    %728 = vector.broadcast %727 : f32 to vector<14x14xf32>
    %729 = arith.mulf %728, %427 : vector<14x14xf32>
    %730 = arith.addf %726, %729 : vector<14x14xf32>
    %c66_102 = arith.constant 66 : index
    %731 = memref.load %arg4[%c66_102] : memref<81xf32, #tpu.memory_space<smem>>
    %732 = vector.broadcast %731 : f32 to vector<14x14xf32>
    %733 = arith.mulf %732, %429 : vector<14x14xf32>
    %734 = arith.addf %730, %733 : vector<14x14xf32>
    %c67_103 = arith.constant 67 : index
    %735 = memref.load %arg4[%c67_103] : memref<81xf32, #tpu.memory_space<smem>>
    %736 = vector.broadcast %735 : f32 to vector<14x14xf32>
    %737 = arith.mulf %736, %431 : vector<14x14xf32>
    %738 = arith.addf %734, %737 : vector<14x14xf32>
    %c68_104 = arith.constant 68 : index
    %739 = memref.load %arg4[%c68_104] : memref<81xf32, #tpu.memory_space<smem>>
    %740 = vector.broadcast %739 : f32 to vector<14x14xf32>
    %741 = arith.mulf %740, %433 : vector<14x14xf32>
    %742 = arith.addf %738, %741 : vector<14x14xf32>
    %c69_105 = arith.constant 69 : index
    %743 = memref.load %arg4[%c69_105] : memref<81xf32, #tpu.memory_space<smem>>
    %744 = vector.broadcast %743 : f32 to vector<14x14xf32>
    %745 = arith.mulf %744, %435 : vector<14x14xf32>
    %746 = arith.addf %742, %745 : vector<14x14xf32>
    %c70_106 = arith.constant 70 : index
    %747 = memref.load %arg4[%c70_106] : memref<81xf32, #tpu.memory_space<smem>>
    %748 = vector.broadcast %747 : f32 to vector<14x14xf32>
    %749 = arith.mulf %748, %437 : vector<14x14xf32>
    %750 = arith.addf %746, %749 : vector<14x14xf32>
    %c71_107 = arith.constant 71 : index
    %751 = memref.load %arg4[%c71_107] : memref<81xf32, #tpu.memory_space<smem>>
    %752 = vector.broadcast %751 : f32 to vector<14x14xf32>
    %753 = arith.mulf %752, %439 : vector<14x14xf32>
    %754 = arith.addf %750, %753 : vector<14x14xf32>
    %c72_108 = arith.constant 72 : index
    %755 = memref.load %arg4[%c72_108] : memref<81xf32, #tpu.memory_space<smem>>
    %756 = vector.broadcast %755 : f32 to vector<14x14xf32>
    %757 = arith.mulf %756, %441 : vector<14x14xf32>
    %758 = arith.addf %754, %757 : vector<14x14xf32>
    %c73_109 = arith.constant 73 : index
    %759 = memref.load %arg4[%c73_109] : memref<81xf32, #tpu.memory_space<smem>>
    %760 = vector.broadcast %759 : f32 to vector<14x14xf32>
    %761 = arith.mulf %760, %443 : vector<14x14xf32>
    %762 = arith.addf %758, %761 : vector<14x14xf32>
    %c74_110 = arith.constant 74 : index
    %763 = memref.load %arg4[%c74_110] : memref<81xf32, #tpu.memory_space<smem>>
    %764 = vector.broadcast %763 : f32 to vector<14x14xf32>
    %765 = arith.mulf %764, %445 : vector<14x14xf32>
    %766 = arith.addf %762, %765 : vector<14x14xf32>
    %c75_111 = arith.constant 75 : index
    %767 = memref.load %arg4[%c75_111] : memref<81xf32, #tpu.memory_space<smem>>
    %768 = vector.broadcast %767 : f32 to vector<14x14xf32>
    %769 = arith.mulf %768, %447 : vector<14x14xf32>
    %770 = arith.addf %766, %769 : vector<14x14xf32>
    %c76_112 = arith.constant 76 : index
    %771 = memref.load %arg4[%c76_112] : memref<81xf32, #tpu.memory_space<smem>>
    %772 = vector.broadcast %771 : f32 to vector<14x14xf32>
    %773 = arith.mulf %772, %449 : vector<14x14xf32>
    %774 = arith.addf %770, %773 : vector<14x14xf32>
    %c77_113 = arith.constant 77 : index
    %775 = memref.load %arg4[%c77_113] : memref<81xf32, #tpu.memory_space<smem>>
    %776 = vector.broadcast %775 : f32 to vector<14x14xf32>
    %777 = arith.mulf %776, %451 : vector<14x14xf32>
    %778 = arith.addf %774, %777 : vector<14x14xf32>
    %c78_114 = arith.constant 78 : index
    %779 = memref.load %arg4[%c78_114] : memref<81xf32, #tpu.memory_space<smem>>
    %780 = vector.broadcast %779 : f32 to vector<14x14xf32>
    %781 = arith.mulf %780, %453 : vector<14x14xf32>
    %782 = arith.addf %778, %781 : vector<14x14xf32>
    %c79_115 = arith.constant 79 : index
    %783 = memref.load %arg4[%c79_115] : memref<81xf32, #tpu.memory_space<smem>>
    %784 = vector.broadcast %783 : f32 to vector<14x14xf32>
    %785 = arith.mulf %784, %455 : vector<14x14xf32>
    %786 = arith.addf %782, %785 : vector<14x14xf32>
    %c80_116 = arith.constant 80 : index
    %787 = memref.load %arg4[%c80_116] : memref<81xf32, #tpu.memory_space<smem>>
    %788 = vector.broadcast %787 : f32 to vector<14x14xf32>
    %789 = arith.mulf %788, %457 : vector<14x14xf32>
    %790 = arith.addf %786, %789 : vector<14x14xf32>
    %c0_117 = arith.constant 0 : index
    %c2_118 = arith.constant 2 : index
    %c0_119 = arith.constant 0 : index
    %c0_120 = arith.constant 0 : index
    %791 = vector.load %arg5[%c0_117, %c2_118, %c0_119, %c0_120] : memref<1x3x14x14xf32, #tpu.memory_space<vmem>>, vector<1x1x14x14xf32>
    %792 = vector.shape_cast %791 : vector<1x1x14x14xf32> to vector<14x14xf32>
    %793 = vector.shape_cast %790 : vector<14x14xf32> to vector<1x1x14x14xf32>
    tpu.vector_store %arg5[%c0_117, %c2_118, %c0_119, %c0_120], %793 {strides = array<i32>} : memref<1x3x14x14xf32, #tpu.memory_space<vmem>>, vector<1x1x14x14xf32>,
    return
  }
  func.func @transform_0(%arg0: i32) -> (i32, i32, i32, i32) {
    %c0_i32 = arith.constant 0 : i32
    %c0_i32_0 = arith.constant 0 : i32
    %c0_i32_1 = arith.constant 0 : i32
    %c0_i32_2 = arith.constant 0 : i32
    return %arg0, %c0_i32, %c0_i32_0, %c0_i32_1 : i32, i32, i32, i32
  }
  func.func @transform_1(%arg0: i32) -> i32 {
    %c0_i32 = arith.constant 0 : i32
    %c0_i32_0 = arith.constant 0 : i32
    return %c0_i32 : i32
  }
  func.func @transform_2(%arg0: i32) -> i32 {
    %c0_i32 = arith.constant 0 : i32
    %c0_i32_0 = arith.constant 0 : i32
    return %c0_i32 : i32
  }
  func.func @transform_3(%arg0: i32) -> i32 {
    %c0_i32 = arith.constant 0 : i32
    %c0_i32_0 = arith.constant 0 : i32
    return %c0_i32 : i32
  }
  func.func @transform_4(%arg0: i32) -> (i32, i32, i32, i32) {
    %c0_i32 = arith.constant 0 : i32
    %c0_i32_0 = arith.constant 0 : i32
    %c0_i32_1 = arith.constant 0 : i32
    %c0_i32_2 = arith.constant 0 : i32
    return %arg0, %c0_i32, %c0_i32_0, %c0_i32_1 : i32, i32, i32, i32
  }
}

</mosaic_0001>

<llo_original>
// kernel: model_forward.1
$region0: #{model_forward.1}
  #allocation0 [shape = 'u32[]', space=smem, size = 0x4, offset = 0x4, fixed_abs, tag = 'smem constant byte address 0x4 - core index']
  #allocation1 [shape = 'u32[144,128]{1,0:T(1,128)}', space=vmem, size = 0x12000, scoped, tag = 'internal scratch']
  #allocation2 [shape = 'f32[3,16,16]{2,1,0:T(8,128)}', space=vmem, size = 0x6000, scoped, tag = 'scratch operand']
  %s0 = inlined_call_operand.vmem [shape: f32[2,3,16,16], index: 0, kind: input, shape index: {}]
  %s1 = inlined_call_operand.vmem [shape: f32[81], index: 1, kind: input, shape index: {}]
  %s2 = inlined_call_operand.vmem [shape: f32[3], index: 2, kind: input, shape index: {}]
  %s3 = inlined_call_operand.vmem [shape: f32[81], index: 3, kind: input, shape index: {}]
  %s4 = inlined_call_operand.vmem [shape: f32[2,3,14,14], index: 4, kind: output, shape index: {}]
  %s5 = sld [smem:[#allocation0]]
  $region61: #{model_forward.1} parent=0
    _
  %s7 = ssub.s32 1, %s5
  %s8 = scalar_select 0, %s7, %s5
  $region1: #{model_forward.1} parent=0
    #allocation3 [shape = 'u8[512]{0}', space=smem, size = 0x200, scoped, tag = 'input window, operand 1, single buffered']
    #allocation4 [shape = 's32[2]{0}', space=sflag, size = 0x8, scoped, tag = 'scoped memory for model_forward.1']
    #allocation5 [shape = 'u8[512]{0}', space=smem, size = 0x200, scoped, tag = 'input window, operand 2, single buffered']
    #allocation6 [shape = 's32[1]{0}', space=sflag, size = 0x4, scoped, tag = 'scoped memory for model_forward.1']
    #allocation7 [shape = 'u8[512]{0}', space=smem, size = 0x200, scoped, tag = 'input window, operand 3, single buffered']
    %9 = vsyncpa [#allocation4], 0
    %10 = vsyncpa [#allocation6], 0
    loop: start=0, step=1, limit=4
    $region2: #{model_forward.1} parent=1 // loop_pre_header
      _
    $region3: #{model_forward.1} parent=1 // loop_header
      %s12 = sphi 0, %s16
      %p13 = scmp.ge.s32.totalorder %s12, 4
      %s22 = sphi 0, %s24
      %s25 = sphi 0, %s22
      %s26 = sphi 0, %s25
      %s42 = sphi 0, %s26
      %s46 = sphi 0, %s46
      %s48 = sphi 0, %s46
      %s49 = sphi 0, %s48
      %s63 = sphi 0, %s49
      %s67 = sphi 0, %s67
      %s69 = sphi 0, %s67
      %s70 = sphi 0, %s69
      %s84 = sphi 0, %s70
      %s88 = sphi 0, %s88
      %s90 = sphi 0, %s88
      %s91 = sphi 0, %s90
      %s105 = sphi 0, %s91
      %s111 = sphi 0, %s113
      %s114 = sphi 0, %s111
      %s115 = sphi 0, %s114
      %s131 = sphi 0, %s115
    $region4: #{model_forward.1} parent=1 // loop_header_branch
      %15 = sbr.rel (%p13) target = $region8
    $region5: #{model_forward.1} parent=1 // loop_body
      %s17 = ssub.s32 %s12, 1
      %s18 = ssub.s32 %s12, 2
      %s19 = sadd.s32 %s12, 1
      %s20 = ssub.s32 %s12, %s19
      %p21 = scmp.eq.s32.totalorder %s20, 0
      %s23 = sadd.s32 %s22, 1
      %s24 = scalar_select %p21, %s22, %s23
      %p27 = pneg %p21
      %p28 = scmp.eq.s32.totalorder %s12, 1
      %p29 = por %p27, %p28
      %p30 = scmp.ne.s32.totalorder %s22, %s25
      %p31 = scmp.eq.s32.totalorder %s12, 0
      %p32 = por %p30, %p31
      %p33 = scmp.ne.s32.totalorder %s22, %s25
      %p34 = scmp.eq.s32.totalorder %s17, 1
      %p35 = por %p33, %p34
      %p36 = scmp.ne.s32.totalorder %s25, %s26
      %p37 = scmp.eq.s32.totalorder %s17, 0
      %p38 = por %p36, %p37
      %p39 = scmp.ne.s32.totalorder %s25, %s26
      %p40 = scmp.eq.s32.totalorder %s18, 1
      %p41 = por %p39, %p40
      %p43 = scmp.ne.s32.totalorder %s26, %s42
      %p44 = scmp.eq.s32.totalorder %s18, 0
      %p45 = por %p43, %p44
      %s47 = sadd.s32 %s46, 1
      %p50 = scmp.eq.s32.totalorder %s12, 1
      %p51 = scmp.ne.s32.totalorder %s46, %s48
      %p52 = scmp.eq.s32.totalorder %s12, 0
      %p53 = por %p51, %p52
      %p54 = scmp.ne.s32.totalorder %s46, %s48
      %p55 = scmp.eq.s32.totalorder %s17, 1
      %p56 = por %p54, %p55
      %p57 = scmp.ne.s32.totalorder %s48, %s49
      %p58 = scmp.eq.s32.totalorder %s17, 0
      %p59 = por %p57, %p58
      %p60 = scmp.ne.s32.totalorder %s48, %s49
      %p61 = scmp.eq.s32.totalorder %s18, 1
      %p62 = por %p60, %p61
      %p64 = scmp.ne.s32.totalorder %s49, %s63
      %p65 = scmp.eq.s32.totalorder %s18, 0
      %p66 = por %p64, %p65
      %s68 = sadd.s32 %s67, 1
      %p71 = scmp.eq.s32.totalorder %s12, 1
      %p72 = scmp.ne.s32.totalorder %s67, %s69
      %p73 = scmp.eq.s32.totalorder %s12, 0
      %p74 = por %p72, %p73
      %p75 = scmp.ne.s32.totalorder %s67, %s69
      %p76 = scmp.eq.s32.totalorder %s17, 1
      %p77 = por %p75, %p76
      %p78 = scmp.ne.s32.totalorder %s69, %s70
      %p79 = scmp.eq.s32.totalorder %s17, 0
      %p80 = por %p78, %p79
      %p81 = scmp.ne.s32.totalorder %s69, %s70
      %p82 = scmp.eq.s32.totalorder %s18, 1
      %p83 = por %p81, %p82
      %p85 = scmp.ne.s32.totalorder %s70, %s84
      %p86 = scmp.eq.s32.totalorder %s18, 0
      %p87 = por %p85, %p86
      %s89 = sadd.s32 %s88, 1
      %p92 = scmp.eq.s32.totalorder %s12, 1
      %p93 = scmp.ne.s32.totalorder %s88, %s90
      %p94 = scmp.eq.s32.totalorder %s12, 0
      %p95 = por %p93, %p94
      %p96 = scmp.ne.s32.totalorder %s88, %s90
      %p97 = scmp.eq.s32.totalorder %s17, 1
      %p98 = por %p96, %p97
      %p99 = scmp.ne.s32.totalorder %s90, %s91
      %p100 = scmp.eq.s32.totalorder %s17, 0
      %p101 = por %p99, %p100
      %p102 = scmp.ne.s32.totalorder %s90, %s91
      %p103 = scmp.eq.s32.totalorder %s18, 1
      %p104 = por %p102, %p103
      %p106 = scmp.ne.s32.totalorder %s91, %s105
      %p107 = scmp.eq.s32.totalorder %s18, 0
      %p108 = por %p106, %p107
      %s109 = ssub.s32 %s12, %s19
      %p110 = scmp.eq.s32.totalorder %s109, 0
      %s112 = sadd.s32 %s111, 1
      %s113 = scalar_select %p110, %s111, %s112
      %p116 = pneg %p110
      %p117 = scmp.eq.s32.totalorder %s12, 1
      %p118 = por %p116, %p117
      %p119 = scmp.ne.s32.totalorder %s111, %s114
      %p120 = scmp.eq.s32.totalorder %s12, 0
      %p121 = por %p119, %p120
      %p122 = scmp.ne.s32.totalorder %s111, %s114
      %p123 = scmp.eq.s32.totalorder %s17, 1
      %p124 = por %p122, %p123
      %p125 = scmp.ne.s32.totalorder %s114, %s115
      %p126 = scmp.eq.s32.totalorder %s17, 0
      %p127 = por %p125, %p126
      %p128 = scmp.ne.s32.totalorder %s114, %s115
      %p129 = scmp.eq.s32.totalorder %s18, 1
      %p130 = por %p128, %p129
      %p132 = scmp.ne.s32.totalorder %s115, %s131
      %p133 = scmp.eq.s32.totalorder %s18, 0
      %p134 = por %p132, %p133
      %p135 = scmp.le.s32.totalorder 1, %s12
      %p136 = scmp.lt.s32.totalorder %s12, 3
      %p137 = pnand %p135, %p136
      %p138 = pneg %p137
      // Predicated region
      $region9: #{model_forward.1} parent=5 // pred_check
        _
      $region10: #{model_forward.1} parent=5 // pred_check_branch
        %140 = sbr.rel (%p137) target = $region12
      $region11: #{model_forward.1} parent=5 // pred_region
        %s141 = ssub.s32 %s12, 1
        // Predicated region
        $region13: #{model_forward.1} parent=11 // pred_check
          %p142 = pneg %p59
        $region14: #{model_forward.1} parent=11 // pred_check_branch
          %144 = sbr.rel (%p142) target = $region16
        $region15: #{model_forward.1} parent=11 // pred_region
          %s146 = ssub.s32 16, 16
          %147 = vsyncadd [#allocation4], %s146
          %s149 = sshll.u32 %s1, 4
          %s150 = int_to_ptr.vmem [resolvable:$true] %s149
          %152 = dma.vmem_to_smem %s150, 16, [#allocation3], [#allocation4]
        $region16: #{model_forward.1} parent=11 // pred_fallthru
          _
        // Predicated region
        $region17: #{model_forward.1} parent=11 // pred_check
          %p153 = pneg %p80
        $region18: #{model_forward.1} parent=11 // pred_check_branch
          %155 = sbr.rel (%p153) target = $region20
        $region19: #{model_forward.1} parent=11 // pred_region
          %s157 = ssub.s32 16, 16
          %158 = vsyncadd [#allocation6], %s157
          %s160 = sshll.u32 %s2, 4
          %s161 = int_to_ptr.vmem [resolvable:$true] %s160
          %163 = dma.vmem_to_smem %s161, 16, [#allocation5], [#allocation6]
        $region20: #{model_forward.1} parent=11 // pred_fallthru
          _
        // Predicated region
        $region21: #{model_forward.1} parent=11 // pred_check
          %p164 = pneg %p101
        $region22: #{model_forward.1} parent=11 // pred_check_branch
          %166 = sbr.rel (%p164) target = $region24
        $region23: #{model_forward.1} parent=11 // pred_region
          %s168 = ssub.s32 16, 16
          %169 = vsyncadd [#allocation6], %s168
          %s171 = sshll.u32 %s3, 4
          %s172 = int_to_ptr.vmem [resolvable:$true] %s171
          %174 = dma.vmem_to_smem %s172, 16, [#allocation7], [#allocation6]
        $region24: #{model_forward.1} parent=11 // pred_fallthru
          _
      $region12: #{model_forward.1} parent=5 // pred_fallthru
        _
      %p175 = scmp.lt.s32.totalorder %s12, 2
      // Predicated region
      $region25: #{model_forward.1} parent=5 // pred_check
        %p176 = pneg %p175
      $region26: #{model_forward.1} parent=5 // pred_check_branch
        %178 = sbr.rel (%p176) target = $region28
      $region27: #{model_forward.1} parent=5 // pred_region
        // Predicated region
        $region29: #{model_forward.1} parent=27 // pred_check
          %p179 = pneg %p32
        $region30: #{model_forward.1} parent=27 // pred_check_branch
          %181 = sbr.rel (%p179) target = $region32
        $region31: #{model_forward.1} parent=27 // pred_region
          %p182 = scmp.lt.s32.totalorder %s12, 1
          %s183 = scalar_select %p182, %s12, 1
          %s184 = smul.addr %s183, 6
          %s185 = smul.addr %s184, 8
          %s186 = scalar_lea.vmem %s0, %s185
        $region32: #{model_forward.1} parent=27 // pred_fallthru
          _
      $region28: #{model_forward.1} parent=5 // pred_fallthru
        _
      %p187 = scmp.le.s32.totalorder 1, %s12
      %p188 = scmp.lt.s32.totalorder %s12, 3
      %p189 = pnand %p187, %p188
      %p190 = pneg %p189
      // Predicated region
      $region33: #{model_forward.1} parent=5 // pred_check
        _
      $region34: #{model_forward.1} parent=5 // pred_check_branch
        %192 = sbr.rel (%p189) target = $region36
      $region35: #{model_forward.1} parent=5 // pred_region
        %s193 = ssub.s32 %s12, 1
        // Predicated region
        $region37: #{model_forward.1} parent=35 // pred_check
          %p194 = pneg %p59
        $region38: #{model_forward.1} parent=35 // pred_check_branch
          %196 = sbr.rel (%p194) target = $region40
        $region39: #{model_forward.1} parent=35 // pred_region
          %197 = dma.done [#allocation4], 16
        $region40: #{model_forward.1} parent=35 // pred_fallthru
          _
        // Predicated region
        $region41: #{model_forward.1} parent=35 // pred_check
          %p198 = pneg %p80
        $region42: #{model_forward.1} parent=35 // pred_check_branch
          %200 = sbr.rel (%p198) target = $region44
        $region43: #{model_forward.1} parent=35 // pred_region
          %201 = dma.done [#allocation6], 16
        $region44: #{model_forward.1} parent=35 // pred_fallthru
          _
        // Predicated region
        $region45: #{model_forward.1} parent=35 // pred_check
          %p202 = pneg %p101
        $region46: #{model_forward.1} parent=35 // pred_check_branch
          %204 = sbr.rel (%p202) target = $region48
        $region47: #{model_forward.1} parent=35 // pred_region
          %205 = dma.done [#allocation6], 16
        $region48: #{model_forward.1} parent=35 // pred_fallthru
          _
        %206 = sfence
        %p207 = scmp.lt.s32.totalorder %s17, 1
        %s208 = scalar_select %p207, %s17, 1
        %s209 = smul.addr %s208, 6
        %s210 = smul.addr %s209, 8
        %s211 = scalar_lea.vmem %s0, %s210
        %p212 = pneg %p38
        %p213 = pneg %p35
        %p214 = pneg %p59
        %p215 = pneg %p56
        %p216 = pneg %p80
        %p217 = pneg %p77
        %p218 = pneg %p101
        %p219 = pneg %p98
        %p220 = pneg %p127
        %p221 = pneg %p124
        %p222 = scmp.lt.s32.totalorder %s17, 1
        %s223 = scalar_select %p222, %s17, 1
        %s224 = smul.addr %s223, 6
        %s225 = smul.addr %s224, 8
        %s226 = scalar_lea.vmem %s4, %s225
        %p227 = scmp.lt.s32.totalorder %s17, 1
        %s228 = scalar_select %p227, %s17, 1
        %s229 = smul.addr %s228, 6
        %s230 = smul.addr %s229, 8
        %s231 = scalar_lea.vmem %s0, %s230
        %p232 = scmp.lt.s32.totalorder %s17, 1
        %s233 = scalar_select %p232, %s17, 1
        %s234 = smul.addr %s233, 6
        %s235 = smul.addr %s234, 8
        %s236 = scalar_lea.vmem %s4, %s235
        %vm237 = vcmask 130048
        %238 = vst.msk [vmem:[#allocation2] sm:$0xff] %vm237, 0.0
        %239 = vst.msk [vmem:[#allocation2 + $0x8] sm:$0xff] %vm237, 0.0
        %240 = vst.msk [vmem:[#allocation2 + $0x10] sm:$0xff] %vm237, 0.0
        %241 = vst.msk [vmem:[#allocation2 + $0x18] sm:$0xff] %vm237, 0.0
        %242 = vst.msk [vmem:[#allocation2 + $0x20] sm:$0xff] %vm237, 0.0
        %243 = vst.msk [vmem:[#allocation2 + $0x28] sm:$0xff] %vm237, 0.0
        %v244 = vld [vmem:[%s231] sm:$0xff]
        %v245 = vld [vmem:[%s231 + $0x8] sm:$0xff]
        %v246 = vld [vmem:[%s231 + $0x10] sm:$0xff]
        %v247 = vld [vmem:[%s231 + $0x18] sm:$0xff]
        %v248 = vld [vmem:[%s231 + $0x20] sm:$0xff]
        %v249 = vld [vmem:[%s231 + $0x28] sm:$0xff]
        %s250 = sld [smem:[#allocation5]]
        %v251 = vstv %s250
        %v252 = vadd.f32 %v251, 0.0
        %s253 = sld [smem:[#allocation3]]
        %v254 = vstv %s253
        %v255 = vmul.f32 %v254, %v244
        %v256 = vmul.f32 %v254, %v245
        %v257 = vadd.f32 %v252, %v255
        %v258 = vadd.f32 %v252, %v256
        %s259 = sld [smem:[#allocation3 + $0x1]]
        %v260 = vstv %s259
        %v261 = vmul.f32 %v260, %v244
        %v262 = vmul.f32 %v260, %v245
        %265 = vrot.lane.b32.xlu0 %v261, 127
        %v266 = vpop.permute.xlu0 %265
        %267 = vrot.lane.b32.xlu0 %v262, 127
        %v268 = vpop.permute.xlu0 %267
        %v271 = vadd.f32 %v257, %v266
        %v272 = vadd.f32 %v258, %v268
        %s273 = sld [smem:[#allocation3 + $0x2]]
        %v274 = vstv %s273
        %v275 = vmul.f32 %v274, %v244
        %v276 = vmul.f32 %v274, %v245
        %279 = vrot.lane.b32.xlu0 %v275, 126
        %v280 = vpop.permute.xlu0 %279
        %281 = vrot.lane.b32.xlu0 %v276, 126
        %v282 = vpop.permute.xlu0 %281
        %v285 = vadd.f32 %v271, %v280
        %v286 = vadd.f32 %v272, %v282
        %s287 = sld [smem:[#allocation3 + $0x3]]
        %v288 = vstv %s287
        %v289 = vmul.f32 %v288, %v244
        %v290 = vmul.f32 %v288, %v245
        %vm293 = vcmask 1046528
        %v294 = vrot.slane %v289, 1
        %v295 = vrot.slane %v290, 1
        %v296 = vsel %vm293, %v294, %v295
        %v299 = vadd.f32 %v285, %v296
        %v300 = vadd.f32 %v286, %v295
        %s301 = sld [smem:[#allocation3 + $0x4]]
        %v302 = vstv %s301
        %v303 = vmul.f32 %v302, %v244
        %v304 = vmul.f32 %v302, %v245
        %v307 = vrot.slane %v303, 1
        %v308 = vrot.slane %v304, 1
        %v309 = vsel %vm293, %v307, %v308
        %310 = vrot.lane.b32.xlu0 %v309, 127
        %v311 = vpop.permute.xlu0 %310
        %312 = vrot.lane.b32.xlu0 %v308, 127
        %v313 = vpop.permute.xlu0 %312
        %v316 = vadd.f32 %v299, %v311
        %v317 = vadd.f32 %v300, %v313
        %s318 = sld [smem:[#allocation3 + $0x5]]
        %v319 = vstv %s318
        %v320 = vmul.f32 %v319, %v244
        %v321 = vmul.f32 %v319, %v245
        %v324 = vrot.slane %v320, 1
        %v325 = vrot.slane %v321, 1
        %v326 = vsel %vm293, %v324, %v325
        %327 = vrot.lane.b32.xlu0 %v326, 126
        %v328 = vpop.permute.xlu0 %327
        %329 = vrot.lane.b32.xlu0 %v325, 126
        %v330 = vpop.permute.xlu0 %329
        %v333 = vadd.f32 %v316, %v328
        %v334 = vadd.f32 %v317, %v330
        %s335 = sld [smem:[#allocation3 + $0x6]]
        %v336 = vstv %s335
        %v337 = vmul.f32 %v336, %v244
        %v338 = vmul.f32 %v336, %v245
        %vm341 = vcmask 1045504
        %v342 = vrot.slane %v337, 2
        %v343 = vrot.slane %v338, 2
        %v344 = vsel %vm341, %v342, %v343
        %v347 = vadd.f32 %v333, %v344
        %v348 = vadd.f32 %v334, %v343
        %s349 = sld [smem:[#allocation3 + $0x7]]
        %v350 = vstv %s349
        %v351 = vmul.f32 %v350, %v244
        %v352 = vmul.f32 %v350, %v245
        %v355 = vrot.slane %v351, 2
        %v356 = vrot.slane %v352, 2
        %v357 = vsel %vm341, %v355, %v356
        %358 = vrot.lane.b32.xlu0 %v357, 127
        %v359 = vpop.permute.xlu0 %358
        %360 = vrot.lane.b32.xlu0 %v356, 127
        %v361 = vpop.permute.xlu0 %360
        %v364 = vadd.f32 %v347, %v359
        %v365 = vadd.f32 %v348, %v361
        %s366 = sld [smem:[#allocation3 + $0x8]]
        %v367 = vstv %s366
        %v368 = vmul.f32 %v367, %v244
        %v369 = vmul.f32 %v367, %v245
        %v372 = vrot.slane %v368, 2
        %v373 = vrot.slane %v369, 2
        %v374 = vsel %vm341, %v372, %v373
        %375 = vrot.lane.b32.xlu0 %v374, 126
        %v376 = vpop.permute.xlu0 %375
        %377 = vrot.lane.b32.xlu0 %v373, 126
        %v378 = vpop.permute.xlu0 %377
        %v381 = vadd.f32 %v364, %v376
        %v382 = vadd.f32 %v365, %v378
        %s383 = sld [smem:[#allocation3 + $0x9]]
        %v384 = vstv %s383
        %v385 = vmul.f32 %v384, %v246
        %v386 = vmul.f32 %v384, %v247
        %v387 = vadd.f32 %v381, %v385
        %v388 = vadd.f32 %v382, %v386
        %s389 = sld [smem:[#allocation3 + $0xa]]
        %v390 = vstv %s389
        %v391 = vmul.f32 %v390, %v246
        %v392 = vmul.f32 %v390, %v247
        %395 = vrot.lane.b32.xlu0 %v391, 127
        %v396 = vpop.permute.xlu0 %395
        %397 = vrot.lane.b32.xlu0 %v392, 127
        %v398 = vpop.permute.xlu0 %397
        %v401 = vadd.f32 %v387, %v396
        %v402 = vadd.f32 %v388, %v398
        %s403 = sld [smem:[#allocation3 + $0xb]]
        %v404 = vstv %s403
        %v405 = vmul.f32 %v404, %v246
        %v406 = vmul.f32 %v404, %v247
        %409 = vrot.lane.b32.xlu0 %v405, 126
        %v410 = vpop.permute.xlu0 %409
        %411 = vrot.lane.b32.xlu0 %v406, 126
        %v412 = vpop.permute.xlu0 %411
        %v415 = vadd.f32 %v401, %v410
        %v416 = vadd.f32 %v402, %v412
        %s417 = sld [smem:[#allocation3 + $0xc]]
        %v418 = vstv %s417
        %v419 = vmul.f32 %v418, %v246
        %v420 = vmul.f32 %v418, %v247
        %v423 = vrot.slane %v419, 1
        %v424 = vrot.slane %v420, 1
        %v425 = vsel %vm293, %v423, %v424
        %v428 = vadd.f32 %v415, %v425
        %v429 = vadd.f32 %v416, %v424
        %s430 = sld [smem:[#allocation3 + $0xd]]
        %v431 = vstv %s430
        %v432 = vmul.f32 %v431, %v246
        %v433 = vmul.f32 %v431, %v247
        %v436 = vrot.slane %v432, 1
        %v437 = vrot.slane %v433, 1
        %v438 = vsel %vm293, %v436, %v437
        %439 = vrot.lane.b32.xlu0 %v438, 127
        %v440 = vpop.permute.xlu0 %439
        %441 = vrot.lane.b32.xlu0 %v437, 127
        %v442 = vpop.permute.xlu0 %441
        %v445 = vadd.f32 %v428, %v440
        %v446 = vadd.f32 %v429, %v442
        %s447 = sld [smem:[#allocation3 + $0xe]]
        %v448 = vstv %s447
        %v449 = vmul.f32 %v448, %v246
        %v450 = vmul.f32 %v448, %v247
        %v453 = vrot.slane %v449, 1
        %v454 = vrot.slane %v450, 1
        %v455 = vsel %vm293, %v453, %v454
        %456 = vrot.lane.b32.xlu0 %v455, 126
        %v457 = vpop.permute.xlu0 %456
        %458 = vrot.lane.b32.xlu0 %v454, 126
        %v459 = vpop.permute.xlu0 %458
        %v462 = vadd.f32 %v445, %v457
        %v463 = vadd.f32 %v446, %v459
        %s464 = sld [smem:[#allocation3 + $0xf]]
        %v465 = vstv %s464
        %v466 = vmul.f32 %v465, %v246
        %v467 = vmul.f32 %v465, %v247
        %v470 = vrot.slane %v466, 2
        %v471 = vrot.slane %v467, 2
        %v472 = vsel %vm341, %v470, %v471
        %v475 = vadd.f32 %v462, %v472
        %v476 = vadd.f32 %v463, %v471
        %s477 = sld [smem:[#allocation3 + $0x10]]
        %v478 = vstv %s477
        %v479 = vmul.f32 %v478, %v246
        %v480 = vmul.f32 %v478, %v247
        %v483 = vrot.slane %v479, 2
        %v484 = vrot.slane %v480, 2
        %v485 = vsel %vm341, %v483, %v484
        %486 = vrot.lane.b32.xlu0 %v485, 127
        %v487 = vpop.permute.xlu0 %486
        %488 = vrot.lane.b32.xlu0 %v484, 127
        %v489 = vpop.permute.xlu0 %488
        %v492 = vadd.f32 %v475, %v487
        %v493 = vadd.f32 %v476, %v489
        %s494 = sld [smem:[#allocation3 + $0x11]]
        %v495 = vstv %s494
        %v496 = vmul.f32 %v495, %v246
        %v497 = vmul.f32 %v495, %v247
        %v500 = vrot.slane %v496, 2
        %v501 = vrot.slane %v497, 2
        %v502 = vsel %vm341, %v500, %v501
        %503 = vrot.lane.b32.xlu0 %v502, 126
        %v504 = vpop.permute.xlu0 %503
        %505 = vrot.lane.b32.xlu0 %v501, 126
        %v506 = vpop.permute.xlu0 %505
        %v509 = vadd.f32 %v492, %v504
        %v510 = vadd.f32 %v493, %v506
        %s511 = sld [smem:[#allocation3 + $0x12]]
        %v512 = vstv %s511
        %v513 = vmul.f32 %v512, %v248
        %v514 = vmul.f32 %v512, %v249
        %v515 = vadd.f32 %v509, %v513
        %v516 = vadd.f32 %v510, %v514
        %s517 = sld [smem:[#allocation3 + $0x13]]
        %v518 = vstv %s517
        %v519 = vmul.f32 %v518, %v248
        %v520 = vmul.f32 %v518, %v249
        %523 = vrot.lane.b32.xlu0 %v519, 127
        %v524 = vpop.permute.xlu0 %523
        %525 = vrot.lane.b32.xlu0 %v520, 127
        %v526 = vpop.permute.xlu0 %525
        %v529 = vadd.f32 %v515, %v524
        %v530 = vadd.f32 %v516, %v526
        %s531 = sld [smem:[#allocation3 + $0x14]]
        %v532 = vstv %s531
        %v533 = vmul.f32 %v532, %v248
        %v534 = vmul.f32 %v532, %v249
        %537 = vrot.lane.b32.xlu0 %v533, 126
        %v538 = vpop.permute.xlu0 %537
        %539 = vrot.lane.b32.xlu0 %v534, 126
        %v540 = vpop.permute.xlu0 %539
        %v543 = vadd.f32 %v529, %v538
        %v544 = vadd.f32 %v530, %v540
        %s545 = sld [smem:[#allocation3 + $0x15]]
        %v546 = vstv %s545
        %v547 = vmul.f32 %v546, %v248
        %v548 = vmul.f32 %v546, %v249
        %v551 = vrot.slane %v547, 1
        %v552 = vrot.slane %v548, 1
        %v553 = vsel %vm293, %v551, %v552
        %v556 = vadd.f32 %v543, %v553
        %v557 = vadd.f32 %v544, %v552
        %s558 = sld [smem:[#allocation3 + $0x16]]
        %v559 = vstv %s558
        %v560 = vmul.f32 %v559, %v248
        %v561 = vmul.f32 %v559, %v249
        %v564 = vrot.slane %v560, 1
        %v565 = vrot.slane %v561, 1
        %v566 = vsel %vm293, %v564, %v565
        %567 = vrot.lane.b32.xlu0 %v566, 127
        %v568 = vpop.permute.xlu0 %567
        %569 = vrot.lane.b32.xlu0 %v565, 127
        %v570 = vpop.permute.xlu0 %569
        %v573 = vadd.f32 %v556, %v568
        %v574 = vadd.f32 %v557, %v570
        %s575 = sld [smem:[#allocation3 + $0x17]]
        %v576 = vstv %s575
        %v577 = vmul.f32 %v576, %v248
        %v578 = vmul.f32 %v576, %v249
        %v581 = vrot.slane %v577, 1
        %v582 = vrot.slane %v578, 1
        %v583 = vsel %vm293, %v581, %v582
        %584 = vrot.lane.b32.xlu0 %v583, 126
        %v585 = vpop.permute.xlu0 %584
        %586 = vrot.lane.b32.xlu0 %v582, 126
        %v587 = vpop.permute.xlu0 %586
        %v590 = vadd.f32 %v573, %v585
        %v591 = vadd.f32 %v574, %v587
        %s592 = sld [smem:[#allocation3 + $0x18]]
        %v593 = vstv %s592
        %v594 = vmul.f32 %v593, %v248
        %v595 = vmul.f32 %v593, %v249
        %v598 = vrot.slane %v594, 2
        %v599 = vrot.slane %v595, 2
        %v600 = vsel %vm341, %v598, %v599
        %v603 = vadd.f32 %v590, %v600
        %v604 = vadd.f32 %v591, %v599
        %s605 = sld [smem:[#allocation3 + $0x19]]
        %v606 = vstv %s605
        %v607 = vmul.f32 %v606, %v248
        %v608 = vmul.f32 %v606, %v249
        %v611 = vrot.slane %v607, 2
        %v612 = vrot.slane %v608, 2
        %v613 = vsel %vm341, %v611, %v612
        %614 = vrot.lane.b32.xlu0 %v613, 127
        %v615 = vpop.permute.xlu0 %614
        %616 = vrot.lane.b32.xlu0 %v612, 127
        %v617 = vpop.permute.xlu0 %616
        %v620 = vadd.f32 %v603, %v615
        %v621 = vadd.f32 %v604, %v617
        %s622 = sld [smem:[#allocation3 + $0x1a]]
        %v623 = vstv %s622
        %v624 = vmul.f32 %v623, %v248
        %v625 = vmul.f32 %v623, %v249
        %v628 = vrot.slane %v624, 2
        %v629 = vrot.slane %v625, 2
        %v630 = vsel %vm341, %v628, %v629
        %631 = vrot.lane.b32.xlu0 %v630, 126
        %v632 = vpop.permute.xlu0 %631
        %633 = vrot.lane.b32.xlu0 %v629, 126
        %v634 = vpop.permute.xlu0 %633
        %v637 = vadd.f32 %v620, %v632
        %v638 = vadd.f32 %v621, %v634
        %641 = vrot.lane.b32.xlu0 %v637, 1
        %v642 = vpop.permute.xlu0 %641
        %643 = vrot.lane.b32.xlu0 %v638, 1
        %v644 = vpop.permute.xlu0 %643
        %vm647 = vcmask 121864
        %648 = vst.msk [vmem:[#allocation2 + $0x1] sm:$0xff] %vm647, %v642
        %vm649 = vcmask 119816
        %650 = vst.msk [vmem:[#allocation2 + $0x9] sm:$0x3f] %vm649, %v644
        %s651 = sld [smem:[#allocation5 + $0x1]]
        %v652 = vstv %s651
        %v653 = vadd.f32 %v652, 0.0
        %s654 = sld [smem:[#allocation3 + $0x1b]]
        %v655 = vstv %s654
        %v656 = vmul.f32 %v655, %v244
        %v657 = vmul.f32 %v655, %v245
        %v658 = vadd.f32 %v653, %v656
        %v659 = vadd.f32 %v653, %v657
        %s660 = sld [smem:[#allocation3 + $0x1c]]
        %v661 = vstv %s660
        %v662 = vmul.f32 %v661, %v244
        %v663 = vmul.f32 %v661, %v245
        %666 = vrot.lane.b32.xlu0 %v662, 127
        %v667 = vpop.permute.xlu0 %666
        %668 = vrot.lane.b32.xlu0 %v663, 127
        %v669 = vpop.permute.xlu0 %668
        %v672 = vadd.f32 %v658, %v667
        %v673 = vadd.f32 %v659, %v669
        %s674 = sld [smem:[#allocation3 + $0x1d]]
        %v675 = vstv %s674
        %v676 = vmul.f32 %v675, %v244
        %v677 = vmul.f32 %v675, %v245
        %680 = vrot.lane.b32.xlu0 %v676, 126
        %v681 = vpop.permute.xlu0 %680
        %682 = vrot.lane.b32.xlu0 %v677, 126
        %v683 = vpop.permute.xlu0 %682
        %v686 = vadd.f32 %v672, %v681
        %v687 = vadd.f32 %v673, %v683
        %s688 = sld [smem:[#allocation3 + $0x1e]]
        %v689 = vstv %s688
        %v690 = vmul.f32 %v689, %v244
        %v691 = vmul.f32 %v689, %v245
        %v694 = vrot.slane %v690, 1
        %v695 = vrot.slane %v691, 1
        %v696 = vsel %vm293, %v694, %v695
        %v699 = vadd.f32 %v686, %v696
        %v700 = vadd.f32 %v687, %v695
        %s701 = sld [smem:[#allocation3 + $0x1f]]
        %v702 = vstv %s701
        %v703 = vmul.f32 %v702, %v244
        %v704 = vmul.f32 %v702, %v245
        %v707 = vrot.slane %v703, 1
        %v708 = vrot.slane %v704, 1
        %v709 = vsel %vm293, %v707, %v708
        %710 = vrot.lane.b32.xlu0 %v709, 127
        %v711 = vpop.permute.xlu0 %710
        %712 = vrot.lane.b32.xlu0 %v708, 127
        %v713 = vpop.permute.xlu0 %712
        %v716 = vadd.f32 %v699, %v711
        %v717 = vadd.f32 %v700, %v713
        %s718 = sld [smem:[#allocation3 + $0x20]]
        %v719 = vstv %s718
        %v720 = vmul.f32 %v719, %v244
        %v721 = vmul.f32 %v719, %v245
        %v724 = vrot.slane %v720, 1
        %v725 = vrot.slane %v721, 1
        %v726 = vsel %vm293, %v724, %v725
        %727 = vrot.lane.b32.xlu0 %v726, 126
        %v728 = vpop.permute.xlu0 %727
        %729 = vrot.lane.b32.xlu0 %v725, 126
        %v730 = vpop.permute.xlu0 %729
        %v733 = vadd.f32 %v716, %v728
        %v734 = vadd.f32 %v717, %v730
        %s735 = sld [smem:[#allocation3 + $0x21]]
        %v736 = vstv %s735
        %v737 = vmul.f32 %v736, %v244
        %v738 = vmul.f32 %v736, %v245
        %v741 = vrot.slane %v737, 2
        %v742 = vrot.slane %v738, 2
        %v743 = vsel %vm341, %v741, %v742
        %v746 = vadd.f32 %v733, %v743
        %v747 = vadd.f32 %v734, %v742
        %s748 = sld [smem:[#allocation3 + $0x22]]
        %v749 = vstv %s748
        %v750 = vmul.f32 %v749, %v244
        %v751 = vmul.f32 %v749, %v245
        %v754 = vrot.slane %v750, 2
        %v755 = vrot.slane %v751, 2
        %v756 = vsel %vm341, %v754, %v755
        %757 = vrot.lane.b32.xlu0 %v756, 127
        %v758 = vpop.permute.xlu0 %757
        %759 = vrot.lane.b32.xlu0 %v755, 127
        %v760 = vpop.permute.xlu0 %759
        %v763 = vadd.f32 %v746, %v758
        %v764 = vadd.f32 %v747, %v760
        %s765 = sld [smem:[#allocation3 + $0x23]]
        %v766 = vstv %s765
        %v767 = vmul.f32 %v766, %v244
        %v768 = vmul.f32 %v766, %v245
        %v771 = vrot.slane %v767, 2
        %v772 = vrot.slane %v768, 2
        %v773 = vsel %vm341, %v771, %v772
        %774 = vrot.lane.b32.xlu0 %v773, 126
        %v775 = vpop.permute.xlu0 %774
        %776 = vrot.lane.b32.xlu0 %v772, 126
        %v777 = vpop.permute.xlu0 %776
        %v780 = vadd.f32 %v763, %v775
        %v781 = vadd.f32 %v764, %v777
        %s782 = sld [smem:[#allocation3 + $0x24]]
        %v783 = vstv %s782
        %v784 = vmul.f32 %v783, %v246
        %v785 = vmul.f32 %v783, %v247
        %v786 = vadd.f32 %v780, %v784
        %v787 = vadd.f32 %v781, %v785
        %s788 = sld [smem:[#allocation3 + $0x25]]
        %v789 = vstv %s788
        %v790 = vmul.f32 %v789, %v246
        %v791 = vmul.f32 %v789, %v247
        %794 = vrot.lane.b32.xlu0 %v790, 127
        %v795 = vpop.permute.xlu0 %794
        %796 = vrot.lane.b32.xlu0 %v791, 127
        %v797 = vpop.permute.xlu0 %796
        %v800 = vadd.f32 %v786, %v795
        %v801 = vadd.f32 %v787, %v797
        %s802 = sld [smem:[#allocation3 + $0x26]]
        %v803 = vstv %s802
        %v804 = vmul.f32 %v803, %v246
        %v805 = vmul.f32 %v803, %v247
        %808 = vrot.lane.b32.xlu0 %v804, 126
        %v809 = vpop.permute.xlu0 %808
        %810 = vrot.lane.b32.xlu0 %v805, 126
        %v811 = vpop.permute.xlu0 %810
        %v814 = vadd.f32 %v800, %v809
        %v815 = vadd.f32 %v801, %v811
        %s816 = sld [smem:[#allocation3 + $0x27]]
        %v817 = vstv %s816
        %v818 = vmul.f32 %v817, %v246
        %v819 = vmul.f32 %v817, %v247
        %v822 = vrot.slane %v818, 1
        %v823 = vrot.slane %v819, 1
        %v824 = vsel %vm293, %v822, %v823
        %v827 = vadd.f32 %v814, %v824
        %v828 = vadd.f32 %v815, %v823
        %s829 = sld [smem:[#allocation3 + $0x28]]
        %v830 = vstv %s829
        %v831 = vmul.f32 %v830, %v246
        %v832 = vmul.f32 %v830, %v247
        %v835 = vrot.slane %v831, 1
        %v836 = vrot.slane %v832, 1
        %v837 = vsel %vm293, %v835, %v836
        %838 = vrot.lane.b32.xlu0 %v837, 127
        %v839 = vpop.permute.xlu0 %838
        %840 = vrot.lane.b32.xlu0 %v836, 127
        %v841 = vpop.permute.xlu0 %840
        %v844 = vadd.f32 %v827, %v839
        %v845 = vadd.f32 %v828, %v841
        %s846 = sld [smem:[#allocation3 + $0x29]]
        %v847 = vstv %s846
        %v848 = vmul.f32 %v847, %v246
        %v849 = vmul.f32 %v847, %v247
        %v852 = vrot.slane %v848, 1
        %v853 = vrot.slane %v849, 1
        %v854 = vsel %vm293, %v852, %v853
        %855 = vrot.lane.b32.xlu0 %v854, 126
        %v856 = vpop.permute.xlu0 %855
        %857 = vrot.lane.b32.xlu0 %v853, 126
        %v858 = vpop.permute.xlu0 %857
        %v861 = vadd.f32 %v844, %v856
        %v862 = vadd.f32 %v845, %v858
        %s863 = sld [smem:[#allocation3 + $0x2a]]
        %v864 = vstv %s863
        %v865 = vmul.f32 %v864, %v246
        %v866 = vmul.f32 %v864, %v247
        %v869 = vrot.slane %v865, 2
        %v870 = vrot.slane %v866, 2
        %v871 = vsel %vm341, %v869, %v870
        %v874 = vadd.f32 %v861, %v871
        %v875 = vadd.f32 %v862, %v870
        %s876 = sld [smem:[#allocation3 + $0x2b]]
        %v877 = vstv %s876
        %v878 = vmul.f32 %v877, %v246
        %v879 = vmul.f32 %v877, %v247
        %v882 = vrot.slane %v878, 2
        %v883 = vrot.slane %v879, 2
        %v884 = vsel %vm341, %v882, %v883
        %885 = vrot.lane.b32.xlu0 %v884, 127
        %v886 = vpop.permute.xlu0 %885
        %887 = vrot.lane.b32.xlu0 %v883, 127
        %v888 = vpop.permute.xlu0 %887
        %v891 = vadd.f32 %v874, %v886
        %v892 = vadd.f32 %v875, %v888
        %s893 = sld [smem:[#allocation3 + $0x2c]]
        %v894 = vstv %s893
        %v895 = vmul.f32 %v894, %v246
        %v896 = vmul.f32 %v894, %v247
        %v899 = vrot.slane %v895, 2
        %v900 = vrot.slane %v896, 2
        %v901 = vsel %vm341, %v899, %v900
        %902 = vrot.lane.b32.xlu0 %v901, 126
        %v903 = vpop.permute.xlu0 %902
        %904 = vrot.lane.b32.xlu0 %v900, 126
        %v905 = vpop.permute.xlu0 %904
        %v908 = vadd.f32 %v891, %v903
        %v909 = vadd.f32 %v892, %v905
        %s910 = sld [smem:[#allocation3 + $0x2d]]
        %v911 = vstv %s910
        %v912 = vmul.f32 %v911, %v248
        %v913 = vmul.f32 %v911, %v249
        %v914 = vadd.f32 %v908, %v912
        %v915 = vadd.f32 %v909, %v913
        %s916 = sld [smem:[#allocation3 + $0x2e]]
        %v917 = vstv %s916
        %v918 = vmul.f32 %v917, %v248
        %v919 = vmul.f32 %v917, %v249
        %922 = vrot.lane.b32.xlu0 %v918, 127
        %v923 = vpop.permute.xlu0 %922
        %924 = vrot.lane.b32.xlu0 %v919, 127
        %v925 = vpop.permute.xlu0 %924
        %v928 = vadd.f32 %v914, %v923
        %v929 = vadd.f32 %v915, %v925
        %s930 = sld [smem:[#allocation3 + $0x2f]]
        %v931 = vstv %s930
        %v932 = vmul.f32 %v931, %v248
        %v933 = vmul.f32 %v931, %v249
        %936 = vrot.lane.b32.xlu0 %v932, 126
        %v937 = vpop.permute.xlu0 %936
        %938 = vrot.lane.b32.xlu0 %v933, 126
        %v939 = vpop.permute.xlu0 %938
        %v942 = vadd.f32 %v928, %v937
        %v943 = vadd.f32 %v929, %v939
        %s944 = sld [smem:[#allocation3 + $0x30]]
        %v945 = vstv %s944
        %v946 = vmul.f32 %v945, %v248
        %v947 = vmul.f32 %v945, %v249
        %v950 = vrot.slane %v946, 1
        %v951 = vrot.slane %v947, 1
        %v952 = vsel %vm293, %v950, %v951
        %v955 = vadd.f32 %v942, %v952
        %v956 = vadd.f32 %v943, %v951
        %s957 = sld [smem:[#allocation3 + $0x31]]
        %v958 = vstv %s957
        %v959 = vmul.f32 %v958, %v248
        %v960 = vmul.f32 %v958, %v249
        %v963 = vrot.slane %v959, 1
        %v964 = vrot.slane %v960, 1
        %v965 = vsel %vm293, %v963, %v964
        %966 = vrot.lane.b32.xlu0 %v965, 127
        %v967 = vpop.permute.xlu0 %966
        %968 = vrot.lane.b32.xlu0 %v964, 127
        %v969 = vpop.permute.xlu0 %968
        %v972 = vadd.f32 %v955, %v967
        %v973 = vadd.f32 %v956, %v969
        %s974 = sld [smem:[#allocation3 + $0x32]]
        %v975 = vstv %s974
        %v976 = vmul.f32 %v975, %v248
        %v977 = vmul.f32 %v975, %v249
        %v980 = vrot.slane %v976, 1
        %v981 = vrot.slane %v977, 1
        %v982 = vsel %vm293, %v980, %v981
        %983 = vrot.lane.b32.xlu0 %v982, 126
        %v984 = vpop.permute.xlu0 %983
        %985 = vrot.lane.b32.xlu0 %v981, 126
        %v986 = vpop.permute.xlu0 %985
        %v989 = vadd.f32 %v972, %v984
        %v990 = vadd.f32 %v973, %v986
        %s991 = sld [smem:[#allocation3 + $0x33]]
        %v992 = vstv %s991
        %v993 = vmul.f32 %v992, %v248
        %v994 = vmul.f32 %v992, %v249
        %v997 = vrot.slane %v993, 2
        %v998 = vrot.slane %v994, 2
        %v999 = vsel %vm341, %v997, %v998
        %v1002 = vadd.f32 %v989, %v999
        %v1003 = vadd.f32 %v990, %v998
        %s1004 = sld [smem:[#allocation3 + $0x34]]
        %v1005 = vstv %s1004
        %v1006 = vmul.f32 %v1005, %v248
        %v1007 = vmul.f32 %v1005, %v249
        %v1010 = vrot.slane %v1006, 2
        %v1011 = vrot.slane %v1007, 2
        %v1012 = vsel %vm341, %v1010, %v1011
        %1013 = vrot.lane.b32.xlu0 %v1012, 127
        %v1014 = vpop.permute.xlu0 %1013
        %1015 = vrot.lane.b32.xlu0 %v1011, 127
        %v1016 = vpop.permute.xlu0 %1015
        %v1019 = vadd.f32 %v1002, %v1014
        %v1020 = vadd.f32 %v1003, %v1016
        %s1021 = sld [smem:[#allocation3 + $0x35]]
        %v1022 = vstv %s1021
        %v1023 = vmul.f32 %v1022, %v248
        %v1024 = vmul.f32 %v1022, %v249
        %v1027 = vrot.slane %v1023, 2
        %v1028 = vrot.slane %v1024, 2
        %v1029 = vsel %vm341, %v1027, %v1028
        %1030 = vrot.lane.b32.xlu0 %v1029, 126
        %v1031 = vpop.permute.xlu0 %1030
        %1032 = vrot.lane.b32.xlu0 %v1028, 126
        %v1033 = vpop.permute.xlu0 %1032
        %v1036 = vadd.f32 %v1019, %v1031
        %v1037 = vadd.f32 %v1020, %v1033
        %1040 = vrot.lane.b32.xlu0 %v1036, 1
        %v1041 = vpop.permute.xlu0 %1040
        %1042 = vrot.lane.b32.xlu0 %v1037, 1
        %v1043 = vpop.permute.xlu0 %1042
        %s1046 = scalar_lea.vmem [#allocation2], 16
        %1047 = vst.msk [vmem:[%s1046 + $0x1] sm:$0xff] %vm647, %v1041
        %1048 = vst.msk [vmem:[%s1046 + $0x9] sm:$0x3f] %vm649, %v1043
        %s1049 = sld [smem:[#allocation5 + $0x2]]
        %v1050 = vstv %s1049
        %v1051 = vadd.f32 %v1050, 0.0
        %s1052 = sld [smem:[#allocation3 + $0x36]]
        %v1053 = vstv %s1052
        %v1054 = vmul.f32 %v1053, %v244
        %v1055 = vmul.f32 %v1053, %v245
        %v1056 = vadd.f32 %v1051, %v1054
        %v1057 = vadd.f32 %v1051, %v1055
        %s1058 = sld [smem:[#allocation3 + $0x37]]
        %v1059 = vstv %s1058
        %v1060 = vmul.f32 %v1059, %v244
        %v1061 = vmul.f32 %v1059, %v245
        %1064 = vrot.lane.b32.xlu0 %v1060, 127
        %v1065 = vpop.permute.xlu0 %1064
        %1066 = vrot.lane.b32.xlu0 %v1061, 127
        %v1067 = vpop.permute.xlu0 %1066
        %v1070 = vadd.f32 %v1056, %v1065
        %v1071 = vadd.f32 %v1057, %v1067
        %s1072 = sld [smem:[#allocation3 + $0x38]]
        %v1073 = vstv %s1072
        %v1074 = vmul.f32 %v1073, %v244
        %v1075 = vmul.f32 %v1073, %v245
        %1078 = vrot.lane.b32.xlu0 %v1074, 126
        %v1079 = vpop.permute.xlu0 %1078
        %1080 = vrot.lane.b32.xlu0 %v1075, 126
        %v1081 = vpop.permute.xlu0 %1080
        %v1084 = vadd.f32 %v1070, %v1079
        %v1085 = vadd.f32 %v1071, %v1081
        %s1086 = sld [smem:[#allocation3 + $0x39]]
        %v1087 = vstv %s1086
        %v1088 = vmul.f32 %v1087, %v244
        %v1089 = vmul.f32 %v1087, %v245
        %v1092 = vrot.slane %v1088, 1
        %v1093 = vrot.slane %v1089, 1
        %v1094 = vsel %vm293, %v1092, %v1093
        %v1097 = vadd.f32 %v1084, %v1094
        %v1098 = vadd.f32 %v1085, %v1093
        %s1099 = sld [smem:[#allocation3 + $0x3a]]
        %v1100 = vstv %s1099
        %v1101 = vmul.f32 %v1100, %v244
        %v1102 = vmul.f32 %v1100, %v245
        %v1105 = vrot.slane %v1101, 1
        %v1106 = vrot.slane %v1102, 1
        %v1107 = vsel %vm293, %v1105, %v1106
        %1108 = vrot.lane.b32.xlu0 %v1107, 127
        %v1109 = vpop.permute.xlu0 %1108
        %1110 = vrot.lane.b32.xlu0 %v1106, 127
        %v1111 = vpop.permute.xlu0 %1110
        %v1114 = vadd.f32 %v1097, %v1109
        %v1115 = vadd.f32 %v1098, %v1111
        %s1116 = sld [smem:[#allocation3 + $0x3b]]
        %v1117 = vstv %s1116
        %v1118 = vmul.f32 %v1117, %v244
        %v1119 = vmul.f32 %v1117, %v245
        %v1122 = vrot.slane %v1118, 1
        %v1123 = vrot.slane %v1119, 1
        %v1124 = vsel %vm293, %v1122, %v1123
        %1125 = vrot.lane.b32.xlu0 %v1124, 126
        %v1126 = vpop.permute.xlu0 %1125
        %1127 = vrot.lane.b32.xlu0 %v1123, 126
        %v1128 = vpop.permute.xlu0 %1127
        %v1131 = vadd.f32 %v1114, %v1126
        %v1132 = vadd.f32 %v1115, %v1128
        %s1133 = sld [smem:[#allocation3 + $0x3c]]
        %v1134 = vstv %s1133
        %v1135 = vmul.f32 %v1134, %v244
        %v1136 = vmul.f32 %v1134, %v245
        %v1139 = vrot.slane %v1135, 2
        %v1140 = vrot.slane %v1136, 2
        %v1141 = vsel %vm341, %v1139, %v1140
        %v1144 = vadd.f32 %v1131, %v1141
        %v1145 = vadd.f32 %v1132, %v1140
        %s1146 = sld [smem:[#allocation3 + $0x3d]]
        %v1147 = vstv %s1146
        %v1148 = vmul.f32 %v1147, %v244
        %v1149 = vmul.f32 %v1147, %v245
        %v1152 = vrot.slane %v1148, 2
        %v1153 = vrot.slane %v1149, 2
        %v1154 = vsel %vm341, %v1152, %v1153
        %1155 = vrot.lane.b32.xlu0 %v1154, 127
        %v1156 = vpop.permute.xlu0 %1155
        %1157 = vrot.lane.b32.xlu0 %v1153, 127
        %v1158 = vpop.permute.xlu0 %1157
        %v1161 = vadd.f32 %v1144, %v1156
        %v1162 = vadd.f32 %v1145, %v1158
        %s1163 = sld [smem:[#allocation3 + $0x3e]]
        %v1164 = vstv %s1163
        %v1165 = vmul.f32 %v1164, %v244
        %v1166 = vmul.f32 %v1164, %v245
        %v1169 = vrot.slane %v1165, 2
        %v1170 = vrot.slane %v1166, 2
        %v1171 = vsel %vm341, %v1169, %v1170
        %1172 = vrot.lane.b32.xlu0 %v1171, 126
        %v1173 = vpop.permute.xlu0 %1172
        %1174 = vrot.lane.b32.xlu0 %v1170, 126
        %v1175 = vpop.permute.xlu0 %1174
        %v1178 = vadd.f32 %v1161, %v1173
        %v1179 = vadd.f32 %v1162, %v1175
        %s1180 = sld [smem:[#allocation3 + $0x3f]]
        %v1181 = vstv %s1180
        %v1182 = vmul.f32 %v1181, %v246
        %v1183 = vmul.f32 %v1181, %v247
        %v1184 = vadd.f32 %v1178, %v1182
        %v1185 = vadd.f32 %v1179, %v1183
        %s1186 = sld [smem:[#allocation3 + $0x40]]
        %v1187 = vstv %s1186
        %v1188 = vmul.f32 %v1187, %v246
        %v1189 = vmul.f32 %v1187, %v247
        %1192 = vrot.lane.b32.xlu0 %v1188, 127
        %v1193 = vpop.permute.xlu0 %1192
        %1194 = vrot.lane.b32.xlu0 %v1189, 127
        %v1195 = vpop.permute.xlu0 %1194
        %v1198 = vadd.f32 %v1184, %v1193
        %v1199 = vadd.f32 %v1185, %v1195
        %s1200 = sld [smem:[#allocation3 + $0x41]]
        %v1201 = vstv %s1200
        %v1202 = vmul.f32 %v1201, %v246
        %v1203 = vmul.f32 %v1201, %v247
        %1206 = vrot.lane.b32.xlu0 %v1202, 126
        %v1207 = vpop.permute.xlu0 %1206
        %1208 = vrot.lane.b32.xlu0 %v1203, 126
        %v1209 = vpop.permute.xlu0 %1208
        %v1212 = vadd.f32 %v1198, %v1207
        %v1213 = vadd.f32 %v1199, %v1209
        %s1214 = sld [smem:[#allocation3 + $0x42]]
        %v1215 = vstv %s1214
        %v1216 = vmul.f32 %v1215, %v246
        %v1217 = vmul.f32 %v1215, %v247
        %v1220 = vrot.slane %v1216, 1
        %v1221 = vrot.slane %v1217, 1
        %v1222 = vsel %vm293, %v1220, %v1221
        %v1225 = vadd.f32 %v1212, %v1222
        %v1226 = vadd.f32 %v1213, %v1221
        %s1227 = sld [smem:[#allocation3 + $0x43]]
        %v1228 = vstv %s1227
        %v1229 = vmul.f32 %v1228, %v246
        %v1230 = vmul.f32 %v1228, %v247
        %v1233 = vrot.slane %v1229, 1
        %v1234 = vrot.slane %v1230, 1
        %v1235 = vsel %vm293, %v1233, %v1234
        %1236 = vrot.lane.b32.xlu0 %v1235, 127
        %v1237 = vpop.permute.xlu0 %1236
        %1238 = vrot.lane.b32.xlu0 %v1234, 127
        %v1239 = vpop.permute.xlu0 %1238
        %v1242 = vadd.f32 %v1225, %v1237
        %v1243 = vadd.f32 %v1226, %v1239
        %s1244 = sld [smem:[#allocation3 + $0x44]]
        %v1245 = vstv %s1244
        %v1246 = vmul.f32 %v1245, %v246
        %v1247 = vmul.f32 %v1245, %v247
        %v1250 = vrot.slane %v1246, 1
        %v1251 = vrot.slane %v1247, 1
        %v1252 = vsel %vm293, %v1250, %v1251
        %1253 = vrot.lane.b32.xlu0 %v1252, 126
        %v1254 = vpop.permute.xlu0 %1253
        %1255 = vrot.lane.b32.xlu0 %v1251, 126
        %v1256 = vpop.permute.xlu0 %1255
        %v1259 = vadd.f32 %v1242, %v1254
        %v1260 = vadd.f32 %v1243, %v1256
        %s1261 = sld [smem:[#allocation3 + $0x45]]
        %v1262 = vstv %s1261
        %v1263 = vmul.f32 %v1262, %v246
        %v1264 = vmul.f32 %v1262, %v247
        %v1267 = vrot.slane %v1263, 2
        %v1268 = vrot.slane %v1264, 2
        %v1269 = vsel %vm341, %v1267, %v1268
        %v1272 = vadd.f32 %v1259, %v1269
        %v1273 = vadd.f32 %v1260, %v1268
        %s1274 = sld [smem:[#allocation3 + $0x46]]
        %v1275 = vstv %s1274
        %v1276 = vmul.f32 %v1275, %v246
        %v1277 = vmul.f32 %v1275, %v247
        %v1280 = vrot.slane %v1276, 2
        %v1281 = vrot.slane %v1277, 2
        %v1282 = vsel %vm341, %v1280, %v1281
        %1283 = vrot.lane.b32.xlu0 %v1282, 127
        %v1284 = vpop.permute.xlu0 %1283
        %1285 = vrot.lane.b32.xlu0 %v1281, 127
        %v1286 = vpop.permute.xlu0 %1285
        %v1289 = vadd.f32 %v1272, %v1284
        %v1290 = vadd.f32 %v1273, %v1286
        %s1291 = sld [smem:[#allocation3 + $0x47]]
        %v1292 = vstv %s1291
        %v1293 = vmul.f32 %v1292, %v246
        %v1294 = vmul.f32 %v1292, %v247
        %v1297 = vrot.slane %v1293, 2
        %v1298 = vrot.slane %v1294, 2
        %v1299 = vsel %vm341, %v1297, %v1298
        %1300 = vrot.lane.b32.xlu0 %v1299, 126
        %v1301 = vpop.permute.xlu0 %1300
        %1302 = vrot.lane.b32.xlu0 %v1298, 126
        %v1303 = vpop.permute.xlu0 %1302
        %v1306 = vadd.f32 %v1289, %v1301
        %v1307 = vadd.f32 %v1290, %v1303
        %s1308 = sld [smem:[#allocation3 + $0x48]]
        %v1309 = vstv %s1308
        %v1310 = vmul.f32 %v1309, %v248
        %v1311 = vmul.f32 %v1309, %v249
        %v1312 = vadd.f32 %v1306, %v1310
        %v1313 = vadd.f32 %v1307, %v1311
        %s1314 = sld [smem:[#allocation3 + $0x49]]
        %v1315 = vstv %s1314
        %v1316 = vmul.f32 %v1315, %v248
        %v1317 = vmul.f32 %v1315, %v249
        %1320 = vrot.lane.b32.xlu0 %v1316, 127
        %v1321 = vpop.permute.xlu0 %1320
        %1322 = vrot.lane.b32.xlu0 %v1317, 127
        %v1323 = vpop.permute.xlu0 %1322
        %v1326 = vadd.f32 %v1312, %v1321
        %v1327 = vadd.f32 %v1313, %v1323
        %s1328 = sld [smem:[#allocation3 + $0x4a]]
        %v1329 = vstv %s1328
        %v1330 = vmul.f32 %v1329, %v248
        %v1331 = vmul.f32 %v1329, %v249
        %1334 = vrot.lane.b32.xlu0 %v1330, 126
        %v1335 = vpop.permute.xlu0 %1334
        %1336 = vrot.lane.b32.xlu0 %v1331, 126
        %v1337 = vpop.permute.xlu0 %1336
        %v1340 = vadd.f32 %v1326, %v1335
        %v1341 = vadd.f32 %v1327, %v1337
        %s1342 = sld [smem:[#allocation3 + $0x4b]]
        %v1343 = vstv %s1342
        %v1344 = vmul.f32 %v1343, %v248
        %v1345 = vmul.f32 %v1343, %v249
        %v1348 = vrot.slane %v1344, 1
        %v1349 = vrot.slane %v1345, 1
        %v1350 = vsel %vm293, %v1348, %v1349
        %v1353 = vadd.f32 %v1340, %v1350
        %v1354 = vadd.f32 %v1341, %v1349
        %s1355 = sld [smem:[#allocation3 + $0x4c]]
        %v1356 = vstv %s1355
        %v1357 = vmul.f32 %v1356, %v248
        %v1358 = vmul.f32 %v1356, %v249
        %v1361 = vrot.slane %v1357, 1
        %v1362 = vrot.slane %v1358, 1
        %v1363 = vsel %vm293, %v1361, %v1362
        %1364 = vrot.lane.b32.xlu0 %v1363, 127
        %v1365 = vpop.permute.xlu0 %1364
        %1366 = vrot.lane.b32.xlu0 %v1362, 127
        %v1367 = vpop.permute.xlu0 %1366
        %v1370 = vadd.f32 %v1353, %v1365
        %v1371 = vadd.f32 %v1354, %v1367
        %s1372 = sld [smem:[#allocation3 + $0x4d]]
        %v1373 = vstv %s1372
        %v1374 = vmul.f32 %v1373, %v248
        %v1375 = vmul.f32 %v1373, %v249
        %v1378 = vrot.slane %v1374, 1
        %v1379 = vrot.slane %v1375, 1
        %v1380 = vsel %vm293, %v1378, %v1379
        %1381 = vrot.lane.b32.xlu0 %v1380, 126
        %v1382 = vpop.permute.xlu0 %1381
        %1383 = vrot.lane.b32.xlu0 %v1379, 126
        %v1384 = vpop.permute.xlu0 %1383
        %v1387 = vadd.f32 %v1370, %v1382
        %v1388 = vadd.f32 %v1371, %v1384
        %s1389 = sld [smem:[#allocation3 + $0x4e]]
        %v1390 = vstv %s1389
        %v1391 = vmul.f32 %v1390, %v248
        %v1392 = vmul.f32 %v1390, %v249
        %v1395 = vrot.slane %v1391, 2
        %v1396 = vrot.slane %v1392, 2
        %v1397 = vsel %vm341, %v1395, %v1396
        %v1400 = vadd.f32 %v1387, %v1397
        %v1401 = vadd.f32 %v1388, %v1396
        %s1402 = sld [smem:[#allocation3 + $0x4f]]
        %v1403 = vstv %s1402
        %v1404 = vmul.f32 %v1403, %v248
        %v1405 = vmul.f32 %v1403, %v249
        %v1408 = vrot.slane %v1404, 2
        %v1409 = vrot.slane %v1405, 2
        %v1410 = vsel %vm341, %v1408, %v1409
        %1411 = vrot.lane.b32.xlu0 %v1410, 127
        %v1412 = vpop.permute.xlu0 %1411
        %1413 = vrot.lane.b32.xlu0 %v1409, 127
        %v1414 = vpop.permute.xlu0 %1413
        %v1417 = vadd.f32 %v1400, %v1412
        %v1418 = vadd.f32 %v1401, %v1414
        %s1419 = sld [smem:[#allocation3 + $0x50]]
        %v1420 = vstv %s1419
        %v1421 = vmul.f32 %v1420, %v248
        %v1422 = vmul.f32 %v1420, %v249
        %v1425 = vrot.slane %v1421, 2
        %v1426 = vrot.slane %v1422, 2
        %v1427 = vsel %vm341, %v1425, %v1426
        %1428 = vrot.lane.b32.xlu0 %v1427, 126
        %v1429 = vpop.permute.xlu0 %1428
        %1430 = vrot.lane.b32.xlu0 %v1426, 126
        %v1431 = vpop.permute.xlu0 %1430
        %v1434 = vadd.f32 %v1417, %v1429
        %v1435 = vadd.f32 %v1418, %v1431
        %1438 = vrot.lane.b32.xlu0 %v1434, 1
        %v1439 = vpop.permute.xlu0 %1438
        %1440 = vrot.lane.b32.xlu0 %v1435, 1
        %v1441 = vpop.permute.xlu0 %1440
        %s1444 = scalar_lea.vmem [#allocation2], 32
        %1445 = vst.msk [vmem:[%s1444 + $0x1] sm:$0xff] %vm647, %v1439
        %1446 = vst.msk [vmem:[%s1444 + $0x9] sm:$0x3f] %vm649, %v1441
        %v1447 = vld [vmem:[#allocation2] sm:$0xff]
        %v1448 = vld [vmem:[#allocation2 + $0x8] sm:$0xff]
        %v1449 = vld [vmem:[#allocation2 + $0x10] sm:$0xff]
        %v1450 = vld [vmem:[#allocation2 + $0x18] sm:$0xff]
        %v1451 = vld [vmem:[#allocation2 + $0x20] sm:$0xff]
        %v1452 = vld [vmem:[#allocation2 + $0x28] sm:$0xff]
        %s1453 = sld [smem:[#allocation7]]
        %v1454 = vstv %s1453
        %v1455 = vmul.f32 %v1454, %v1447
        %v1456 = vmul.f32 %v1454, %v1448
        %v1457 = vadd.f32 %v1455, 0.0
        %v1458 = vadd.f32 %v1456, 0.0
        %s1459 = sld [smem:[#allocation7 + $0x1]]
        %v1460 = vstv %s1459
        %v1461 = vmul.f32 %v1460, %v1447
        %v1462 = vmul.f32 %v1460, %v1448
        %1465 = vrot.lane.b32.xlu0 %v1461, 127
        %v1466 = vpop.permute.xlu0 %1465
        %1467 = vrot.lane.b32.xlu0 %v1462, 127
        %v1468 = vpop.permute.xlu0 %1467
        %v1471 = vadd.f32 %v1457, %v1466
        %v1472 = vadd.f32 %v1458, %v1468
        %s1473 = sld [smem:[#allocation7 + $0x2]]
        %v1474 = vstv %s1473
        %v1475 = vmul.f32 %v1474, %v1447
        %v1476 = vmul.f32 %v1474, %v1448
        %1479 = vrot.lane.b32.xlu0 %v1475, 126
        %v1480 = vpop.permute.xlu0 %1479
        %1481 = vrot.lane.b32.xlu0 %v1476, 126
        %v1482 = vpop.permute.xlu0 %1481
        %v1485 = vadd.f32 %v1471, %v1480
        %v1486 = vadd.f32 %v1472, %v1482
        %s1487 = sld [smem:[#allocation7 + $0x3]]
        %v1488 = vstv %s1487
        %v1489 = vmul.f32 %v1488, %v1447
        %v1490 = vmul.f32 %v1488, %v1448
        %v1493 = vrot.slane %v1489, 1
        %v1494 = vrot.slane %v1490, 1
        %v1495 = vsel %vm293, %v1493, %v1494
        %v1498 = vadd.f32 %v1485, %v1495
        %v1499 = vadd.f32 %v1486, %v1494
        %s1500 = sld [smem:[#allocation7 + $0x4]]
        %v1501 = vstv %s1500
        %v1502 = vmul.f32 %v1501, %v1447
        %v1503 = vmul.f32 %v1501, %v1448
        %v1506 = vrot.slane %v1502, 1
        %v1507 = vrot.slane %v1503, 1
        %v1508 = vsel %vm293, %v1506, %v1507
        %1509 = vrot.lane.b32.xlu0 %v1508, 127
        %v1510 = vpop.permute.xlu0 %1509
        %1511 = vrot.lane.b32.xlu0 %v1507, 127
        %v1512 = vpop.permute.xlu0 %1511
        %v1515 = vadd.f32 %v1498, %v1510
        %v1516 = vadd.f32 %v1499, %v1512
        %s1517 = sld [smem:[#allocation7 + $0x5]]
        %v1518 = vstv %s1517
        %v1519 = vmul.f32 %v1518, %v1447
        %v1520 = vmul.f32 %v1518, %v1448
        %v1523 = vrot.slane %v1519, 1
        %v1524 = vrot.slane %v1520, 1
        %v1525 = vsel %vm293, %v1523, %v1524
        %1526 = vrot.lane.b32.xlu0 %v1525, 126
        %v1527 = vpop.permute.xlu0 %1526
        %1528 = vrot.lane.b32.xlu0 %v1524, 126
        %v1529 = vpop.permute.xlu0 %1528
        %v1532 = vadd.f32 %v1515, %v1527
        %v1533 = vadd.f32 %v1516, %v1529
        %s1534 = sld [smem:[#allocation7 + $0x6]]
        %v1535 = vstv %s1534
        %v1536 = vmul.f32 %v1535, %v1447
        %v1537 = vmul.f32 %v1535, %v1448
        %v1540 = vrot.slane %v1536, 2
        %v1541 = vrot.slane %v1537, 2
        %v1542 = vsel %vm341, %v1540, %v1541
        %v1545 = vadd.f32 %v1532, %v1542
        %v1546 = vadd.f32 %v1533, %v1541
        %s1547 = sld [smem:[#allocation7 + $0x7]]
        %v1548 = vstv %s1547
        %v1549 = vmul.f32 %v1548, %v1447
        %v1550 = vmul.f32 %v1548, %v1448
        %v1553 = vrot.slane %v1549, 2
        %v1554 = vrot.slane %v1550, 2
        %v1555 = vsel %vm341, %v1553, %v1554
        %1556 = vrot.lane.b32.xlu0 %v1555, 127
        %v1557 = vpop.permute.xlu0 %1556
        %1558 = vrot.lane.b32.xlu0 %v1554, 127
        %v1559 = vpop.permute.xlu0 %1558
        %v1562 = vadd.f32 %v1545, %v1557
        %v1563 = vadd.f32 %v1546, %v1559
        %s1564 = sld [smem:[#allocation7 + $0x8]]
        %v1565 = vstv %s1564
        %v1566 = vmul.f32 %v1565, %v1447
        %v1567 = vmul.f32 %v1565, %v1448
        %v1570 = vrot.slane %v1566, 2
        %v1571 = vrot.slane %v1567, 2
        %v1572 = vsel %vm341, %v1570, %v1571
        %1573 = vrot.lane.b32.xlu0 %v1572, 126
        %v1574 = vpop.permute.xlu0 %1573
        %1575 = vrot.lane.b32.xlu0 %v1571, 126
        %v1576 = vpop.permute.xlu0 %1575
        %v1579 = vadd.f32 %v1562, %v1574
        %v1580 = vadd.f32 %v1563, %v1576
        %s1581 = sld [smem:[#allocation7 + $0x9]]
        %v1582 = vstv %s1581
        %v1583 = vmul.f32 %v1582, %v1449
        %v1584 = vmul.f32 %v1582, %v1450
        %v1585 = vadd.f32 %v1579, %v1583
        %v1586 = vadd.f32 %v1580, %v1584
        %s1587 = sld [smem:[#allocation7 + $0xa]]
        %v1588 = vstv %s1587
        %v1589 = vmul.f32 %v1588, %v1449
        %v1590 = vmul.f32 %v1588, %v1450
        %1593 = vrot.lane.b32.xlu0 %v1589, 127
        %v1594 = vpop.permute.xlu0 %1593
        %1595 = vrot.lane.b32.xlu0 %v1590, 127
        %v1596 = vpop.permute.xlu0 %1595
        %v1599 = vadd.f32 %v1585, %v1594
        %v1600 = vadd.f32 %v1586, %v1596
        %s1601 = sld [smem:[#allocation7 + $0xb]]
        %v1602 = vstv %s1601
        %v1603 = vmul.f32 %v1602, %v1449
        %v1604 = vmul.f32 %v1602, %v1450
        %1607 = vrot.lane.b32.xlu0 %v1603, 126
        %v1608 = vpop.permute.xlu0 %1607
        %1609 = vrot.lane.b32.xlu0 %v1604, 126
        %v1610 = vpop.permute.xlu0 %1609
        %v1613 = vadd.f32 %v1599, %v1608
        %v1614 = vadd.f32 %v1600, %v1610
        %s1615 = sld [smem:[#allocation7 + $0xc]]
        %v1616 = vstv %s1615
        %v1617 = vmul.f32 %v1616, %v1449
        %v1618 = vmul.f32 %v1616, %v1450
        %v1621 = vrot.slane %v1617, 1
        %v1622 = vrot.slane %v1618, 1
        %v1623 = vsel %vm293, %v1621, %v1622
        %v1626 = vadd.f32 %v1613, %v1623
        %v1627 = vadd.f32 %v1614, %v1622
        %s1628 = sld [smem:[#allocation7 + $0xd]]
        %v1629 = vstv %s1628
        %v1630 = vmul.f32 %v1629, %v1449
        %v1631 = vmul.f32 %v1629, %v1450
        %v1634 = vrot.slane %v1630, 1
        %v1635 = vrot.slane %v1631, 1
        %v1636 = vsel %vm293, %v1634, %v1635
        %1637 = vrot.lane.b32.xlu0 %v1636, 127
        %v1638 = vpop.permute.xlu0 %1637
        %1639 = vrot.lane.b32.xlu0 %v1635, 127
        %v1640 = vpop.permute.xlu0 %1639
        %v1643 = vadd.f32 %v1626, %v1638
        %v1644 = vadd.f32 %v1627, %v1640
        %s1645 = sld [smem:[#allocation7 + $0xe]]
        %v1646 = vstv %s1645
        %v1647 = vmul.f32 %v1646, %v1449
        %v1648 = vmul.f32 %v1646, %v1450
        %v1651 = vrot.slane %v1647, 1
        %v1652 = vrot.slane %v1648, 1
        %v1653 = vsel %vm293, %v1651, %v1652
        %1654 = vrot.lane.b32.xlu0 %v1653, 126
        %v1655 = vpop.permute.xlu0 %1654
        %1656 = vrot.lane.b32.xlu0 %v1652, 126
        %v1657 = vpop.permute.xlu0 %1656
        %v1660 = vadd.f32 %v1643, %v1655
        %v1661 = vadd.f32 %v1644, %v1657
        %s1662 = sld [smem:[#allocation7 + $0xf]]
        %v1663 = vstv %s1662
        %v1664 = vmul.f32 %v1663, %v1449
        %v1665 = vmul.f32 %v1663, %v1450
        %v1668 = vrot.slane %v1664, 2
        %v1669 = vrot.slane %v1665, 2
        %v1670 = vsel %vm341, %v1668, %v1669
        %v1673 = vadd.f32 %v1660, %v1670
        %v1674 = vadd.f32 %v1661, %v1669
        %s1675 = sld [smem:[#allocation7 + $0x10]]
        %v1676 = vstv %s1675
        %v1677 = vmul.f32 %v1676, %v1449
        %v1678 = vmul.f32 %v1676, %v1450
        %v1681 = vrot.slane %v1677, 2
        %v1682 = vrot.slane %v1678, 2
        %v1683 = vsel %vm341, %v1681, %v1682
        %1684 = vrot.lane.b32.xlu0 %v1683, 127
        %v1685 = vpop.permute.xlu0 %1684
        %1686 = vrot.lane.b32.xlu0 %v1682, 127
        %v1687 = vpop.permute.xlu0 %1686
        %v1690 = vadd.f32 %v1673, %v1685
        %v1691 = vadd.f32 %v1674, %v1687
        %s1692 = sld [smem:[#allocation7 + $0x11]]
        %v1693 = vstv %s1692
        %v1694 = vmul.f32 %v1693, %v1449
        %v1695 = vmul.f32 %v1693, %v1450
        %v1698 = vrot.slane %v1694, 2
        %v1699 = vrot.slane %v1695, 2
        %v1700 = vsel %vm341, %v1698, %v1699
        %1701 = vrot.lane.b32.xlu0 %v1700, 126
        %v1702 = vpop.permute.xlu0 %1701
        %1703 = vrot.lane.b32.xlu0 %v1699, 126
        %v1704 = vpop.permute.xlu0 %1703
        %v1707 = vadd.f32 %v1690, %v1702
        %v1708 = vadd.f32 %v1691, %v1704
        %s1709 = sld [smem:[#allocation7 + $0x12]]
        %v1710 = vstv %s1709
        %v1711 = vmul.f32 %v1710, %v1451
        %v1712 = vmul.f32 %v1710, %v1452
        %v1713 = vadd.f32 %v1707, %v1711
        %v1714 = vadd.f32 %v1708, %v1712
        %s1715 = sld [smem:[#allocation7 + $0x13]]
        %v1716 = vstv %s1715
        %v1717 = vmul.f32 %v1716, %v1451
        %v1718 = vmul.f32 %v1716, %v1452
        %1721 = vrot.lane.b32.xlu0 %v1717, 127
        %v1722 = vpop.permute.xlu0 %1721
        %1723 = vrot.lane.b32.xlu0 %v1718, 127
        %v1724 = vpop.permute.xlu0 %1723
        %v1727 = vadd.f32 %v1713, %v1722
        %v1728 = vadd.f32 %v1714, %v1724
        %s1729 = sld [smem:[#allocation7 + $0x14]]
        %v1730 = vstv %s1729
        %v1731 = vmul.f32 %v1730, %v1451
        %v1732 = vmul.f32 %v1730, %v1452
        %1735 = vrot.lane.b32.xlu0 %v1731, 126
        %v1736 = vpop.permute.xlu0 %1735
        %1737 = vrot.lane.b32.xlu0 %v1732, 126
        %v1738 = vpop.permute.xlu0 %1737
        %v1741 = vadd.f32 %v1727, %v1736
        %v1742 = vadd.f32 %v1728, %v1738
        %s1743 = sld [smem:[#allocation7 + $0x15]]
        %v1744 = vstv %s1743
        %v1745 = vmul.f32 %v1744, %v1451
        %v1746 = vmul.f32 %v1744, %v1452
        %v1749 = vrot.slane %v1745, 1
        %v1750 = vrot.slane %v1746, 1
        %v1751 = vsel %vm293, %v1749, %v1750
        %v1754 = vadd.f32 %v1741, %v1751
        %v1755 = vadd.f32 %v1742, %v1750
        %s1756 = sld [smem:[#allocation7 + $0x16]]
        %v1757 = vstv %s1756
        %v1758 = vmul.f32 %v1757, %v1451
        %v1759 = vmul.f32 %v1757, %v1452
        %v1762 = vrot.slane %v1758, 1
        %v1763 = vrot.slane %v1759, 1
        %v1764 = vsel %vm293, %v1762, %v1763
        %1765 = vrot.lane.b32.xlu0 %v1764, 127
        %v1766 = vpop.permute.xlu0 %1765
        %1767 = vrot.lane.b32.xlu0 %v1763, 127
        %v1768 = vpop.permute.xlu0 %1767
        %v1771 = vadd.f32 %v1754, %v1766
        %v1772 = vadd.f32 %v1755, %v1768
        %s1773 = sld [smem:[#allocation7 + $0x17]]
        %v1774 = vstv %s1773
        %v1775 = vmul.f32 %v1774, %v1451
        %v1776 = vmul.f32 %v1774, %v1452
        %v1779 = vrot.slane %v1775, 1
        %v1780 = vrot.slane %v1776, 1
        %v1781 = vsel %vm293, %v1779, %v1780
        %1782 = vrot.lane.b32.xlu0 %v1781, 126
        %v1783 = vpop.permute.xlu0 %1782
        %1784 = vrot.lane.b32.xlu0 %v1780, 126
        %v1785 = vpop.permute.xlu0 %1784
        %v1788 = vadd.f32 %v1771, %v1783
        %v1789 = vadd.f32 %v1772, %v1785
        %s1790 = sld [smem:[#allocation7 + $0x18]]
        %v1791 = vstv %s1790
        %v1792 = vmul.f32 %v1791, %v1451
        %v1793 = vmul.f32 %v1791, %v1452
        %v1796 = vrot.slane %v1792, 2
        %v1797 = vrot.slane %v1793, 2
        %v1798 = vsel %vm341, %v1796, %v1797
        %v1801 = vadd.f32 %v1788, %v1798
        %v1802 = vadd.f32 %v1789, %v1797
        %s1803 = sld [smem:[#allocation7 + $0x19]]
        %v1804 = vstv %s1803
        %v1805 = vmul.f32 %v1804, %v1451
        %v1806 = vmul.f32 %v1804, %v1452
        %v1809 = vrot.slane %v1805, 2
        %v1810 = vrot.slane %v1806, 2
        %v1811 = vsel %vm341, %v1809, %v1810
        %1812 = vrot.lane.b32.xlu0 %v1811, 127
        %v1813 = vpop.permute.xlu0 %1812
        %1814 = vrot.lane.b32.xlu0 %v1810, 127
        %v1815 = vpop.permute.xlu0 %1814
        %v1818 = vadd.f32 %v1801, %v1813
        %v1819 = vadd.f32 %v1802, %v1815
        %s1820 = sld [smem:[#allocation7 + $0x1a]]
        %v1821 = vstv %s1820
        %v1822 = vmul.f32 %v1821, %v1451
        %v1823 = vmul.f32 %v1821, %v1452
        %v1826 = vrot.slane %v1822, 2
        %v1827 = vrot.slane %v1823, 2
        %v1828 = vsel %vm341, %v1826, %v1827
        %1829 = vrot.lane.b32.xlu0 %v1828, 126
        %v1830 = vpop.permute.xlu0 %1829
        %1831 = vrot.lane.b32.xlu0 %v1827, 126
        %v1832 = vpop.permute.xlu0 %1831
        %v1835 = vadd.f32 %v1818, %v1830
        %v1836 = vadd.f32 %v1819, %v1832
        %vm1837 = vcmask 113664
        %1838 = vst.msk [vmem:[%s236] sm:$0xff] %vm1837, %v1835
        %vm1839 = vcmask 111616
        %1840 = vst.msk [vmem:[%s236 + $0x8] sm:$0x3f] %vm1839, %v1836
        %s1841 = sld [smem:[#allocation7 + $0x1b]]
        %v1842 = vstv %s1841
        %v1843 = vmul.f32 %v1842, %v1447
        %v1844 = vmul.f32 %v1842, %v1448
        %v1845 = vadd.f32 %v1843, 0.0
        %v1846 = vadd.f32 %v1844, 0.0
        %s1847 = sld [smem:[#allocation7 + $0x1c]]
        %v1848 = vstv %s1847
        %v1849 = vmul.f32 %v1848, %v1447
        %v1850 = vmul.f32 %v1848, %v1448
        %1853 = vrot.lane.b32.xlu0 %v1849, 127
        %v1854 = vpop.permute.xlu0 %1853
        %1855 = vrot.lane.b32.xlu0 %v1850, 127
        %v1856 = vpop.permute.xlu0 %1855
        %v1859 = vadd.f32 %v1845, %v1854
        %v1860 = vadd.f32 %v1846, %v1856
        %s1861 = sld [smem:[#allocation7 + $0x1d]]
        %v1862 = vstv %s1861
        %v1863 = vmul.f32 %v1862, %v1447
        %v1864 = vmul.f32 %v1862, %v1448
        %1867 = vrot.lane.b32.xlu0 %v1863, 126
        %v1868 = vpop.permute.xlu0 %1867
        %1869 = vrot.lane.b32.xlu0 %v1864, 126
        %v1870 = vpop.permute.xlu0 %1869
        %v1873 = vadd.f32 %v1859, %v1868
        %v1874 = vadd.f32 %v1860, %v1870
        %s1875 = sld [smem:[#allocation7 + $0x1e]]
        %v1876 = vstv %s1875
        %v1877 = vmul.f32 %v1876, %v1447
        %v1878 = vmul.f32 %v1876, %v1448
        %v1881 = vrot.slane %v1877, 1
        %v1882 = vrot.slane %v1878, 1
        %v1883 = vsel %vm293, %v1881, %v1882
        %v1886 = vadd.f32 %v1873, %v1883
        %v1887 = vadd.f32 %v1874, %v1882
        %s1888 = sld [smem:[#allocation7 + $0x1f]]
        %v1889 = vstv %s1888
        %v1890 = vmul.f32 %v1889, %v1447
        %v1891 = vmul.f32 %v1889, %v1448
        %v1894 = vrot.slane %v1890, 1
        %v1895 = vrot.slane %v1891, 1
        %v1896 = vsel %vm293, %v1894, %v1895
        %1897 = vrot.lane.b32.xlu0 %v1896, 127
        %v1898 = vpop.permute.xlu0 %1897
        %1899 = vrot.lane.b32.xlu0 %v1895, 127
        %v1900 = vpop.permute.xlu0 %1899
        %v1903 = vadd.f32 %v1886, %v1898
        %v1904 = vadd.f32 %v1887, %v1900
        %s1905 = sld [smem:[#allocation7 + $0x20]]
        %v1906 = vstv %s1905
        %v1907 = vmul.f32 %v1906, %v1447
        %v1908 = vmul.f32 %v1906, %v1448
        %v1911 = vrot.slane %v1907, 1
        %v1912 = vrot.slane %v1908, 1
        %v1913 = vsel %vm293, %v1911, %v1912
        %1914 = vrot.lane.b32.xlu0 %v1913, 126
        %v1915 = vpop.permute.xlu0 %1914
        %1916 = vrot.lane.b32.xlu0 %v1912, 126
        %v1917 = vpop.permute.xlu0 %1916
        %v1920 = vadd.f32 %v1903, %v1915
        %v1921 = vadd.f32 %v1904, %v1917
        %s1922 = sld [smem:[#allocation7 + $0x21]]
        %v1923 = vstv %s1922
        %v1924 = vmul.f32 %v1923, %v1447
        %v1925 = vmul.f32 %v1923, %v1448
        %v1928 = vrot.slane %v1924, 2
        %v1929 = vrot.slane %v1925, 2
        %v1930 = vsel %vm341, %v1928, %v1929
        %v1933 = vadd.f32 %v1920, %v1930
        %v1934 = vadd.f32 %v1921, %v1929
        %s1935 = sld [smem:[#allocation7 + $0x22]]
        %v1936 = vstv %s1935
        %v1937 = vmul.f32 %v1936, %v1447
        %v1938 = vmul.f32 %v1936, %v1448
        %v1941 = vrot.slane %v1937, 2
        %v1942 = vrot.slane %v1938, 2
        %v1943 = vsel %vm341, %v1941, %v1942
        %1944 = vrot.lane.b32.xlu0 %v1943, 127
        %v1945 = vpop.permute.xlu0 %1944
        %1946 = vrot.lane.b32.xlu0 %v1942, 127
        %v1947 = vpop.permute.xlu0 %1946
        %v1950 = vadd.f32 %v1933, %v1945
        %v1951 = vadd.f32 %v1934, %v1947
        %s1952 = sld [smem:[#allocation7 + $0x23]]
        %v1953 = vstv %s1952
        %v1954 = vmul.f32 %v1953, %v1447
        %v1955 = vmul.f32 %v1953, %v1448
        %v1958 = vrot.slane %v1954, 2
        %v1959 = vrot.slane %v1955, 2
        %v1960 = vsel %vm341, %v1958, %v1959
        %1961 = vrot.lane.b32.xlu0 %v1960, 126
        %v1962 = vpop.permute.xlu0 %1961
        %1963 = vrot.lane.b32.xlu0 %v1959, 126
        %v1964 = vpop.permute.xlu0 %1963
        %v1967 = vadd.f32 %v1950, %v1962
        %v1968 = vadd.f32 %v1951, %v1964
        %s1969 = sld [smem:[#allocation7 + $0x24]]
        %v1970 = vstv %s1969
        %v1971 = vmul.f32 %v1970, %v1449
        %v1972 = vmul.f32 %v1970, %v1450
        %v1973 = vadd.f32 %v1967, %v1971
        %v1974 = vadd.f32 %v1968, %v1972
        %s1975 = sld [smem:[#allocation7 + $0x25]]
        %v1976 = vstv %s1975
        %v1977 = vmul.f32 %v1976, %v1449
        %v1978 = vmul.f32 %v1976, %v1450
        %1981 = vrot.lane.b32.xlu0 %v1977, 127
        %v1982 = vpop.permute.xlu0 %1981
        %1983 = vrot.lane.b32.xlu0 %v1978, 127
        %v1984 = vpop.permute.xlu0 %1983
        %v1987 = vadd.f32 %v1973, %v1982
        %v1988 = vadd.f32 %v1974, %v1984
        %s1989 = sld [smem:[#allocation7 + $0x26]]
        %v1990 = vstv %s1989
        %v1991 = vmul.f32 %v1990, %v1449
        %v1992 = vmul.f32 %v1990, %v1450
        %1995 = vrot.lane.b32.xlu0 %v1991, 126
        %v1996 = vpop.permute.xlu0 %1995
        %1997 = vrot.lane.b32.xlu0 %v1992, 126
        %v1998 = vpop.permute.xlu0 %1997
        %v2001 = vadd.f32 %v1987, %v1996
        %v2002 = vadd.f32 %v1988, %v1998
        %s2003 = sld [smem:[#allocation7 + $0x27]]
        %v2004 = vstv %s2003
        %v2005 = vmul.f32 %v2004, %v1449
        %v2006 = vmul.f32 %v2004, %v1450
        %v2009 = vrot.slane %v2005, 1
        %v2010 = vrot.slane %v2006, 1
        %v2011 = vsel %vm293, %v2009, %v2010
        %v2014 = vadd.f32 %v2001, %v2011
        %v2015 = vadd.f32 %v2002, %v2010
        %s2016 = sld [smem:[#allocation7 + $0x28]]
        %v2017 = vstv %s2016
        %v2018 = vmul.f32 %v2017, %v1449
        %v2019 = vmul.f32 %v2017, %v1450
        %v2022 = vrot.slane %v2018, 1
        %v2023 = vrot.slane %v2019, 1
        %v2024 = vsel %vm293, %v2022, %v2023
        %2025 = vrot.lane.b32.xlu0 %v2024, 127
        %v2026 = vpop.permute.xlu0 %2025
        %2027 = vrot.lane.b32.xlu0 %v2023, 127
        %v2028 = vpop.permute.xlu0 %2027
        %v2031 = vadd.f32 %v2014, %v2026
        %v2032 = vadd.f32 %v2015, %v2028
        %s2033 = sld [smem:[#allocation7 + $0x29]]
        %v2034 = vstv %s2033
        %v2035 = vmul.f32 %v2034, %v1449
        %v2036 = vmul.f32 %v2034, %v1450
        %v2039 = vrot.slane %v2035, 1
        %v2040 = vrot.slane %v2036, 1
        %v2041 = vsel %vm293, %v2039, %v2040
        %2042 = vrot.lane.b32.xlu0 %v2041, 126
        %v2043 = vpop.permute.xlu0 %2042
        %2044 = vrot.lane.b32.xlu0 %v2040, 126
        %v2045 = vpop.permute.xlu0 %2044
        %v2048 = vadd.f32 %v2031, %v2043
        %v2049 = vadd.f32 %v2032, %v2045
        %s2050 = sld [smem:[#allocation7 + $0x2a]]
        %v2051 = vstv %s2050
        %v2052 = vmul.f32 %v2051, %v1449
        %v2053 = vmul.f32 %v2051, %v1450
        %v2056 = vrot.slane %v2052, 2
        %v2057 = vrot.slane %v2053, 2
        %v2058 = vsel %vm341, %v2056, %v2057
        %v2061 = vadd.f32 %v2048, %v2058
        %v2062 = vadd.f32 %v2049, %v2057
        %s2063 = sld [smem:[#allocation7 + $0x2b]]
        %v2064 = vstv %s2063
        %v2065 = vmul.f32 %v2064, %v1449
        %v2066 = vmul.f32 %v2064, %v1450
        %v2069 = vrot.slane %v2065, 2
        %v2070 = vrot.slane %v2066, 2
        %v2071 = vsel %vm341, %v2069, %v2070
        %2072 = vrot.lane.b32.xlu0 %v2071, 127
        %v2073 = vpop.permute.xlu0 %2072
        %2074 = vrot.lane.b32.xlu0 %v2070, 127
        %v2075 = vpop.permute.xlu0 %2074
        %v2078 = vadd.f32 %v2061, %v2073
        %v2079 = vadd.f32 %v2062, %v2075
        %s2080 = sld [smem:[#allocation7 + $0x2c]]
        %v2081 = vstv %s2080
        %v2082 = vmul.f32 %v2081, %v1449
        %v2083 = vmul.f32 %v2081, %v1450
        %v2086 = vrot.slane %v2082, 2
        %v2087 = vrot.slane %v2083, 2
        %v2088 = vsel %vm341, %v2086, %v2087
        %2089 = vrot.lane.b32.xlu0 %v2088, 126
        %v2090 = vpop.permute.xlu0 %2089
        %2091 = vrot.lane.b32.xlu0 %v2087, 126
        %v2092 = vpop.permute.xlu0 %2091
        %v2095 = vadd.f32 %v2078, %v2090
        %v2096 = vadd.f32 %v2079, %v2092
        %s2097 = sld [smem:[#allocation7 + $0x2d]]
        %v2098 = vstv %s2097
        %v2099 = vmul.f32 %v2098, %v1451
        %v2100 = vmul.f32 %v2098, %v1452
        %v2101 = vadd.f32 %v2095, %v2099
        %v2102 = vadd.f32 %v2096, %v2100
        %s2103 = sld [smem:[#allocation7 + $0x2e]]
        %v2104 = vstv %s2103
        %v2105 = vmul.f32 %v2104, %v1451
        %v2106 = vmul.f32 %v2104, %v1452
        %2109 = vrot.lane.b32.xlu0 %v2105, 127
        %v2110 = vpop.permute.xlu0 %2109
        %2111 = vrot.lane.b32.xlu0 %v2106, 127
        %v2112 = vpop.permute.xlu0 %2111
        %v2115 = vadd.f32 %v2101, %v2110
        %v2116 = vadd.f32 %v2102, %v2112
        %s2117 = sld [smem:[#allocation7 + $0x2f]]
        %v2118 = vstv %s2117
        %v2119 = vmul.f32 %v2118, %v1451
        %v2120 = vmul.f32 %v2118, %v1452
        %2123 = vrot.lane.b32.xlu0 %v2119, 126
        %v2124 = vpop.permute.xlu0 %2123
        %2125 = vrot.lane.b32.xlu0 %v2120, 126
        %v2126 = vpop.permute.xlu0 %2125
        %v2129 = vadd.f32 %v2115, %v2124
        %v2130 = vadd.f32 %v2116, %v2126
        %s2131 = sld [smem:[#allocation7 + $0x30]]
        %v2132 = vstv %s2131
        %v2133 = vmul.f32 %v2132, %v1451
        %v2134 = vmul.f32 %v2132, %v1452
        %v2137 = vrot.slane %v2133, 1
        %v2138 = vrot.slane %v2134, 1
        %v2139 = vsel %vm293, %v2137, %v2138
        %v2142 = vadd.f32 %v2129, %v2139
        %v2143 = vadd.f32 %v2130, %v2138
        %s2144 = sld [smem:[#allocation7 + $0x31]]
        %v2145 = vstv %s2144
        %v2146 = vmul.f32 %v2145, %v1451
        %v2147 = vmul.f32 %v2145, %v1452
        %v2150 = vrot.slane %v2146, 1
        %v2151 = vrot.slane %v2147, 1
        %v2152 = vsel %vm293, %v2150, %v2151
        %2153 = vrot.lane.b32.xlu0 %v2152, 127
        %v2154 = vpop.permute.xlu0 %2153
        %2155 = vrot.lane.b32.xlu0 %v2151, 127
        %v2156 = vpop.permute.xlu0 %2155
        %v2159 = vadd.f32 %v2142, %v2154
        %v2160 = vadd.f32 %v2143, %v2156
        %s2161 = sld [smem:[#allocation7 + $0x32]]
        %v2162 = vstv %s2161
        %v2163 = vmul.f32 %v2162, %v1451
        %v2164 = vmul.f32 %v2162, %v1452
        %v2167 = vrot.slane %v2163, 1
        %v2168 = vrot.slane %v2164, 1
        %v2169 = vsel %vm293, %v2167, %v2168
        %2170 = vrot.lane.b32.xlu0 %v2169, 126
        %v2171 = vpop.permute.xlu0 %2170
        %2172 = vrot.lane.b32.xlu0 %v2168, 126
        %v2173 = vpop.permute.xlu0 %2172
        %v2176 = vadd.f32 %v2159, %v2171
        %v2177 = vadd.f32 %v2160, %v2173
        %s2178 = sld [smem:[#allocation7 + $0x33]]
        %v2179 = vstv %s2178
        %v2180 = vmul.f32 %v2179, %v1451
        %v2181 = vmul.f32 %v2179, %v1452
        %v2184 = vrot.slane %v2180, 2
        %v2185 = vrot.slane %v2181, 2
        %v2186 = vsel %vm341, %v2184, %v2185
        %v2189 = vadd.f32 %v2176, %v2186
        %v2190 = vadd.f32 %v2177, %v2185
        %s2191 = sld [smem:[#allocation7 + $0x34]]
        %v2192 = vstv %s2191
        %v2193 = vmul.f32 %v2192, %v1451
        %v2194 = vmul.f32 %v2192, %v1452
        %v2197 = vrot.slane %v2193, 2
        %v2198 = vrot.slane %v2194, 2
        %v2199 = vsel %vm341, %v2197, %v2198
        %2200 = vrot.lane.b32.xlu0 %v2199, 127
        %v2201 = vpop.permute.xlu0 %2200
        %2202 = vrot.lane.b32.xlu0 %v2198, 127
        %v2203 = vpop.permute.xlu0 %2202
        %v2206 = vadd.f32 %v2189, %v2201
        %v2207 = vadd.f32 %v2190, %v2203
        %s2208 = sld [smem:[#allocation7 + $0x35]]
        %v2209 = vstv %s2208
        %v2210 = vmul.f32 %v2209, %v1451
        %v2211 = vmul.f32 %v2209, %v1452
        %v2214 = vrot.slane %v2210, 2
        %v2215 = vrot.slane %v2211, 2
        %v2216 = vsel %vm341, %v2214, %v2215
        %2217 = vrot.lane.b32.xlu0 %v2216, 126
        %v2218 = vpop.permute.xlu0 %2217
        %2219 = vrot.lane.b32.xlu0 %v2215, 126
        %v2220 = vpop.permute.xlu0 %2219
        %v2223 = vadd.f32 %v2206, %v2218
        %v2224 = vadd.f32 %v2207, %v2220
        %s2225 = scalar_lea.vmem %s236, 16
        %2226 = vst.msk [vmem:[%s2225] sm:$0xff] %vm1837, %v2223
        %2227 = vst.msk [vmem:[%s2225 + $0x8] sm:$0x3f] %vm1839, %v2224
        %s2228 = sld [smem:[#allocation7 + $0x36]]
        %v2229 = vstv %s2228
        %v2230 = vmul.f32 %v2229, %v1447
        %v2231 = vmul.f32 %v2229, %v1448
        %v2232 = vadd.f32 %v2230, 0.0
        %v2233 = vadd.f32 %v2231, 0.0
        %s2234 = sld [smem:[#allocation7 + $0x37]]
        %v2235 = vstv %s2234
        %v2236 = vmul.f32 %v2235, %v1447
        %v2237 = vmul.f32 %v2235, %v1448
        %2240 = vrot.lane.b32.xlu0 %v2236, 127
        %v2241 = vpop.permute.xlu0 %2240
        %2242 = vrot.lane.b32.xlu0 %v2237, 127
        %v2243 = vpop.permute.xlu0 %2242
        %v2246 = vadd.f32 %v2232, %v2241
        %v2247 = vadd.f32 %v2233, %v2243
        %s2248 = sld [smem:[#allocation7 + $0x38]]
        %v2249 = vstv %s2248
        %v2250 = vmul.f32 %v2249, %v1447
        %v2251 = vmul.f32 %v2249, %v1448
        %2254 = vrot.lane.b32.xlu0 %v2250, 126
        %v2255 = vpop.permute.xlu0 %2254
        %2256 = vrot.lane.b32.xlu0 %v2251, 126
        %v2257 = vpop.permute.xlu0 %2256
        %v2260 = vadd.f32 %v2246, %v2255
        %v2261 = vadd.f32 %v2247, %v2257
        %s2262 = sld [smem:[#allocation7 + $0x39]]
        %v2263 = vstv %s2262
        %v2264 = vmul.f32 %v2263, %v1447
        %v2265 = vmul.f32 %v2263, %v1448
        %v2268 = vrot.slane %v2264, 1
        %v2269 = vrot.slane %v2265, 1
        %v2270 = vsel %vm293, %v2268, %v2269
        %v2273 = vadd.f32 %v2260, %v2270
        %v2274 = vadd.f32 %v2261, %v2269
        %s2275 = sld [smem:[#allocation7 + $0x3a]]
        %v2276 = vstv %s2275
        %v2277 = vmul.f32 %v2276, %v1447
        %v2278 = vmul.f32 %v2276, %v1448
        %v2281 = vrot.slane %v2277, 1
        %v2282 = vrot.slane %v2278, 1
        %v2283 = vsel %vm293, %v2281, %v2282
        %2284 = vrot.lane.b32.xlu0 %v2283, 127
        %v2285 = vpop.permute.xlu0 %2284
        %2286 = vrot.lane.b32.xlu0 %v2282, 127
        %v2287 = vpop.permute.xlu0 %2286
        %v2290 = vadd.f32 %v2273, %v2285
        %v2291 = vadd.f32 %v2274, %v2287
        %s2292 = sld [smem:[#allocation7 + $0x3b]]
        %v2293 = vstv %s2292
        %v2294 = vmul.f32 %v2293, %v1447
        %v2295 = vmul.f32 %v2293, %v1448
        %v2298 = vrot.slane %v2294, 1
        %v2299 = vrot.slane %v2295, 1
        %v2300 = vsel %vm293, %v2298, %v2299
        %2301 = vrot.lane.b32.xlu0 %v2300, 126
        %v2302 = vpop.permute.xlu0 %2301
        %2303 = vrot.lane.b32.xlu0 %v2299, 126
        %v2304 = vpop.permute.xlu0 %2303
        %v2307 = vadd.f32 %v2290, %v2302
        %v2308 = vadd.f32 %v2291, %v2304
        %s2309 = sld [smem:[#allocation7 + $0x3c]]
        %v2310 = vstv %s2309
        %v2311 = vmul.f32 %v2310, %v1447
        %v2312 = vmul.f32 %v2310, %v1448
        %v2315 = vrot.slane %v2311, 2
        %v2316 = vrot.slane %v2312, 2
        %v2317 = vsel %vm341, %v2315, %v2316
        %v2320 = vadd.f32 %v2307, %v2317
        %v2321 = vadd.f32 %v2308, %v2316
        %s2322 = sld [smem:[#allocation7 + $0x3d]]
        %v2323 = vstv %s2322
        %v2324 = vmul.f32 %v2323, %v1447
        %v2325 = vmul.f32 %v2323, %v1448
        %v2328 = vrot.slane %v2324, 2
        %v2329 = vrot.slane %v2325, 2
        %v2330 = vsel %vm341, %v2328, %v2329
        %2331 = vrot.lane.b32.xlu0 %v2330, 127
        %v2332 = vpop.permute.xlu0 %2331
        %2333 = vrot.lane.b32.xlu0 %v2329, 127
        %v2334 = vpop.permute.xlu0 %2333
        %v2337 = vadd.f32 %v2320, %v2332
        %v2338 = vadd.f32 %v2321, %v2334
        %s2339 = sld [smem:[#allocation7 + $0x3e]]
        %v2340 = vstv %s2339
        %v2341 = vmul.f32 %v2340, %v1447
        %v2342 = vmul.f32 %v2340, %v1448
        %v2345 = vrot.slane %v2341, 2
        %v2346 = vrot.slane %v2342, 2
        %v2347 = vsel %vm341, %v2345, %v2346
        %2348 = vrot.lane.b32.xlu0 %v2347, 126
        %v2349 = vpop.permute.xlu0 %2348
        %2350 = vrot.lane.b32.xlu0 %v2346, 126
        %v2351 = vpop.permute.xlu0 %2350
        %v2354 = vadd.f32 %v2337, %v2349
        %v2355 = vadd.f32 %v2338, %v2351
        %s2356 = sld [smem:[#allocation7 + $0x3f]]
        %v2357 = vstv %s2356
        %v2358 = vmul.f32 %v2357, %v1449
        %v2359 = vmul.f32 %v2357, %v1450
        %v2360 = vadd.f32 %v2354, %v2358
        %v2361 = vadd.f32 %v2355, %v2359
        %s2362 = sld [smem:[#allocation7 + $0x40]]
        %v2363 = vstv %s2362
        %v2364 = vmul.f32 %v2363, %v1449
        %v2365 = vmul.f32 %v2363, %v1450
        %2368 = vrot.lane.b32.xlu0 %v2364, 127
        %v2369 = vpop.permute.xlu0 %2368
        %2370 = vrot.lane.b32.xlu0 %v2365, 127
        %v2371 = vpop.permute.xlu0 %2370
        %v2374 = vadd.f32 %v2360, %v2369
        %v2375 = vadd.f32 %v2361, %v2371
        %s2376 = sld [smem:[#allocation7 + $0x41]]
        %v2377 = vstv %s2376
        %v2378 = vmul.f32 %v2377, %v1449
        %v2379 = vmul.f32 %v2377, %v1450
        %2382 = vrot.lane.b32.xlu0 %v2378, 126
        %v2383 = vpop.permute.xlu0 %2382
        %2384 = vrot.lane.b32.xlu0 %v2379, 126
        %v2385 = vpop.permute.xlu0 %2384
        %v2388 = vadd.f32 %v2374, %v2383
        %v2389 = vadd.f32 %v2375, %v2385
        %s2390 = sld [smem:[#allocation7 + $0x42]]
        %v2391 = vstv %s2390
        %v2392 = vmul.f32 %v2391, %v1449
        %v2393 = vmul.f32 %v2391, %v1450
        %v2396 = vrot.slane %v2392, 1
        %v2397 = vrot.slane %v2393, 1
        %v2398 = vsel %vm293, %v2396, %v2397
        %v2401 = vadd.f32 %v2388, %v2398
        %v2402 = vadd.f32 %v2389, %v2397
        %s2403 = sld [smem:[#allocation7 + $0x43]]
        %v2404 = vstv %s2403
        %v2405 = vmul.f32 %v2404, %v1449
        %v2406 = vmul.f32 %v2404, %v1450
        %v2409 = vrot.slane %v2405, 1
        %v2410 = vrot.slane %v2406, 1
        %v2411 = vsel %vm293, %v2409, %v2410
        %2412 = vrot.lane.b32.xlu0 %v2411, 127
        %v2413 = vpop.permute.xlu0 %2412
        %2414 = vrot.lane.b32.xlu0 %v2410, 127
        %v2415 = vpop.permute.xlu0 %2414
        %v2418 = vadd.f32 %v2401, %v2413
        %v2419 = vadd.f32 %v2402, %v2415
        %s2420 = sld [smem:[#allocation7 + $0x44]]
        %v2421 = vstv %s2420
        %v2422 = vmul.f32 %v2421, %v1449
        %v2423 = vmul.f32 %v2421, %v1450
        %v2426 = vrot.slane %v2422, 1
        %v2427 = vrot.slane %v2423, 1
        %v2428 = vsel %vm293, %v2426, %v2427
        %2429 = vrot.lane.b32.xlu0 %v2428, 126
        %v2430 = vpop.permute.xlu0 %2429
        %2431 = vrot.lane.b32.xlu0 %v2427, 126
        %v2432 = vpop.permute.xlu0 %2431
        %v2435 = vadd.f32 %v2418, %v2430
        %v2436 = vadd.f32 %v2419, %v2432
        %s2437 = sld [smem:[#allocation7 + $0x45]]
        %v2438 = vstv %s2437
        %v2439 = vmul.f32 %v2438, %v1449
        %v2440 = vmul.f32 %v2438, %v1450
        %v2443 = vrot.slane %v2439, 2
        %v2444 = vrot.slane %v2440, 2
        %v2445 = vsel %vm341, %v2443, %v2444
        %v2448 = vadd.f32 %v2435, %v2445
        %v2449 = vadd.f32 %v2436, %v2444
        %s2450 = sld [smem:[#allocation7 + $0x46]]
        %v2451 = vstv %s2450
        %v2452 = vmul.f32 %v2451, %v1449
        %v2453 = vmul.f32 %v2451, %v1450
        %v2456 = vrot.slane %v2452, 2
        %v2457 = vrot.slane %v2453, 2
        %v2458 = vsel %vm341, %v2456, %v2457
        %2459 = vrot.lane.b32.xlu0 %v2458, 127
        %v2460 = vpop.permute.xlu0 %2459
        %2461 = vrot.lane.b32.xlu0 %v2457, 127
        %v2462 = vpop.permute.xlu0 %2461
        %v2465 = vadd.f32 %v2448, %v2460
        %v2466 = vadd.f32 %v2449, %v2462
        %s2467 = sld [smem:[#allocation7 + $0x47]]
        %v2468 = vstv %s2467
        %v2469 = vmul.f32 %v2468, %v1449
        %v2470 = vmul.f32 %v2468, %v1450
        %v2473 = vrot.slane %v2469, 2
        %v2474 = vrot.slane %v2470, 2
        %v2475 = vsel %vm341, %v2473, %v2474
        %2476 = vrot.lane.b32.xlu0 %v2475, 126
        %v2477 = vpop.permute.xlu0 %2476
        %2478 = vrot.lane.b32.xlu0 %v2474, 126
        %v2479 = vpop.permute.xlu0 %2478
        %v2482 = vadd.f32 %v2465, %v2477
        %v2483 = vadd.f32 %v2466, %v2479
        %s2484 = sld [smem:[#allocation7 + $0x48]]
        %v2485 = vstv %s2484
        %v2486 = vmul.f32 %v2485, %v1451
        %v2487 = vmul.f32 %v2485, %v1452
        %v2488 = vadd.f32 %v2482, %v2486
        %v2489 = vadd.f32 %v2483, %v2487
        %s2490 = sld [smem:[#allocation7 + $0x49]]
        %v2491 = vstv %s2490
        %v2492 = vmul.f32 %v2491, %v1451
        %v2493 = vmul.f32 %v2491, %v1452
        %2496 = vrot.lane.b32.xlu0 %v2492, 127
        %v2497 = vpop.permute.xlu0 %2496
        %2498 = vrot.lane.b32.xlu0 %v2493, 127
        %v2499 = vpop.permute.xlu0 %2498
        %v2502 = vadd.f32 %v2488, %v2497
        %v2503 = vadd.f32 %v2489, %v2499
        %s2504 = sld [smem:[#allocation7 + $0x4a]]
        %v2505 = vstv %s2504
        %v2506 = vmul.f32 %v2505, %v1451
        %v2507 = vmul.f32 %v2505, %v1452
        %2510 = vrot.lane.b32.xlu0 %v2506, 126
        %v2511 = vpop.permute.xlu0 %2510
        %2512 = vrot.lane.b32.xlu0 %v2507, 126
        %v2513 = vpop.permute.xlu0 %2512
        %v2516 = vadd.f32 %v2502, %v2511
        %v2517 = vadd.f32 %v2503, %v2513
        %s2518 = sld [smem:[#allocation7 + $0x4b]]
        %v2519 = vstv %s2518
        %v2520 = vmul.f32 %v2519, %v1451
        %v2521 = vmul.f32 %v2519, %v1452
        %v2524 = vrot.slane %v2520, 1
        %v2525 = vrot.slane %v2521, 1
        %v2526 = vsel %vm293, %v2524, %v2525
        %v2529 = vadd.f32 %v2516, %v2526
        %v2530 = vadd.f32 %v2517, %v2525
        %s2531 = sld [smem:[#allocation7 + $0x4c]]
        %v2532 = vstv %s2531
        %v2533 = vmul.f32 %v2532, %v1451
        %v2534 = vmul.f32 %v2532, %v1452
        %v2537 = vrot.slane %v2533, 1
        %v2538 = vrot.slane %v2534, 1
        %v2539 = vsel %vm293, %v2537, %v2538
        %2540 = vrot.lane.b32.xlu0 %v2539, 127
        %v2541 = vpop.permute.xlu0 %2540
        %2542 = vrot.lane.b32.xlu0 %v2538, 127
        %v2543 = vpop.permute.xlu0 %2542
        %v2546 = vadd.f32 %v2529, %v2541
        %v2547 = vadd.f32 %v2530, %v2543
        %s2548 = sld [smem:[#allocation7 + $0x4d]]
        %v2549 = vstv %s2548
        %v2550 = vmul.f32 %v2549, %v1451
        %v2551 = vmul.f32 %v2549, %v1452
        %v2554 = vrot.slane %v2550, 1
        %v2555 = vrot.slane %v2551, 1
        %v2556 = vsel %vm293, %v2554, %v2555
        %2557 = vrot.lane.b32.xlu0 %v2556, 126
        %v2558 = vpop.permute.xlu0 %2557
        %2559 = vrot.lane.b32.xlu0 %v2555, 126
        %v2560 = vpop.permute.xlu0 %2559
        %v2563 = vadd.f32 %v2546, %v2558
        %v2564 = vadd.f32 %v2547, %v2560
        %s2565 = sld [smem:[#allocation7 + $0x4e]]
        %v2566 = vstv %s2565
        %v2567 = vmul.f32 %v2566, %v1451
        %v2568 = vmul.f32 %v2566, %v1452
        %v2571 = vrot.slane %v2567, 2
        %v2572 = vrot.slane %v2568, 2
        %v2573 = vsel %vm341, %v2571, %v2572
        %v2576 = vadd.f32 %v2563, %v2573
        %v2577 = vadd.f32 %v2564, %v2572
        %s2578 = sld [smem:[#allocation7 + $0x4f]]
        %v2579 = vstv %s2578
        %v2580 = vmul.f32 %v2579, %v1451
        %v2581 = vmul.f32 %v2579, %v1452
        %v2584 = vrot.slane %v2580, 2
        %v2585 = vrot.slane %v2581, 2
        %v2586 = vsel %vm341, %v2584, %v2585
        %2587 = vrot.lane.b32.xlu0 %v2586, 127
        %v2588 = vpop.permute.xlu0 %2587
        %2589 = vrot.lane.b32.xlu0 %v2585, 127
        %v2590 = vpop.permute.xlu0 %2589
        %v2593 = vadd.f32 %v2576, %v2588
        %v2594 = vadd.f32 %v2577, %v2590
        %s2595 = sld [smem:[#allocation7 + $0x50]]
        %v2596 = vstv %s2595
        %v2597 = vmul.f32 %v2596, %v1451
        %v2598 = vmul.f32 %v2596, %v1452
        %v2601 = vrot.slane %v2597, 2
        %v2602 = vrot.slane %v2598, 2
        %v2603 = vsel %vm341, %v2601, %v2602
        %2604 = vrot.lane.b32.xlu0 %v2603, 126
        %v2605 = vpop.permute.xlu0 %2604
        %2606 = vrot.lane.b32.xlu0 %v2602, 126
        %v2607 = vpop.permute.xlu0 %2606
        %v2610 = vadd.f32 %v2593, %v2605
        %v2611 = vadd.f32 %v2594, %v2607
        %s2612 = scalar_lea.vmem %s236, 32
        %2613 = vst.msk [vmem:[%s2612] sm:$0xff] %vm1837, %v2610
        %2614 = vst.msk [vmem:[%s2612 + $0x8] sm:$0x3f] %vm1839, %v2611
        %p2615 = scmp.lt.s32.totalorder %s17, 1
        %s2616 = scalar_select %p2615, %s17, 1
        %s2617 = smul.addr %s2616, 6
        %s2618 = smul.addr %s2617, 8
        %s2619 = scalar_lea.vmem %s4, %s2618
        // Predicated region
        $region49: #{model_forward.1} parent=35 // pred_check
          %p2620 = pneg %p124
        $region50: #{model_forward.1} parent=35 // pred_check_branch
          %2622 = sbr.rel (%p2620) target = $region52
        $region51: #{model_forward.1} parent=35 // pred_region
          _
        $region52: #{model_forward.1} parent=35 // pred_fallthru
          _
      $region36: #{model_forward.1} parent=5 // pred_fallthru
        _
      %p2623 = scmp.le.s32.totalorder 2, %s12
      // Predicated region
      $region53: #{model_forward.1} parent=5 // pred_check
        %p2624 = pneg %p2623
      $region54: #{model_forward.1} parent=5 // pred_check_branch
        %2626 = sbr.rel (%p2624) target = $region56
      $region55: #{model_forward.1} parent=5 // pred_region
        %s2627 = ssub.s32 %s12, 2
        // Predicated region
        $region57: #{model_forward.1} parent=55 // pred_check
          %p2628 = pneg %p130
        $region58: #{model_forward.1} parent=55 // pred_check_branch
          %2630 = sbr.rel (%p2628) target = $region60
        $region59: #{model_forward.1} parent=55 // pred_region
          %p2631 = scmp.lt.s32.totalorder %s18, 1
          %s2632 = scalar_select %p2631, %s18, 1
          %s2633 = smul.addr %s2632, 6
          %s2634 = smul.addr %s2633, 8
          %s2635 = scalar_lea.vmem %s4, %s2634
        $region60: #{model_forward.1} parent=55 // pred_fallthru
          _
      $region56: #{model_forward.1} parent=5 // pred_fallthru
        _
    $region6: #{model_forward.1} parent=1 // loop_footer
      %s16 = sadd.s32 1, %s12
    $region7: #{model_forward.1} parent=1 // loop_footer_branch
      %11 = sbr.rel target = $region3
    $region8: #{model_forward.1} parent=1 // loop_exit
      _
    %2636 = vsyncpa [#allocation4], 1
    %s2637 = scalar_lea.sflag [#allocation4], 1
    %2638 = vsyncpa %s2637, 1
    %2639 = vsyncpa [#allocation6], 1

</llo_original>
